<compile_context>
chip_gen: v6e
topology: v6e:2x2x1
jax: 0.10.0
libtpu: 0.0.40
codegen_flags: <defaults>
</compile_context>

<pallas_src>
import math

import jax
import jax.numpy as jnp
from jax.experimental import pallas as pl
from jax.experimental.pallas import tpu as pltpu

LOG2 = math.log(2.0)
LANE = 128
SUBLANE = 8


def _round_up(x, m):
    return ((x + m - 1) // m) * m


def _softplus(x):
    # numerically stable softplus: max(x, 0) + log1p(exp(-|x|))
    return jnp.maximum(x, 0.0) + jnp.log1p(jnp.exp(-jnp.abs(x)))


def _carlos_plus(x):
    # carlosPlus(x, log(2)) = 2 * (softplus(x) - log(2));  carlosPlus(0) == 0
    return 2.0 * (_softplus(x) - LOG2)


def _tpu_generation():
    """Best-effort TPU generation from device_kind; None if not a TPU."""
    try:
        kind = jax.devices()[0].device_kind.lower()
    except Exception:
        return None
    for tag, gen in (("v7", 7), ("tpu7", 7), ("v6", 6), ("v5", 5), ("v4", 4)):
        if tag in kind:
            return gen
    return None


def _dtype_policy(gen):
    """Returns (matmul operand dtype, activation dtype, num TensorCores)."""
    if gen is None:
        # Non-TPU backend (e.g. interpret mode): stay f32 everywhere.
        return jnp.float32, jnp.float32, 1
    compute = jnp.bfloat16                      # MXU is bf16-native on all gens
    act = jnp.bfloat16 if gen >= 6 else jnp.float32   # v5e: no bf16 VPU/EUP
    cores = 2 if gen >= 7 else 1                # v7x: 2 TCs per chip
    return compute, act, cores


def _make_decoder_kernel(layer_slices, compute_dtype, act_dtype):
    """layer_slices: list of (row_offset, din_pad, dout_pad) into the packed W."""
    n_layers = len(layer_slices)

    def kernel(x_ref, w_ref, b_ref, o_ref):
        h = x_ref[...]                                 # already compute_dtype
        for i, (off, din, dout) in enumerate(layer_slices):
            # Static, (8,128)-aligned slices of the packed constant blocks.
            w = w_ref[off:off + din, 0:dout]           # (din_pad, dout_pad)
            b = b_ref[i:i + 1, 0:dout]                 # (1, dout_pad) f32
            # MXU matmul with f32 accumulation regardless of operand dtype.
            h = jnp.dot(h, w, preferred_element_type=jnp.float32) + b
            if i != n_layers - 1:                      # activation on all but last
                h = _carlos_plus(h.astype(act_dtype)).astype(compute_dtype)
        o_ref[...] = h.astype(o_ref.dtype)

    return kernel


def decoder_forward(x, weights, biases, *, block_b=2048, compute_dtype=None,
                    act_dtype=None, out_dtype=None):
    """x: (B, nInputs); weights[i]: (din_i, dout_i); biases[i]: (dout_i,)."""
    B, nin = x.shape
    n_layers = len(weights)
    nout = int(weights[-1].shape[1])

    gen = _tpu_generation()
    auto_compute, auto_act, num_cores = _dtype_policy(gen)
    if compute_dtype is None:
        compute_dtype = auto_compute
    if act_dtype is None:
        act_dtype = auto_act if compute_dtype != jnp.float32 else jnp.float32
    if out_dtype is None:
        out_dtype = x.dtype

    # ---- pack params: one row-packed weight slab + one bias slab ------------
    # Row offsets are multiples of 8 and column widths multiples of 128, so the
    # in-kernel static slices are (8,128)-tile-aligned (no relayout copies).
    nin_pad = _round_up(nin, SUBLANE)
    dout_pads = [_round_up(int(w.shape[1]), LANE) for w in weights]
    din_pads = [nin_pad] + dout_pads[:-1]
    max_dout = max(dout_pads)
    nout_pad = dout_pads[-1]
    row_offs, off = [], 0
    for d in din_pads:
        row_offs.append(off)
        off += d
    total_rows = off

    w_pack = jnp.zeros((total_rows, max_dout), dtype=compute_dtype)
    b_pack = jnp.zeros((n_layers, max_dout), dtype=jnp.float32)
    for i, (w, b) in enumerate(zip(weights, biases)):
        din, dout = int(w.shape[0]), int(w.shape[1])
        w_pack = w_pack.at[row_offs[i]:row_offs[i] + din, :dout].set(
            w.astype(compute_dtype))
        b_pack = b_pack.at[i, :dout].set(b.astype(jnp.float32))

    # ---- generation-aware batch tiling ---------------------------------------
    bb = max(SUBLANE, min(int(block_b), _round_up(B, SUBLANE)))
    bb = _round_up(bb, SUBLANE)
    steps = pl.cdiv(B, bb)
    if num_cores > 1 and B >= 2 * SUBLANE and steps % 2 == 1:
        steps += 1        # even tile count: both v7x TensorCores finish together
    bb = _round_up(pl.cdiv(B, steps), SUBLANE)   # minimize batch padding
    B_pad = steps * bb

    # Cast x outside the kernel (no in-kernel cast/relayout) and zero-pad.
    x_c = x.astype(compute_dtype)
    if B_pad != B or nin_pad != nin:
        x_c = jnp.pad(x_c, ((0, B_pad - B), (0, nin_pad - nin)))

    # ---- advisory cost estimate (real, un-padded work) -----------------------
    csize = jnp.dtype(compute_dtype).itemsize
    flops = 2 * B * sum(int(w.shape[0]) * int(w.shape[1]) for w in weights)
    transcendentals = 2 * B * sum(int(w.shape[1]) for w in weights[:-1])
    bytes_accessed = (csize * B * nin
                      + jnp.dtype(out_dtype).itemsize * B * nout
                      + csize * sum(int(w.size) for w in weights))
    cost = pl.CostEstimate(flops=flops, transcendentals=transcendentals,
                           bytes_accessed=int(bytes_accessed))

    layer_slices = list(zip(row_offs, din_pads, dout_pads))
    kernel = _make_decoder_kernel(layer_slices, compute_dtype, act_dtype)

    # VMEM footprint per step (even at bb=2048): ~2 MB double-buffered output,
    # ~0.1 MB packed params, a few MB of internal scratch — well under the
    # default scoped VMEM limit on v5e/v6e/v7x, so no vmem_limit_bytes needed.
    out = pl.pallas_call(
        kernel,
        out_shape=jax.ShapeDtypeStruct((B_pad, nout_pad), out_dtype),
        grid=(steps,),
        in_specs=[
            pl.BlockSpec((bb, nin_pad), lambda i: (i, 0)),
            pl.BlockSpec(w_pack.shape, lambda i: (0, 0)),   # constant block
            pl.BlockSpec(b_pack.shape, lambda i: (0, 0)),   # constant block
        ],
        out_specs=pl.BlockSpec((bb, nout_pad), lambda i: (i, 0)),
        compiler_params=pltpu.CompilerParams(
            dimension_semantics=("parallel",)),
        cost_estimate=cost,
    )(x_c, w_pack, b_pack)

    return out[:B, :nout]


def decoder_layer_dims(nInputs, nOutputs, base, expand):
    """Replicates the layer-size construction of decoder.__init__ verbatim.

    NOTE: the `expand` branch is kept exactly as written in the torch code
    (`nLast = base ** nLast`, i.e. base ** (base ** (nLast_exp - 1))). This is
    intentionally faithful and can explode for larger bases — it is NOT a
    Pallas-side bug.
    """
    nFirst_exp = 0
    while base ** nFirst_exp < nInputs:
        nFirst_exp += 1
    nFirst = base ** nFirst_exp
    nLast_exp = 0
    while base ** nLast_exp < nOutputs:
        nLast_exp += 1
    nLast = base ** (nLast_exp - 1)
    if expand:
        nLast = base ** nLast
    dims = []
    if nInputs != nFirst:
        dims.append((nInputs, nFirst))
    nHidden = nFirst
    while nHidden < nLast:
        dims.append((nHidden, nHidden * base))
        nHidden *= base
    if nLast != nOutputs:
        dims.append((nLast, nOutputs))
    return dims


if __name__ == "__main__":
    # Config: nInputs=8, nOutputs=128, base=2, expand=False
    #   -> Linear(8,16)+act, Linear(16,32)+act, Linear(32,64)+act, Linear(64,128)
    nInputs, nOutputs, base, expand = 8, 128, 2, False
    batch = 512   # single tile on v5e/v6e, two parallel tiles on v7x

    dims = decoder_layer_dims(nInputs, nOutputs, base, expand)

    key = jax.random.PRNGKey(0)
    key, xk = jax.random.split(key)
    x = jax.random.normal(xk, (batch, nInputs), dtype=jnp.float32)

    # Deterministic init matching torch: weight ~ N(0, 1/in_features), bias = 0.
    weights, biases = [], []
    for (din, dout) in dims:
        key, wk = jax.random.split(key)
        w = jax.random.normal(wk, (din, dout), dtype=jnp.float32) * jnp.sqrt(1.0 / din)
        weights.append(w)
        biases.append(jnp.zeros((dout,), dtype=jnp.float32))

    out = decoder_forward(x, weights, biases)
    out = jax.block_until_ready(out)
    assert out.shape == (batch, nOutputs)

    # Pure-JAX reference mirroring the kernel's dtype policy (bf16 operands /
    # f32 accumulation on TPU, activation in bf16 on v6e/v7x, f32 on v5e) —
    # same forward semantics as the torch module.
    gen = _tpu_generation()
    cdtype, adtype, _ = _dtype_policy(gen)
    ref = x.astype(cdtype)
    for i, (w, b) in enumerate(zip(weights, biases)):
        ref = jnp.dot(ref, w.astype(cdtype),
                      preferred_element_type=jnp.float32) + b
        if i != len(weights) - 1:
            ref = _carlos_plus(ref.astype(adtype)).astype(cdtype)
    ref = ref.astype(jnp.float32)

    tol = 1e-4 if cdtype == jnp.float32 else 2e-2
    assert jnp.allclose(out.astype(jnp.float32), ref, atol=tol, rtol=tol), \
        "mismatch vs reference"

    print("KERNEL_OK")
</pallas_src>

<mosaic_0001>
module attributes {stable_mosaic.version = 11 : i64} {
  func.func @kernel(%arg0: i32, %arg1: memref<512x8xf32, #tpu.memory_space<vmem>>, %arg2: memref<392x128xf32, #tpu.memory_space<vmem>>, %arg3: memref<4x128xf32, #tpu.memory_space<vmem>>, %arg4: memref<512x128xf32, #tpu.memory_space<vmem>>) attributes {dimension_semantics = [#tpu.dimension_semantics<parallel>], iteration_bounds = array<i64: 1>, scalar_prefetch = 0 : i64, scratch_operands = 0 : i64, tpu.core_type = #tpu.core_type<tc>, window_params = [{transform_indices = @transform_0, window_bounds = array<i64: 512, 8>}, {pipeline_mode = #tpu.pipeline_mode<synchronous>, transform_indices = @transform_1, window_bounds = array<i64: 392, 128>}, {pipeline_mode = #tpu.pipeline_mode<synchronous>, transform_indices = @transform_2, window_bounds = array<i64: 4, 128>}, {transform_indices = @transform_3, window_bounds = array<i64: 512, 128>}]} {
    %c0 = arith.constant 0 : index
    %c0_0 = arith.constant 0 : index
    %0 = vector.load %arg1[%c0, %c0_0] : memref<512x8xf32, #tpu.memory_space<vmem>>, vector<512x8xf32>
    %c0_1 = arith.constant 0 : index
    %c0_2 = arith.constant 0 : index
    %1 = vector.load %arg2[%c0_1, %c0_2] : memref<392x128xf32, #tpu.memory_space<vmem>>, vector<8x128xf32>
    %c0_3 = arith.constant 0 : index
    %c0_4 = arith.constant 0 : index
    %2 = vector.load %arg3[%c0_3, %c0_4] : memref<4x128xf32, #tpu.memory_space<vmem>>, vector<1x128xf32>
    %cst = arith.constant dense<0.000000e+00> : vector<512x128xf32>
    %3 = tpu.matmul %0, %1, %cst {dimension_numbers = #tpu.dot_dimension_numbers<[1], [0], [0], [1], [0, 0, 1, 1], [], []>} : vector<512x8xf32>, vector<8x128xf32>, vector<512x128xf32> -> vector<512x128xf32>
    %4 = vector.broadcast %2 : vector<1x128xf32> to vector<512x128xf32>
    %5 = arith.addf %3, %4 : vector<512x128xf32>
    %cst_5 = arith.constant 0.000000e+00 : f32
    %6 = vector.broadcast %cst_5 : f32 to vector<512x128xf32>
    %7 = arith.maximumf %5, %6 : vector<512x128xf32>
    %8 = math.absf %5 : vector<512x128xf32>
    %cst_6 = arith.constant 0.000000e+00 : f32
    %9 = vector.broadcast %cst_6 : f32 to vector<512x128xf32>
    %10 = arith.subf %9, %8 : vector<512x128xf32>
    %11 = math.exp %10 : vector<512x128xf32>
    %12 = math.log1p %11 : vector<512x128xf32>
    %13 = arith.addf %7, %12 : vector<512x128xf32>
    %cst_7 = arith.constant 0.693147182 : f32
    %14 = vector.broadcast %cst_7 : f32 to vector<512x128xf32>
    %15 = arith.subf %13, %14 : vector<512x128xf32>
    %cst_8 = arith.constant 2.000000e+00 : f32
    %16 = vector.broadcast %cst_8 : f32 to vector<512x128xf32>
    %17 = arith.mulf %16, %15 : vector<512x128xf32>
    %c8 = arith.constant 8 : index
    %c0_9 = arith.constant 0 : index
    %18 = vector.load %arg2[%c8, %c0_9] : memref<392x128xf32, #tpu.memory_space<vmem>>, vector<128x128xf32>
    %c1 = arith.constant 1 : index
    %c0_10 = arith.constant 0 : index
    %19 = vector.load %arg3[%c1, %c0_10] : memref<4x128xf32, #tpu.memory_space<vmem>>, vector<1x128xf32>
    %cst_11 = arith.constant dense<0.000000e+00> : vector<512x128xf32>
    %20 = tpu.matmul %17, %18, %cst_11 {dimension_numbers = #tpu.dot_dimension_numbers<[1], [0], [0], [1], [0, 0, 1, 1], [], []>} : vector<512x128xf32>, vector<128x128xf32>, vector<512x128xf32> -> vector<512x128xf32>
    %21 = vector.broadcast %19 : vector<1x128xf32> to vector<512x128xf32>
    %22 = arith.addf %20, %21 : vector<512x128xf32>
    %cst_12 = arith.constant 0.000000e+00 : f32
    %23 = vector.broadcast %cst_12 : f32 to vector<512x128xf32>
    %24 = arith.maximumf %22, %23 : vector<512x128xf32>
    %25 = math.absf %22 : vector<512x128xf32>
    %cst_13 = arith.constant 0.000000e+00 : f32
    %26 = vector.broadcast %cst_13 : f32 to vector<512x128xf32>
    %27 = arith.subf %26, %25 : vector<512x128xf32>
    %28 = math.exp %27 : vector<512x128xf32>
    %29 = math.log1p %28 : vector<512x128xf32>
    %30 = arith.addf %24, %29 : vector<512x128xf32>
    %cst_14 = arith.constant 0.693147182 : f32
    %31 = vector.broadcast %cst_14 : f32 to vector<512x128xf32>
    %32 = arith.subf %30, %31 : vector<512x128xf32>
    %cst_15 = arith.constant 2.000000e+00 : f32
    %33 = vector.broadcast %cst_15 : f32 to vector<512x128xf32>
    %34 = arith.mulf %33, %32 : vector<512x128xf32>
    %c136 = arith.constant 136 : index
    %c0_16 = arith.constant 0 : index
    %35 = vector.load %arg2[%c136, %c0_16] : memref<392x128xf32, #tpu.memory_space<vmem>>, vector<128x128xf32>
    %c2 = arith.constant 2 : index
    %c0_17 = arith.constant 0 : index
    %36 = vector.load %arg3[%c2, %c0_17] : memref<4x128xf32, #tpu.memory_space<vmem>>, vector<1x128xf32>
    %cst_18 = arith.constant dense<0.000000e+00> : vector<512x128xf32>
    %37 = tpu.matmul %34, %35, %cst_18 {dimension_numbers = #tpu.dot_dimension_numbers<[1], [0], [0], [1], [0, 0, 1, 1], [], []>} : vector<512x128xf32>, vector<128x128xf32>, vector<512x128xf32> -> vector<512x128xf32>
    %38 = vector.broadcast %36 : vector<1x128xf32> to vector<512x128xf32>
    %39 = arith.addf %37, %38 : vector<512x128xf32>
    %cst_19 = arith.constant 0.000000e+00 : f32
    %40 = vector.broadcast %cst_19 : f32 to vector<512x128xf32>
    %41 = arith.maximumf %39, %40 : vector<512x128xf32>
    %42 = math.absf %39 : vector<512x128xf32>
    %cst_20 = arith.constant 0.000000e+00 : f32
    %43 = vector.broadcast %cst_20 : f32 to vector<512x128xf32>
    %44 = arith.subf %43, %42 : vector<512x128xf32>
    %45 = math.exp %44 : vector<512x128xf32>
    %46 = math.log1p %45 : vector<512x128xf32>
    %47 = arith.addf %41, %46 : vector<512x128xf32>
    %cst_21 = arith.constant 0.693147182 : f32
    %48 = vector.broadcast %cst_21 : f32 to vector<512x128xf32>
    %49 = arith.subf %47, %48 : vector<512x128xf32>
    %cst_22 = arith.constant 2.000000e+00 : f32
    %50 = vector.broadcast %cst_22 : f32 to vector<512x128xf32>
    %51 = arith.mulf %50, %49 : vector<512x128xf32>
    %c264 = arith.constant 264 : index
    %c0_23 = arith.constant 0 : index
    %52 = vector.load %arg2[%c264, %c0_23] : memref<392x128xf32, #tpu.memory_space<vmem>>, vector<128x128xf32>
    %c3 = arith.constant 3 : index
    %c0_24 = arith.constant 0 : index
    %53 = vector.load %arg3[%c3, %c0_24] : memref<4x128xf32, #tpu.memory_space<vmem>>, vector<1x128xf32>
    %cst_25 = arith.constant dense<0.000000e+00> : vector<512x128xf32>
    %54 = tpu.matmul %51, %52, %cst_25 {dimension_numbers = #tpu.dot_dimension_numbers<[1], [0], [0], [1], [0, 0, 1, 1], [], []>} : vector<512x128xf32>, vector<128x128xf32>, vector<512x128xf32> -> vector<512x128xf32>
    %55 = vector.broadcast %53 : vector<1x128xf32> to vector<512x128xf32>
    %56 = arith.addf %54, %55 : vector<512x128xf32>
    %c0_26 = arith.constant 0 : index
    %c0_27 = arith.constant 0 : index
    %57 = vector.load %arg4[%c0_26, %c0_27] : memref<512x128xf32, #tpu.memory_space<vmem>>, vector<512x128xf32>
    tpu.vector_store %arg4[%c0_26, %c0_27], %56 {strides = array<i32>} : memref<512x128xf32, #tpu.memory_space<vmem>>, vector<512x128xf32>,
    return
  }
  func.func @transform_0(%arg0: i32) -> (i32, i32) {
    %c0_i32 = arith.constant 0 : i32
    %c0_i32_0 = arith.constant 0 : i32
    return %arg0, %c0_i32 : i32, i32
  }
  func.func @transform_1(%arg0: i32) -> (i32, i32) {
    %c0_i32 = arith.constant 0 : i32
    %c0_i32_0 = arith.constant 0 : i32
    %c0_i32_1 = arith.constant 0 : i32
    return %c0_i32, %c0_i32_0 : i32, i32
  }
  func.func @transform_2(%arg0: i32) -> (i32, i32) {
    %c0_i32 = arith.constant 0 : i32
    %c0_i32_0 = arith.constant 0 : i32
    %c0_i32_1 = arith.constant 0 : i32
    return %c0_i32, %c0_i32_0 : i32, i32
  }
  func.func @transform_3(%arg0: i32) -> (i32, i32) {
    %c0_i32 = arith.constant 0 : i32
    %c0_i32_0 = arith.constant 0 : i32
    return %arg0, %c0_i32 : i32, i32
  }
}

</mosaic_0001>

<llo_original>
// kernel: tpu_custom_call.1
$region0: #{tpu_custom_call.1}
  #allocation0 [shape = 'u32[]', space=smem, size = 0x4, offset = 0x4, fixed_abs, tag = 'smem constant byte address 0x4 - core index']
  #allocation1 [shape = 'u32[144,128]{1,0:T(1,128)}', space=vmem, size = 0x12000, scoped, tag = 'internal scratch']
  %s0 = inlined_call_operand.vmem [shape: f32[512,8], index: 0, kind: input, shape index: {}]
  %s1 = inlined_call_operand.vmem [shape: f32[392,128], index: 1, kind: input, shape index: {}]
  %s2 = inlined_call_operand.vmem [shape: f32[4,128], index: 2, kind: input, shape index: {}]
  %s3 = inlined_call_operand.hbm [shape: f32[512,128], index: 3, kind: output, shape index: {}]
  %s4 = sld [smem:[#allocation0]]
  $region22: #{tpu_custom_call.1} parent=0
    _
  %s6 = ssub.s32 1, %s4
  %s7 = scalar_select 0, %s6, %s4
  $region1: #{tpu_custom_call.1} parent=0
    #allocation2 [shape = 'u8[262144]{0}', space=vmem, size = 0x40000, scoped, tag = 'output window, operand 0, single buffered']
    #allocation3 [shape = 's32[1]{0}', space=sflag, size = 0x4, scoped, tag = 'scoped memory for tpu_custom_call.1']
    %8 = vsyncpa [#allocation3], 0
    // Predicated region
    $region2: #{tpu_custom_call.1} parent=1 // pred_check
      _
    $region3: #{tpu_custom_call.1} parent=1 // pred_check_branch
      %10 = sbr.rel (0) target = $region5
    $region4: #{tpu_custom_call.1} parent=1 // pred_region
      _
    $region5: #{tpu_custom_call.1} parent=1 // pred_fallthru
      _
    // Predicated region
    $region6: #{tpu_custom_call.1} parent=1 // pred_check
      _
    $region7: #{tpu_custom_call.1} parent=1 // pred_check_branch
      %12 = sbr.rel (0) target = $region9
    $region8: #{tpu_custom_call.1} parent=1 // pred_region
      _
    $region9: #{tpu_custom_call.1} parent=1 // pred_fallthru
      _
    // Predicated region
    $region10: #{tpu_custom_call.1} parent=1 // pred_check
      _
    $region11: #{tpu_custom_call.1} parent=1 // pred_check_branch
      %14 = sbr.rel (0) target = $region13
    $region12: #{tpu_custom_call.1} parent=1 // pred_region
      _
    $region13: #{tpu_custom_call.1} parent=1 // pred_fallthru
      _
    %v15 = vld [vmem:[%s0] sm:$0xff]
    %v16 = vld [vmem:[%s0 + $0x8] sm:$0xff]
    %v17 = vld [vmem:[%s0 + $0x10] sm:$0xff]
    %v18 = vld [vmem:[%s0 + $0x18] sm:$0xff]
    %v19 = vld [vmem:[%s0 + $0x20] sm:$0xff]
    %v20 = vld [vmem:[%s0 + $0x28] sm:$0xff]
    %v21 = vld [vmem:[%s0 + $0x30] sm:$0xff]
    %v22 = vld [vmem:[%s0 + $0x38] sm:$0xff]
    %v23 = vld [vmem:[%s0 + $0x40] sm:$0xff]
    %v24 = vld [vmem:[%s0 + $0x48] sm:$0xff]
    %v25 = vld [vmem:[%s0 + $0x50] sm:$0xff]
    %v26 = vld [vmem:[%s0 + $0x58] sm:$0xff]
    %v27 = vld [vmem:[%s0 + $0x60] sm:$0xff]
    %v28 = vld [vmem:[%s0 + $0x68] sm:$0xff]
    %v29 = vld [vmem:[%s0 + $0x70] sm:$0xff]
    %v30 = vld [vmem:[%s0 + $0x78] sm:$0xff]
    %v31 = vld [vmem:[%s0 + $0x80] sm:$0xff]
    %v32 = vld [vmem:[%s0 + $0x88] sm:$0xff]
    %v33 = vld [vmem:[%s0 + $0x90] sm:$0xff]
    %v34 = vld [vmem:[%s0 + $0x98] sm:$0xff]
    %v35 = vld [vmem:[%s0 + $0xa0] sm:$0xff]
    %v36 = vld [vmem:[%s0 + $0xa8] sm:$0xff]
    %v37 = vld [vmem:[%s0 + $0xb0] sm:$0xff]
    %v38 = vld [vmem:[%s0 + $0xb8] sm:$0xff]
    %v39 = vld [vmem:[%s0 + $0xc0] sm:$0xff]
    %v40 = vld [vmem:[%s0 + $0xc8] sm:$0xff]
    %v41 = vld [vmem:[%s0 + $0xd0] sm:$0xff]
    %v42 = vld [vmem:[%s0 + $0xd8] sm:$0xff]
    %v43 = vld [vmem:[%s0 + $0xe0] sm:$0xff]
    %v44 = vld [vmem:[%s0 + $0xe8] sm:$0xff]
    %v45 = vld [vmem:[%s0 + $0xf0] sm:$0xff]
    %v46 = vld [vmem:[%s0 + $0xf8] sm:$0xff]
    %v47 = vld [vmem:[%s0 + $0x100] sm:$0xff]
    %v48 = vld [vmem:[%s0 + $0x108] sm:$0xff]
    %v49 = vld [vmem:[%s0 + $0x110] sm:$0xff]
    %v50 = vld [vmem:[%s0 + $0x118] sm:$0xff]
    %v51 = vld [vmem:[%s0 + $0x120] sm:$0xff]
    %v52 = vld [vmem:[%s0 + $0x128] sm:$0xff]
    %v53 = vld [vmem:[%s0 + $0x130] sm:$0xff]
    %v54 = vld [vmem:[%s0 + $0x138] sm:$0xff]
    %v55 = vld [vmem:[%s0 + $0x140] sm:$0xff]
    %v56 = vld [vmem:[%s0 + $0x148] sm:$0xff]
    %v57 = vld [vmem:[%s0 + $0x150] sm:$0xff]
    %v58 = vld [vmem:[%s0 + $0x158] sm:$0xff]
    %v59 = vld [vmem:[%s0 + $0x160] sm:$0xff]
    %v60 = vld [vmem:[%s0 + $0x168] sm:$0xff]
    %v61 = vld [vmem:[%s0 + $0x170] sm:$0xff]
    %v62 = vld [vmem:[%s0 + $0x178] sm:$0xff]
    %v63 = vld [vmem:[%s0 + $0x180] sm:$0xff]
    %v64 = vld [vmem:[%s0 + $0x188] sm:$0xff]
    %v65 = vld [vmem:[%s0 + $0x190] sm:$0xff]
    %v66 = vld [vmem:[%s0 + $0x198] sm:$0xff]
    %v67 = vld [vmem:[%s0 + $0x1a0] sm:$0xff]
    %v68 = vld [vmem:[%s0 + $0x1a8] sm:$0xff]
    %v69 = vld [vmem:[%s0 + $0x1b0] sm:$0xff]
    %v70 = vld [vmem:[%s0 + $0x1b8] sm:$0xff]
    %v71 = vld [vmem:[%s0 + $0x1c0] sm:$0xff]
    %v72 = vld [vmem:[%s0 + $0x1c8] sm:$0xff]
    %v73 = vld [vmem:[%s0 + $0x1d0] sm:$0xff]
    %v74 = vld [vmem:[%s0 + $0x1d8] sm:$0xff]
    %v75 = vld [vmem:[%s0 + $0x1e0] sm:$0xff]
    %v76 = vld [vmem:[%s0 + $0x1e8] sm:$0xff]
    %v77 = vld [vmem:[%s0 + $0x1f0] sm:$0xff]
    %v78 = vld [vmem:[%s0 + $0x1f8] sm:$0xff]
    %v79 = vld [vmem:[%s1] sm:$0xff]
    %v80 = vld [vmem:[%s2] sm:$0x1]
    %v81 = vlaneseq
    %v82 = vshrl.u32 %v81, 7
    %v83 = vsub.s32 0, %v82
    %v84 = vrot.slane %v80, %v83
    %vm85 = vcmask 64512
    %v87 = vsel %vm85, %v15, 0
    %v90 = vsel %vm85, %v16, 0
    %v93 = vsel %vm85, %v17, 0
    %v96 = vsel %vm85, %v18, 0
    %v99 = vsel %vm85, %v19, 0
    %v102 = vsel %vm85, %v20, 0
    %v105 = vsel %vm85, %v21, 0
    %v108 = vsel %vm85, %v22, 0
    %v111 = vsel %vm85, %v23, 0
    %v114 = vsel %vm85, %v24, 0
    %v117 = vsel %vm85, %v25, 0
    %v120 = vsel %vm85, %v26, 0
    %v123 = vsel %vm85, %v27, 0
    %v126 = vsel %vm85, %v28, 0
    %v129 = vsel %vm85, %v29, 0
    %v132 = vsel %vm85, %v30, 0
    %v135 = vsel %vm85, %v31, 0
    %v138 = vsel %vm85, %v32, 0
    %v141 = vsel %vm85, %v33, 0
    %v144 = vsel %vm85, %v34, 0
    %v147 = vsel %vm85, %v35, 0
    %v150 = vsel %vm85, %v36, 0
    %v153 = vsel %vm85, %v37, 0
    %v156 = vsel %vm85, %v38, 0
    %v159 = vsel %vm85, %v39, 0
    %v162 = vsel %vm85, %v40, 0
    %v165 = vsel %vm85, %v41, 0
    %v168 = vsel %vm85, %v42, 0
    %v171 = vsel %vm85, %v43, 0
    %v174 = vsel %vm85, %v44, 0
    %v177 = vsel %vm85, %v45, 0
    %v180 = vsel %vm85, %v46, 0
    %v183 = vsel %vm85, %v47, 0
    %v186 = vsel %vm85, %v48, 0
    %v189 = vsel %vm85, %v49, 0
    %v192 = vsel %vm85, %v50, 0
    %v195 = vsel %vm85, %v51, 0
    %v198 = vsel %vm85, %v52, 0
    %v201 = vsel %vm85, %v53, 0
    %v204 = vsel %vm85, %v54, 0
    %v207 = vsel %vm85, %v55, 0
    %v210 = vsel %vm85, %v56, 0
    %v213 = vsel %vm85, %v57, 0
    %v216 = vsel %vm85, %v58, 0
    %v219 = vsel %vm85, %v59, 0
    %v222 = vsel %vm85, %v60, 0
    %v225 = vsel %vm85, %v61, 0
    %v228 = vsel %vm85, %v62, 0
    %v231 = vsel %vm85, %v63, 0
    %v234 = vsel %vm85, %v64, 0
    %v237 = vsel %vm85, %v65, 0
    %v240 = vsel %vm85, %v66, 0
    %v243 = vsel %vm85, %v67, 0
    %v246 = vsel %vm85, %v68, 0
    %v249 = vsel %vm85, %v69, 0
    %v252 = vsel %vm85, %v70, 0
    %v255 = vsel %vm85, %v71, 0
    %v258 = vsel %vm85, %v72, 0
    %v261 = vsel %vm85, %v73, 0
    %v264 = vsel %vm85, %v74, 0
    %v267 = vsel %vm85, %v75, 0
    %v270 = vsel %vm85, %v76, 0
    %v273 = vsel %vm85, %v77, 0
    %v276 = vsel %vm85, %v78, 0
    %278 = vmatprep.subr.mxu0 0.0
    %279 = vmatpush1.msra.mxu0 0.0
    %280 = vmatprep.subr.mxu0 0.0
    %281 = vmatpush1.msra.mxu0 0.0
    %282 = vmatprep.subr.mxu0 0.0
    %283 = vmatpush1.msra.mxu0 0.0
    %284 = vmatprep.subr.mxu0 0.0
    %285 = vmatpush1.msra.mxu0 0.0
    %286 = vmatprep.subr.mxu0 0.0
    %287 = vmatpush1.msra.mxu0 0.0
    %288 = vmatprep.subr.mxu0 0.0
    %289 = vmatpush1.msra.mxu0 0.0
    %290 = vmatprep.subr.mxu0 0.0
    %291 = vmatpush1.msra.mxu0 0.0
    %292 = vmatprep.subr.mxu0 0.0
    %293 = vmatpush1.msra.mxu0 0.0
    %294 = vmatprep.subr.mxu0 0.0
    %295 = vmatpush1.msra.mxu0 0.0
    %296 = vmatprep.subr.mxu0 0.0
    %297 = vmatpush1.msra.mxu0 0.0
    %298 = vmatprep.subr.mxu0 0.0
    %299 = vmatpush1.msra.mxu0 0.0
    %300 = vmatprep.subr.mxu0 0.0
    %301 = vmatpush1.msra.mxu0 0.0
    %302 = vmatprep.subr.mxu0 0.0
    %303 = vmatpush1.msra.mxu0 0.0
    %304 = vmatprep.subr.mxu0 0.0
    %305 = vmatpush1.msra.mxu0 0.0
    %306 = vmatprep.subr.mxu0 0.0
    %307 = vmatpush1.msra.mxu0 0.0
    %308 = vmatprep.subr.mxu0 0.0
    %309 = vmatpush1.msra.mxu0 %v79
    %310 = vmatprep.subr.mxu0 0.0
    %311 = vmatpush2.msra.mxu0 0.0
    %312 = vmatprep.subr.mxu0 0.0
    %313 = vmatpush2.msra.mxu0 0.0
    %314 = vmatprep.subr.mxu0 0.0
    %315 = vmatpush2.msra.mxu0 0.0
    %316 = vmatprep.subr.mxu0 0.0
    %317 = vmatpush2.msra.mxu0 0.0
    %318 = vmatprep.subr.mxu0 0.0
    %319 = vmatpush2.msra.mxu0 0.0
    %320 = vmatprep.subr.mxu0 0.0
    %321 = vmatpush2.msra.mxu0 0.0
    %322 = vmatprep.subr.mxu0 0.0
    %323 = vmatpush2.msra.mxu0 0.0
    %324 = vmatprep.subr.mxu0 0.0
    %325 = vmatpush2.msra.mxu0 0.0
    %326 = vmatprep.subr.mxu0 0.0
    %327 = vmatpush2.msra.mxu0 0.0
    %328 = vmatprep.subr.mxu0 0.0
    %329 = vmatpush2.msra.mxu0 0.0
    %330 = vmatprep.subr.mxu0 0.0
    %331 = vmatpush2.msra.mxu0 0.0
    %332 = vmatprep.subr.mxu0 0.0
    %333 = vmatpush2.msra.mxu0 0.0
    %334 = vmatprep.subr.mxu0 0.0
    %335 = vmatpush2.msra.mxu0 0.0
    %336 = vmatprep.subr.mxu0 0.0
    %337 = vmatpush2.msra.mxu0 0.0
    %338 = vmatprep.subr.mxu0 0.0
    %339 = vmatpush2.msra.mxu0 0.0
    %340 = vmatprep.subr.mxu0 0.0
    %341 = vmatpush2.msra.mxu0 0.0
    %342 = vmatprep.mubr.f32.mxu0 0.0
    %343 = vmatmul.mubr.f32.gmra.mxu0 %v87
    %v344 = vpop.f32.mrf.mxu0
    %v345 = vadd.f32 %v84, %v344
    %v346 = vpop.f32.mrf.mxu0
    %347 = vmatprep.mubr.f32.mxu0 0.0
    %348 = vmatmul.mubr.f32.gmra.mxu0 %v90
    %v349 = vpop.f32.mrf.mxu0
    %v350 = vadd.f32 %v84, %v349
    %v351 = vpop.f32.mrf.mxu0
    %352 = vmatprep.mubr.f32.mxu0 0.0
    %353 = vmatmul.mubr.f32.gmra.mxu0 %v93
    %v354 = vpop.f32.mrf.mxu0
    %v355 = vadd.f32 %v84, %v354
    %v356 = vpop.f32.mrf.mxu0
    %357 = vmatprep.mubr.f32.mxu0 0.0
    %358 = vmatmul.mubr.f32.gmra.mxu0 %v96
    %v359 = vpop.f32.mrf.mxu0
    %v360 = vadd.f32 %v84, %v359
    %v361 = vpop.f32.mrf.mxu0
    %362 = vmatprep.mubr.f32.mxu0 0.0
    %363 = vmatmul.mubr.f32.gmra.mxu0 %v99
    %v364 = vpop.f32.mrf.mxu0
    %v365 = vadd.f32 %v84, %v364
    %v366 = vpop.f32.mrf.mxu0
    %367 = vmatprep.mubr.f32.mxu0 0.0
    %368 = vmatmul.mubr.f32.gmra.mxu0 %v102
    %v369 = vpop.f32.mrf.mxu0
    %v370 = vadd.f32 %v84, %v369
    %v371 = vpop.f32.mrf.mxu0
    %372 = vmatprep.mubr.f32.mxu0 0.0
    %373 = vmatmul.mubr.f32.gmra.mxu0 %v105
    %v374 = vpop.f32.mrf.mxu0
    %v375 = vadd.f32 %v84, %v374
    %v376 = vpop.f32.mrf.mxu0
    %377 = vmatprep.mubr.f32.mxu0 0.0
    %378 = vmatmul.mubr.f32.gmra.mxu0 %v108
    %v379 = vpop.f32.mrf.mxu0
    %v380 = vadd.f32 %v84, %v379
    %v381 = vpop.f32.mrf.mxu0
    %382 = vmatprep.mubr.f32.mxu0 0.0
    %383 = vmatmul.mubr.f32.gmra.mxu0 %v111
    %v384 = vpop.f32.mrf.mxu0
    %v385 = vadd.f32 %v84, %v384
    %v386 = vpop.f32.mrf.mxu0
    %387 = vmatprep.mubr.f32.mxu0 0.0
    %388 = vmatmul.mubr.f32.gmra.mxu0 %v114
    %v389 = vpop.f32.mrf.mxu0
    %v390 = vadd.f32 %v84, %v389
    %v391 = vpop.f32.mrf.mxu0
    %392 = vmatprep.mubr.f32.mxu0 0.0
    %393 = vmatmul.mubr.f32.gmra.mxu0 %v117
    %v394 = vpop.f32.mrf.mxu0
    %v395 = vadd.f32 %v84, %v394
    %v396 = vpop.f32.mrf.mxu0
    %397 = vmatprep.mubr.f32.mxu0 0.0
    %398 = vmatmul.mubr.f32.gmra.mxu0 %v120
    %v399 = vpop.f32.mrf.mxu0
    %v400 = vadd.f32 %v84, %v399
    %v401 = vpop.f32.mrf.mxu0
    %402 = vmatprep.mubr.f32.mxu0 0.0
    %403 = vmatmul.mubr.f32.gmra.mxu0 %v123
    %v404 = vpop.f32.mrf.mxu0
    %v405 = vadd.f32 %v84, %v404
    %v406 = vpop.f32.mrf.mxu0
    %407 = vmatprep.mubr.f32.mxu0 0.0
    %408 = vmatmul.mubr.f32.gmra.mxu0 %v126
    %v409 = vpop.f32.mrf.mxu0
    %v410 = vadd.f32 %v84, %v409
    %v411 = vpop.f32.mrf.mxu0
    %412 = vmatprep.mubr.f32.mxu0 0.0
    %413 = vmatmul.mubr.f32.gmra.mxu0 %v129
    %v414 = vpop.f32.mrf.mxu0
    %v415 = vadd.f32 %v84, %v414
    %v416 = vpop.f32.mrf.mxu0
    %417 = vmatprep.mubr.f32.mxu0 0.0
    %418 = vmatmul.mubr.f32.gmra.mxu0 %v132
    %v419 = vpop.f32.mrf.mxu0
    %v420 = vadd.f32 %v84, %v419
    %v421 = vpop.f32.mrf.mxu0
    %422 = vmatprep.mubr.f32.mxu0 0.0
    %423 = vmatmul.mubr.f32.gmra.mxu0 %v135
    %v424 = vpop.f32.mrf.mxu0
    %v425 = vadd.f32 %v84, %v424
    %v426 = vpop.f32.mrf.mxu0
    %427 = vmatprep.mubr.f32.mxu0 0.0
    %428 = vmatmul.mubr.f32.gmra.mxu0 %v138
    %v429 = vpop.f32.mrf.mxu0
    %v430 = vadd.f32 %v84, %v429
    %v431 = vpop.f32.mrf.mxu0
    %432 = vmatprep.mubr.f32.mxu0 0.0
    %433 = vmatmul.mubr.f32.gmra.mxu0 %v141
    %v434 = vpop.f32.mrf.mxu0
    %v435 = vadd.f32 %v84, %v434
    %v436 = vpop.f32.mrf.mxu0
    %437 = vmatprep.mubr.f32.mxu0 0.0
    %438 = vmatmul.mubr.f32.gmra.mxu0 %v144
    %v439 = vpop.f32.mrf.mxu0
    %v440 = vadd.f32 %v84, %v439
    %v441 = vpop.f32.mrf.mxu0
    %442 = vmatprep.mubr.f32.mxu0 0.0
    %443 = vmatmul.mubr.f32.gmra.mxu0 %v147
    %v444 = vpop.f32.mrf.mxu0
    %v445 = vadd.f32 %v84, %v444
    %v446 = vpop.f32.mrf.mxu0
    %447 = vmatprep.mubr.f32.mxu0 0.0
    %448 = vmatmul.mubr.f32.gmra.mxu0 %v150
    %v449 = vpop.f32.mrf.mxu0
    %v450 = vadd.f32 %v84, %v449
    %v451 = vpop.f32.mrf.mxu0
    %452 = vmatprep.mubr.f32.mxu0 0.0
    %453 = vmatmul.mubr.f32.gmra.mxu0 %v153
    %v454 = vpop.f32.mrf.mxu0
    %v455 = vadd.f32 %v84, %v454
    %v456 = vpop.f32.mrf.mxu0
    %457 = vmatprep.mubr.f32.mxu0 0.0
    %458 = vmatmul.mubr.f32.gmra.mxu0 %v156
    %v459 = vpop.f32.mrf.mxu0
    %v460 = vadd.f32 %v84, %v459
    %v461 = vpop.f32.mrf.mxu0
    %462 = vmatprep.mubr.f32.mxu0 0.0
    %463 = vmatmul.mubr.f32.gmra.mxu0 %v159
    %v464 = vpop.f32.mrf.mxu0
    %v465 = vadd.f32 %v84, %v464
    %v466 = vpop.f32.mrf.mxu0
    %467 = vmatprep.mubr.f32.mxu0 0.0
    %468 = vmatmul.mubr.f32.gmra.mxu0 %v162
    %v469 = vpop.f32.mrf.mxu0
    %v470 = vadd.f32 %v84, %v469
    %v471 = vpop.f32.mrf.mxu0
    %472 = vmatprep.mubr.f32.mxu0 0.0
    %473 = vmatmul.mubr.f32.gmra.mxu0 %v165
    %v474 = vpop.f32.mrf.mxu0
    %v475 = vadd.f32 %v84, %v474
    %v476 = vpop.f32.mrf.mxu0
    %477 = vmatprep.mubr.f32.mxu0 0.0
    %478 = vmatmul.mubr.f32.gmra.mxu0 %v168
    %v479 = vpop.f32.mrf.mxu0
    %v480 = vadd.f32 %v84, %v479
    %v481 = vpop.f32.mrf.mxu0
    %482 = vmatprep.mubr.f32.mxu0 0.0
    %483 = vmatmul.mubr.f32.gmra.mxu0 %v171
    %v484 = vpop.f32.mrf.mxu0
    %v485 = vadd.f32 %v84, %v484
    %v486 = vpop.f32.mrf.mxu0
    %487 = vmatprep.mubr.f32.mxu0 0.0
    %488 = vmatmul.mubr.f32.gmra.mxu0 %v174
    %v489 = vpop.f32.mrf.mxu0
    %v490 = vadd.f32 %v84, %v489
    %v491 = vpop.f32.mrf.mxu0
    %492 = vmatprep.mubr.f32.mxu0 0.0
    %493 = vmatmul.mubr.f32.gmra.mxu0 %v177
    %v494 = vpop.f32.mrf.mxu0
    %v495 = vadd.f32 %v84, %v494
    %v496 = vpop.f32.mrf.mxu0
    %497 = vmatprep.mubr.f32.mxu0 0.0
    %498 = vmatmul.mubr.f32.gmra.mxu0 %v180
    %v499 = vpop.f32.mrf.mxu0
    %v500 = vadd.f32 %v84, %v499
    %v501 = vpop.f32.mrf.mxu0
    %502 = vmatprep.mubr.f32.mxu0 0.0
    %503 = vmatmul.mubr.f32.gmra.mxu0 %v183
    %v504 = vpop.f32.mrf.mxu0
    %v505 = vadd.f32 %v84, %v504
    %v506 = vpop.f32.mrf.mxu0
    %507 = vmatprep.mubr.f32.mxu0 0.0
    %508 = vmatmul.mubr.f32.gmra.mxu0 %v186
    %v509 = vpop.f32.mrf.mxu0
    %v510 = vadd.f32 %v84, %v509
    %v511 = vpop.f32.mrf.mxu0
    %512 = vmatprep.mubr.f32.mxu0 0.0
    %513 = vmatmul.mubr.f32.gmra.mxu0 %v189
    %v514 = vpop.f32.mrf.mxu0
    %v515 = vadd.f32 %v84, %v514
    %v516 = vpop.f32.mrf.mxu0
    %517 = vmatprep.mubr.f32.mxu0 0.0
    %518 = vmatmul.mubr.f32.gmra.mxu0 %v192
    %v519 = vpop.f32.mrf.mxu0
    %v520 = vadd.f32 %v84, %v519
    %v521 = vpop.f32.mrf.mxu0
    %522 = vmatprep.mubr.f32.mxu0 0.0
    %523 = vmatmul.mubr.f32.gmra.mxu0 %v195
    %v524 = vpop.f32.mrf.mxu0
    %v525 = vadd.f32 %v84, %v524
    %v526 = vpop.f32.mrf.mxu0
    %527 = vmatprep.mubr.f32.mxu0 0.0
    %528 = vmatmul.mubr.f32.gmra.mxu0 %v198
    %v529 = vpop.f32.mrf.mxu0
    %v530 = vadd.f32 %v84, %v529
    %v531 = vpop.f32.mrf.mxu0
    %532 = vmatprep.mubr.f32.mxu0 0.0
    %533 = vmatmul.mubr.f32.gmra.mxu0 %v201
    %v534 = vpop.f32.mrf.mxu0
    %v535 = vadd.f32 %v84, %v534
    %v536 = vpop.f32.mrf.mxu0
    %537 = vmatprep.mubr.f32.mxu0 0.0
    %538 = vmatmul.mubr.f32.gmra.mxu0 %v204
    %v539 = vpop.f32.mrf.mxu0
    %v540 = vadd.f32 %v84, %v539
    %v541 = vpop.f32.mrf.mxu0
    %542 = vmatprep.mubr.f32.mxu0 0.0
    %543 = vmatmul.mubr.f32.gmra.mxu0 %v207
    %v544 = vpop.f32.mrf.mxu0
    %v545 = vadd.f32 %v84, %v544
    %v546 = vpop.f32.mrf.mxu0
    %547 = vmatprep.mubr.f32.mxu0 0.0
    %548 = vmatmul.mubr.f32.gmra.mxu0 %v210
    %v549 = vpop.f32.mrf.mxu0
    %v550 = vadd.f32 %v84, %v549
    %v551 = vpop.f32.mrf.mxu0
    %552 = vmatprep.mubr.f32.mxu0 0.0
    %553 = vmatmul.mubr.f32.gmra.mxu0 %v213
    %v554 = vpop.f32.mrf.mxu0
    %v555 = vadd.f32 %v84, %v554
    %v556 = vpop.f32.mrf.mxu0
    %557 = vmatprep.mubr.f32.mxu0 0.0
    %558 = vmatmul.mubr.f32.gmra.mxu0 %v216
    %v559 = vpop.f32.mrf.mxu0
    %v560 = vadd.f32 %v84, %v559
    %v561 = vpop.f32.mrf.mxu0
    %562 = vmatprep.mubr.f32.mxu0 0.0
    %563 = vmatmul.mubr.f32.gmra.mxu0 %v219
    %v564 = vpop.f32.mrf.mxu0
    %v565 = vadd.f32 %v84, %v564
    %v566 = vpop.f32.mrf.mxu0
    %567 = vmatprep.mubr.f32.mxu0 0.0
    %568 = vmatmul.mubr.f32.gmra.mxu0 %v222
    %v569 = vpop.f32.mrf.mxu0
    %v570 = vadd.f32 %v84, %v569
    %v571 = vpop.f32.mrf.mxu0
    %572 = vmatprep.mubr.f32.mxu0 0.0
    %573 = vmatmul.mubr.f32.gmra.mxu0 %v225
    %v574 = vpop.f32.mrf.mxu0
    %v575 = vadd.f32 %v84, %v574
    %v576 = vpop.f32.mrf.mxu0
    %577 = vmatprep.mubr.f32.mxu0 0.0
    %578 = vmatmul.mubr.f32.gmra.mxu0 %v228
    %v579 = vpop.f32.mrf.mxu0
    %v580 = vadd.f32 %v84, %v579
    %v581 = vpop.f32.mrf.mxu0
    %582 = vmatprep.mubr.f32.mxu0 0.0
    %583 = vmatmul.mubr.f32.gmra.mxu0 %v231
    %v584 = vpop.f32.mrf.mxu0
    %v585 = vadd.f32 %v84, %v584
    %v586 = vpop.f32.mrf.mxu0
    %587 = vmatprep.mubr.f32.mxu0 0.0
    %588 = vmatmul.mubr.f32.gmra.mxu0 %v234
    %v589 = vpop.f32.mrf.mxu0
    %v590 = vadd.f32 %v84, %v589
    %v591 = vpop.f32.mrf.mxu0
    %592 = vmatprep.mubr.f32.mxu0 0.0
    %593 = vmatmul.mubr.f32.gmra.mxu0 %v237
    %v594 = vpop.f32.mrf.mxu0
    %v595 = vadd.f32 %v84, %v594
    %v596 = vpop.f32.mrf.mxu0
    %597 = vmatprep.mubr.f32.mxu0 0.0
    %598 = vmatmul.mubr.f32.gmra.mxu0 %v240
    %v599 = vpop.f32.mrf.mxu0
    %v600 = vadd.f32 %v84, %v599
    %v601 = vpop.f32.mrf.mxu0
    %602 = vmatprep.mubr.f32.mxu0 0.0
    %603 = vmatmul.mubr.f32.gmra.mxu0 %v243
    %v604 = vpop.f32.mrf.mxu0
    %v605 = vadd.f32 %v84, %v604
    %v606 = vpop.f32.mrf.mxu0
    %607 = vmatprep.mubr.f32.mxu0 0.0
    %608 = vmatmul.mubr.f32.gmra.mxu0 %v246
    %v609 = vpop.f32.mrf.mxu0
    %v610 = vadd.f32 %v84, %v609
    %v611 = vpop.f32.mrf.mxu0
    %612 = vmatprep.mubr.f32.mxu0 0.0
    %613 = vmatmul.mubr.f32.gmra.mxu0 %v249
    %v614 = vpop.f32.mrf.mxu0
    %v615 = vadd.f32 %v84, %v614
    %v616 = vpop.f32.mrf.mxu0
    %617 = vmatprep.mubr.f32.mxu0 0.0
    %618 = vmatmul.mubr.f32.gmra.mxu0 %v252
    %v619 = vpop.f32.mrf.mxu0
    %v620 = vadd.f32 %v84, %v619
    %v621 = vpop.f32.mrf.mxu0
    %622 = vmatprep.mubr.f32.mxu0 0.0
    %623 = vmatmul.mubr.f32.gmra.mxu0 %v255
    %v624 = vpop.f32.mrf.mxu0
    %v625 = vadd.f32 %v84, %v624
    %v626 = vpop.f32.mrf.mxu0
    %627 = vmatprep.mubr.f32.mxu0 0.0
    %628 = vmatmul.mubr.f32.gmra.mxu0 %v258
    %v629 = vpop.f32.mrf.mxu0
    %v630 = vadd.f32 %v84, %v629
    %v631 = vpop.f32.mrf.mxu0
    %632 = vmatprep.mubr.f32.mxu0 0.0
    %633 = vmatmul.mubr.f32.gmra.mxu0 %v261
    %v634 = vpop.f32.mrf.mxu0
    %v635 = vadd.f32 %v84, %v634
    %v636 = vpop.f32.mrf.mxu0
    %637 = vmatprep.mubr.f32.mxu0 0.0
    %638 = vmatmul.mubr.f32.gmra.mxu0 %v264
    %v639 = vpop.f32.mrf.mxu0
    %v640 = vadd.f32 %v84, %v639
    %v641 = vpop.f32.mrf.mxu0
    %642 = vmatprep.mubr.f32.mxu0 0.0
    %643 = vmatmul.mubr.f32.gmra.mxu0 %v267
    %v644 = vpop.f32.mrf.mxu0
    %v645 = vadd.f32 %v84, %v644
    %v646 = vpop.f32.mrf.mxu0
    %647 = vmatprep.mubr.f32.mxu0 0.0
    %648 = vmatmul.mubr.f32.gmra.mxu0 %v270
    %v649 = vpop.f32.mrf.mxu0
    %v650 = vadd.f32 %v84, %v649
    %v651 = vpop.f32.mrf.mxu0
    %652 = vmatprep.mubr.f32.mxu0 0.0
    %653 = vmatmul.mubr.f32.gmra.mxu0 %v273
    %v654 = vpop.f32.mrf.mxu0
    %v655 = vadd.f32 %v84, %v654
    %v656 = vpop.f32.mrf.mxu0
    %657 = vmatprep.mubr.f32.mxu0 0.0
    %658 = vmatmul.mubr.f32.gmra.mxu0 %v276
    %v659 = vpop.f32.mrf.mxu0
    %v660 = vadd.f32 %v84, %v659
    %v661 = vpop.f32.mrf.mxu0
    %662 = vdwg.mxu0
    %v663 = vmax.f32 %v345, 0.0
    %v664 = vmax.f32 %v350, 0.0
    %v665 = vmax.f32 %v355, 0.0
    %v666 = vmax.f32 %v360, 0.0
    %v667 = vmax.f32 %v365, 0.0
    %v668 = vmax.f32 %v370, 0.0
    %v669 = vmax.f32 %v375, 0.0
    %v670 = vmax.f32 %v380, 0.0
    %v671 = vmax.f32 %v385, 0.0
    %v672 = vmax.f32 %v390, 0.0
    %v673 = vmax.f32 %v395, 0.0
    %v674 = vmax.f32 %v400, 0.0
    %v675 = vmax.f32 %v405, 0.0
    %v676 = vmax.f32 %v410, 0.0
    %v677 = vmax.f32 %v415, 0.0
    %v678 = vmax.f32 %v420, 0.0
    %v679 = vmax.f32 %v425, 0.0
    %v680 = vmax.f32 %v430, 0.0
    %v681 = vmax.f32 %v435, 0.0
    %v682 = vmax.f32 %v440, 0.0
    %v683 = vmax.f32 %v445, 0.0
    %v684 = vmax.f32 %v450, 0.0
    %v685 = vmax.f32 %v455, 0.0
    %v686 = vmax.f32 %v460, 0.0
    %v687 = vmax.f32 %v465, 0.0
    %v688 = vmax.f32 %v470, 0.0
    %v689 = vmax.f32 %v475, 0.0
    %v690 = vmax.f32 %v480, 0.0
    %v691 = vmax.f32 %v485, 0.0
    %v692 = vmax.f32 %v490, 0.0
    %v693 = vmax.f32 %v495, 0.0
    %v694 = vmax.f32 %v500, 0.0
    %v695 = vmax.f32 %v505, 0.0
    %v696 = vmax.f32 %v510, 0.0
    %v697 = vmax.f32 %v515, 0.0
    %v698 = vmax.f32 %v520, 0.0
    %v699 = vmax.f32 %v525, 0.0
    %v700 = vmax.f32 %v530, 0.0
    %v701 = vmax.f32 %v535, 0.0
    %v702 = vmax.f32 %v540, 0.0
    %v703 = vmax.f32 %v545, 0.0
    %v704 = vmax.f32 %v550, 0.0
    %v705 = vmax.f32 %v555, 0.0
    %v706 = vmax.f32 %v560, 0.0
    %v707 = vmax.f32 %v565, 0.0
    %v708 = vmax.f32 %v570, 0.0
    %v709 = vmax.f32 %v575, 0.0
    %v710 = vmax.f32 %v580, 0.0
    %v711 = vmax.f32 %v585, 0.0
    %v712 = vmax.f32 %v590, 0.0
    %v713 = vmax.f32 %v595, 0.0
    %v714 = vmax.f32 %v600, 0.0
    %v715 = vmax.f32 %v605, 0.0
    %v716 = vmax.f32 %v610, 0.0
    %v717 = vmax.f32 %v615, 0.0
    %v718 = vmax.f32 %v620, 0.0
    %v719 = vmax.f32 %v625, 0.0
    %v720 = vmax.f32 %v630, 0.0
    %v721 = vmax.f32 %v635, 0.0
    %v722 = vmax.f32 %v640, 0.0
    %v723 = vmax.f32 %v645, 0.0
    %v724 = vmax.f32 %v650, 0.0
    %v725 = vmax.f32 %v655, 0.0
    %v726 = vmax.f32 %v660, 0.0
    %v727 = vand.u32 2147483647, %v345
    %v728 = vand.u32 2147483647, %v350
    %v729 = vand.u32 2147483647, %v355
    %v730 = vand.u32 2147483647, %v360
    %v731 = vand.u32 2147483647, %v365
    %v732 = vand.u32 2147483647, %v370
    %v733 = vand.u32 2147483647, %v375
    %v734 = vand.u32 2147483647, %v380
    %v735 = vand.u32 2147483647, %v385
    %v736 = vand.u32 2147483647, %v390
    %v737 = vand.u32 2147483647, %v395
    %v738 = vand.u32 2147483647, %v400
    %v739 = vand.u32 2147483647, %v405
    %v740 = vand.u32 2147483647, %v410
    %v741 = vand.u32 2147483647, %v415
    %v742 = vand.u32 2147483647, %v420
    %v743 = vand.u32 2147483647, %v425
    %v744 = vand.u32 2147483647, %v430
    %v745 = vand.u32 2147483647, %v435
    %v746 = vand.u32 2147483647, %v440
    %v747 = vand.u32 2147483647, %v445
    %v748 = vand.u32 2147483647, %v450
    %v749 = vand.u32 2147483647, %v455
    %v750 = vand.u32 2147483647, %v460
    %v751 = vand.u32 2147483647, %v465
    %v752 = vand.u32 2147483647, %v470
    %v753 = vand.u32 2147483647, %v475
    %v754 = vand.u32 2147483647, %v480
    %v755 = vand.u32 2147483647, %v485
    %v756 = vand.u32 2147483647, %v490
    %v757 = vand.u32 2147483647, %v495
    %v758 = vand.u32 2147483647, %v500
    %v759 = vand.u32 2147483647, %v505
    %v760 = vand.u32 2147483647, %v510
    %v761 = vand.u32 2147483647, %v515
    %v762 = vand.u32 2147483647, %v520
    %v763 = vand.u32 2147483647, %v525
    %v764 = vand.u32 2147483647, %v530
    %v765 = vand.u32 2147483647, %v535
    %v766 = vand.u32 2147483647, %v540
    %v767 = vand.u32 2147483647, %v545
    %v768 = vand.u32 2147483647, %v550
    %v769 = vand.u32 2147483647, %v555
    %v770 = vand.u32 2147483647, %v560
    %v771 = vand.u32 2147483647, %v565
    %v772 = vand.u32 2147483647, %v570
    %v773 = vand.u32 2147483647, %v575
    %v774 = vand.u32 2147483647, %v580
    %v775 = vand.u32 2147483647, %v585
    %v776 = vand.u32 2147483647, %v590
    %v777 = vand.u32 2147483647, %v595
    %v778 = vand.u32 2147483647, %v600
    %v779 = vand.u32 2147483647, %v605
    %v780 = vand.u32 2147483647, %v610
    %v781 = vand.u32 2147483647, %v615
    %v782 = vand.u32 2147483647, %v620
    %v783 = vand.u32 2147483647, %v625
    %v784 = vand.u32 2147483647, %v630
    %v785 = vand.u32 2147483647, %v635
    %v786 = vand.u32 2147483647, %v640
    %v787 = vand.u32 2147483647, %v645
    %v788 = vand.u32 2147483647, %v650
    %v789 = vand.u32 2147483647, %v655
    %v790 = vand.u32 2147483647, %v660
    %v791 = vsub.f32 0.0, %v727
    %v792 = vsub.f32 0.0, %v728
    %v793 = vsub.f32 0.0, %v729
    %v794 = vsub.f32 0.0, %v730
    %v795 = vsub.f32 0.0, %v731
    %v796 = vsub.f32 0.0, %v732
    %v797 = vsub.f32 0.0, %v733
    %v798 = vsub.f32 0.0, %v734
    %v799 = vsub.f32 0.0, %v735
    %v800 = vsub.f32 0.0, %v736
    %v801 = vsub.f32 0.0, %v737
    %v802 = vsub.f32 0.0, %v738
    %v803 = vsub.f32 0.0, %v739
    %v804 = vsub.f32 0.0, %v740
    %v805 = vsub.f32 0.0, %v741
    %v806 = vsub.f32 0.0, %v742
    %v807 = vsub.f32 0.0, %v743
    %v808 = vsub.f32 0.0, %v744
    %v809 = vsub.f32 0.0, %v745
    %v810 = vsub.f32 0.0, %v746
    %v811 = vsub.f32 0.0, %v747
    %v812 = vsub.f32 0.0, %v748
    %v813 = vsub.f32 0.0, %v749
    %v814 = vsub.f32 0.0, %v750
    %v815 = vsub.f32 0.0, %v751
    %v816 = vsub.f32 0.0, %v752
    %v817 = vsub.f32 0.0, %v753
    %v818 = vsub.f32 0.0, %v754
    %v819 = vsub.f32 0.0, %v755
    %v820 = vsub.f32 0.0, %v756
    %v821 = vsub.f32 0.0, %v757
    %v822 = vsub.f32 0.0, %v758
    %v823 = vsub.f32 0.0, %v759
    %v824 = vsub.f32 0.0, %v760
    %v825 = vsub.f32 0.0, %v761
    %v826 = vsub.f32 0.0, %v762
    %v827 = vsub.f32 0.0, %v763
    %v828 = vsub.f32 0.0, %v764
    %v829 = vsub.f32 0.0, %v765
    %v830 = vsub.f32 0.0, %v766
    %v831 = vsub.f32 0.0, %v767
    %v832 = vsub.f32 0.0, %v768
    %v833 = vsub.f32 0.0, %v769
    %v834 = vsub.f32 0.0, %v770
    %v835 = vsub.f32 0.0, %v771
    %v836 = vsub.f32 0.0, %v772
    %v837 = vsub.f32 0.0, %v773
    %v838 = vsub.f32 0.0, %v774
    %v839 = vsub.f32 0.0, %v775
    %v840 = vsub.f32 0.0, %v776
    %v841 = vsub.f32 0.0, %v777
    %v842 = vsub.f32 0.0, %v778
    %v843 = vsub.f32 0.0, %v779
    %v844 = vsub.f32 0.0, %v780
    %v845 = vsub.f32 0.0, %v781
    %v846 = vsub.f32 0.0, %v782
    %v847 = vsub.f32 0.0, %v783
    %v848 = vsub.f32 0.0, %v784
    %v849 = vsub.f32 0.0, %v785
    %v850 = vsub.f32 0.0, %v786
    %v851 = vsub.f32 0.0, %v787
    %v852 = vsub.f32 0.0, %v788
    %v853 = vsub.f32 0.0, %v789
    %v854 = vsub.f32 0.0, %v790
    %v855 = vmul.f32 %v791, 1.442695
    %v856 = vpow.pop %v855
    %v857 = vmul.f32 %v792, 1.442695
    %v858 = vpow.pop %v857
    %v859 = vmul.f32 %v793, 1.442695
    %v860 = vpow.pop %v859
    %v861 = vmul.f32 %v794, 1.442695
    %v862 = vpow.pop %v861
    %v863 = vmul.f32 %v795, 1.442695
    %v864 = vpow.pop %v863
    %v865 = vmul.f32 %v796, 1.442695
    %v866 = vpow.pop %v865
    %v867 = vmul.f32 %v797, 1.442695
    %v868 = vpow.pop %v867
    %v869 = vmul.f32 %v798, 1.442695
    %v870 = vpow.pop %v869
    %v871 = vmul.f32 %v799, 1.442695
    %v872 = vpow.pop %v871
    %v873 = vmul.f32 %v800, 1.442695
    %v874 = vpow.pop %v873
    %v875 = vmul.f32 %v801, 1.442695
    %v876 = vpow.pop %v875
    %v877 = vmul.f32 %v802, 1.442695
    %v878 = vpow.pop %v877
    %v879 = vmul.f32 %v803, 1.442695
    %v880 = vpow.pop %v879
    %v881 = vmul.f32 %v804, 1.442695
    %v882 = vpow.pop %v881
    %v883 = vmul.f32 %v805, 1.442695
    %v884 = vpow.pop %v883
    %v885 = vmul.f32 %v806, 1.442695
    %v886 = vpow.pop %v885
    %v887 = vmul.f32 %v807, 1.442695
    %v888 = vpow.pop %v887
    %v889 = vmul.f32 %v808, 1.442695
    %v890 = vpow.pop %v889
    %v891 = vmul.f32 %v809, 1.442695
    %v892 = vpow.pop %v891
    %v893 = vmul.f32 %v810, 1.442695
    %v894 = vpow.pop %v893
    %v895 = vmul.f32 %v811, 1.442695
    %v896 = vpow.pop %v895
    %v897 = vmul.f32 %v812, 1.442695
    %v898 = vpow.pop %v897
    %v899 = vmul.f32 %v813, 1.442695
    %v900 = vpow.pop %v899
    %v901 = vmul.f32 %v814, 1.442695
    %v902 = vpow.pop %v901
    %v903 = vmul.f32 %v815, 1.442695
    %v904 = vpow.pop %v903
    %v905 = vmul.f32 %v816, 1.442695
    %v906 = vpow.pop %v905
    %v907 = vmul.f32 %v817, 1.442695
    %v908 = vpow.pop %v907
    %v909 = vmul.f32 %v818, 1.442695
    %v910 = vpow.pop %v909
    %v911 = vmul.f32 %v819, 1.442695
    %v912 = vpow.pop %v911
    %v913 = vmul.f32 %v820, 1.442695
    %v914 = vpow.pop %v913
    %v915 = vmul.f32 %v821, 1.442695
    %v916 = vpow.pop %v915
    %v917 = vmul.f32 %v822, 1.442695
    %v918 = vpow.pop %v917
    %v919 = vmul.f32 %v823, 1.442695
    %v920 = vpow.pop %v919
    %v921 = vmul.f32 %v824, 1.442695
    %v922 = vpow.pop %v921
    %v923 = vmul.f32 %v825, 1.442695
    %v924 = vpow.pop %v923
    %v925 = vmul.f32 %v826, 1.442695
    %v926 = vpow.pop %v925
    %v927 = vmul.f32 %v827, 1.442695
    %v928 = vpow.pop %v927
    %v929 = vmul.f32 %v828, 1.442695
    %v930 = vpow.pop %v929
    %v931 = vmul.f32 %v829, 1.442695
    %v932 = vpow.pop %v931
    %v933 = vmul.f32 %v830, 1.442695
    %v934 = vpow.pop %v933
    %v935 = vmul.f32 %v831, 1.442695
    %v936 = vpow.pop %v935
    %v937 = vmul.f32 %v832, 1.442695
    %v938 = vpow.pop %v937
    %v939 = vmul.f32 %v833, 1.442695
    %v940 = vpow.pop %v939
    %v941 = vmul.f32 %v834, 1.442695
    %v942 = vpow.pop %v941
    %v943 = vmul.f32 %v835, 1.442695
    %v944 = vpow.pop %v943
    %v945 = vmul.f32 %v836, 1.442695
    %v946 = vpow.pop %v945
    %v947 = vmul.f32 %v837, 1.442695
    %v948 = vpow.pop %v947
    %v949 = vmul.f32 %v838, 1.442695
    %v950 = vpow.pop %v949
    %v951 = vmul.f32 %v839, 1.442695
    %v952 = vpow.pop %v951
    %v953 = vmul.f32 %v840, 1.442695
    %v954 = vpow.pop %v953
    %v955 = vmul.f32 %v841, 1.442695
    %v956 = vpow.pop %v955
    %v957 = vmul.f32 %v842, 1.442695
    %v958 = vpow.pop %v957
    %v959 = vmul.f32 %v843, 1.442695
    %v960 = vpow.pop %v959
    %v961 = vmul.f32 %v844, 1.442695
    %v962 = vpow.pop %v961
    %v963 = vmul.f32 %v845, 1.442695
    %v964 = vpow.pop %v963
    %v965 = vmul.f32 %v846, 1.442695
    %v966 = vpow.pop %v965
    %v967 = vmul.f32 %v847, 1.442695
    %v968 = vpow.pop %v967
    %v969 = vmul.f32 %v848, 1.442695
    %v970 = vpow.pop %v969
    %v971 = vmul.f32 %v849, 1.442695
    %v972 = vpow.pop %v971
    %v973 = vmul.f32 %v850, 1.442695
    %v974 = vpow.pop %v973
    %v975 = vmul.f32 %v851, 1.442695
    %v976 = vpow.pop %v975
    %v977 = vmul.f32 %v852, 1.442695
    %v978 = vpow.pop %v977
    %v979 = vmul.f32 %v853, 1.442695
    %v980 = vpow.pop %v979
    %v981 = vmul.f32 %v854, 1.442695
    %v982 = vpow.pop %v981
    %v983 = vadd.f32 %v856, 1.0
    %v984 = vlog2.pop %v983
    %v985 = vmul.f32 %v984, 0.6931472
    %v986 = vmul.f32 -0.5, %v856
    %v987 = vadd.f32 %v986, 1.0
    %v988 = vmul.f32 %v987, %v856
    %v989 = vand.u32 2147483647, %v856
    %vm990 = vcmp.lt.f32.partialorder %v989, 0.0004427343
    %v991 = vsel %vm990, %v988, %v985
    %v992 = vadd.f32 %v858, 1.0
    %v993 = vlog2.pop %v992
    %v994 = vmul.f32 %v993, 0.6931472
    %v995 = vmul.f32 -0.5, %v858
    %v996 = vadd.f32 %v995, 1.0
    %v997 = vmul.f32 %v996, %v858
    %v998 = vand.u32 2147483647, %v858
    %vm999 = vcmp.lt.f32.partialorder %v998, 0.0004427343
    %v1000 = vsel %vm999, %v997, %v994
    %v1001 = vadd.f32 %v860, 1.0
    %v1002 = vlog2.pop %v1001
    %v1003 = vmul.f32 %v1002, 0.6931472
    %v1004 = vmul.f32 -0.5, %v860
    %v1005 = vadd.f32 %v1004, 1.0
    %v1006 = vmul.f32 %v1005, %v860
    %v1007 = vand.u32 2147483647, %v860
    %vm1008 = vcmp.lt.f32.partialorder %v1007, 0.0004427343
    %v1009 = vsel %vm1008, %v1006, %v1003
    %v1010 = vadd.f32 %v862, 1.0
    %v1011 = vlog2.pop %v1010
    %v1012 = vmul.f32 %v1011, 0.6931472
    %v1013 = vmul.f32 -0.5, %v862
    %v1014 = vadd.f32 %v1013, 1.0
    %v1015 = vmul.f32 %v1014, %v862
    %v1016 = vand.u32 2147483647, %v862
    %vm1017 = vcmp.lt.f32.partialorder %v1016, 0.0004427343
    %v1018 = vsel %vm1017, %v1015, %v1012
    %v1019 = vadd.f32 %v864, 1.0
    %v1020 = vlog2.pop %v1019
    %v1021 = vmul.f32 %v1020, 0.6931472
    %v1022 = vmul.f32 -0.5, %v864
    %v1023 = vadd.f32 %v1022, 1.0
    %v1024 = vmul.f32 %v1023, %v864
    %v1025 = vand.u32 2147483647, %v864
    %vm1026 = vcmp.lt.f32.partialorder %v1025, 0.0004427343
    %v1027 = vsel %vm1026, %v1024, %v1021
    %v1028 = vadd.f32 %v866, 1.0
    %v1029 = vlog2.pop %v1028
    %v1030 = vmul.f32 %v1029, 0.6931472
    %v1031 = vmul.f32 -0.5, %v866
    %v1032 = vadd.f32 %v1031, 1.0
    %v1033 = vmul.f32 %v1032, %v866
    %v1034 = vand.u32 2147483647, %v866
    %vm1035 = vcmp.lt.f32.partialorder %v1034, 0.0004427343
    %v1036 = vsel %vm1035, %v1033, %v1030
    %v1037 = vadd.f32 %v868, 1.0
    %v1038 = vlog2.pop %v1037
    %v1039 = vmul.f32 %v1038, 0.6931472
    %v1040 = vmul.f32 -0.5, %v868
    %v1041 = vadd.f32 %v1040, 1.0
    %v1042 = vmul.f32 %v1041, %v868
    %v1043 = vand.u32 2147483647, %v868
    %vm1044 = vcmp.lt.f32.partialorder %v1043, 0.0004427343
    %v1045 = vsel %vm1044, %v1042, %v1039
    %v1046 = vadd.f32 %v870, 1.0
    %v1047 = vlog2.pop %v1046
    %v1048 = vmul.f32 %v1047, 0.6931472
    %v1049 = vmul.f32 -0.5, %v870
    %v1050 = vadd.f32 %v1049, 1.0
    %v1051 = vmul.f32 %v1050, %v870
    %v1052 = vand.u32 2147483647, %v870
    %vm1053 = vcmp.lt.f32.partialorder %v1052, 0.0004427343
    %v1054 = vsel %vm1053, %v1051, %v1048
    %v1055 = vadd.f32 %v872, 1.0
    %v1056 = vlog2.pop %v1055
    %v1057 = vmul.f32 %v1056, 0.6931472
    %v1058 = vmul.f32 -0.5, %v872
    %v1059 = vadd.f32 %v1058, 1.0
    %v1060 = vmul.f32 %v1059, %v872
    %v1061 = vand.u32 2147483647, %v872
    %vm1062 = vcmp.lt.f32.partialorder %v1061, 0.0004427343
    %v1063 = vsel %vm1062, %v1060, %v1057
    %v1064 = vadd.f32 %v874, 1.0
    %v1065 = vlog2.pop %v1064
    %v1066 = vmul.f32 %v1065, 0.6931472
    %v1067 = vmul.f32 -0.5, %v874
    %v1068 = vadd.f32 %v1067, 1.0
    %v1069 = vmul.f32 %v1068, %v874
    %v1070 = vand.u32 2147483647, %v874
    %vm1071 = vcmp.lt.f32.partialorder %v1070, 0.0004427343
    %v1072 = vsel %vm1071, %v1069, %v1066
    %v1073 = vadd.f32 %v876, 1.0
    %v1074 = vlog2.pop %v1073
    %v1075 = vmul.f32 %v1074, 0.6931472
    %v1076 = vmul.f32 -0.5, %v876
    %v1077 = vadd.f32 %v1076, 1.0
    %v1078 = vmul.f32 %v1077, %v876
    %v1079 = vand.u32 2147483647, %v876
    %vm1080 = vcmp.lt.f32.partialorder %v1079, 0.0004427343
    %v1081 = vsel %vm1080, %v1078, %v1075
    %v1082 = vadd.f32 %v878, 1.0
    %v1083 = vlog2.pop %v1082
    %v1084 = vmul.f32 %v1083, 0.6931472
    %v1085 = vmul.f32 -0.5, %v878
    %v1086 = vadd.f32 %v1085, 1.0
    %v1087 = vmul.f32 %v1086, %v878
    %v1088 = vand.u32 2147483647, %v878
    %vm1089 = vcmp.lt.f32.partialorder %v1088, 0.0004427343
    %v1090 = vsel %vm1089, %v1087, %v1084
    %v1091 = vadd.f32 %v880, 1.0
    %v1092 = vlog2.pop %v1091
    %v1093 = vmul.f32 %v1092, 0.6931472
    %v1094 = vmul.f32 -0.5, %v880
    %v1095 = vadd.f32 %v1094, 1.0
    %v1096 = vmul.f32 %v1095, %v880
    %v1097 = vand.u32 2147483647, %v880
    %vm1098 = vcmp.lt.f32.partialorder %v1097, 0.0004427343
    %v1099 = vsel %vm1098, %v1096, %v1093
    %v1100 = vadd.f32 %v882, 1.0
    %v1101 = vlog2.pop %v1100
    %v1102 = vmul.f32 %v1101, 0.6931472
    %v1103 = vmul.f32 -0.5, %v882
    %v1104 = vadd.f32 %v1103, 1.0
    %v1105 = vmul.f32 %v1104, %v882
    %v1106 = vand.u32 2147483647, %v882
    %vm1107 = vcmp.lt.f32.partialorder %v1106, 0.0004427343
    %v1108 = vsel %vm1107, %v1105, %v1102
    %v1109 = vadd.f32 %v884, 1.0
    %v1110 = vlog2.pop %v1109
    %v1111 = vmul.f32 %v1110, 0.6931472
    %v1112 = vmul.f32 -0.5, %v884
    %v1113 = vadd.f32 %v1112, 1.0
    %v1114 = vmul.f32 %v1113, %v884
    %v1115 = vand.u32 2147483647, %v884
    %vm1116 = vcmp.lt.f32.partialorder %v1115, 0.0004427343
    %v1117 = vsel %vm1116, %v1114, %v1111
    %v1118 = vadd.f32 %v886, 1.0
    %v1119 = vlog2.pop %v1118
    %v1120 = vmul.f32 %v1119, 0.6931472
    %v1121 = vmul.f32 -0.5, %v886
    %v1122 = vadd.f32 %v1121, 1.0
    %v1123 = vmul.f32 %v1122, %v886
    %v1124 = vand.u32 2147483647, %v886
    %vm1125 = vcmp.lt.f32.partialorder %v1124, 0.0004427343
    %v1126 = vsel %vm1125, %v1123, %v1120
    %v1127 = vadd.f32 %v888, 1.0
    %v1128 = vlog2.pop %v1127
    %v1129 = vmul.f32 %v1128, 0.6931472
    %v1130 = vmul.f32 -0.5, %v888
    %v1131 = vadd.f32 %v1130, 1.0
    %v1132 = vmul.f32 %v1131, %v888
    %v1133 = vand.u32 2147483647, %v888
    %vm1134 = vcmp.lt.f32.partialorder %v1133, 0.0004427343
    %v1135 = vsel %vm1134, %v1132, %v1129
    %v1136 = vadd.f32 %v890, 1.0
    %v1137 = vlog2.pop %v1136
    %v1138 = vmul.f32 %v1137, 0.6931472
    %v1139 = vmul.f32 -0.5, %v890
    %v1140 = vadd.f32 %v1139, 1.0
    %v1141 = vmul.f32 %v1140, %v890
    %v1142 = vand.u32 2147483647, %v890
    %vm1143 = vcmp.lt.f32.partialorder %v1142, 0.0004427343
    %v1144 = vsel %vm1143, %v1141, %v1138
    %v1145 = vadd.f32 %v892, 1.0
    %v1146 = vlog2.pop %v1145
    %v1147 = vmul.f32 %v1146, 0.6931472
    %v1148 = vmul.f32 -0.5, %v892
    %v1149 = vadd.f32 %v1148, 1.0
    %v1150 = vmul.f32 %v1149, %v892
    %v1151 = vand.u32 2147483647, %v892
    %vm1152 = vcmp.lt.f32.partialorder %v1151, 0.0004427343
    %v1153 = vsel %vm1152, %v1150, %v1147
    %v1154 = vadd.f32 %v894, 1.0
    %v1155 = vlog2.pop %v1154
    %v1156 = vmul.f32 %v1155, 0.6931472
    %v1157 = vmul.f32 -0.5, %v894
    %v1158 = vadd.f32 %v1157, 1.0
    %v1159 = vmul.f32 %v1158, %v894
    %v1160 = vand.u32 2147483647, %v894
    %vm1161 = vcmp.lt.f32.partialorder %v1160, 0.0004427343
    %v1162 = vsel %vm1161, %v1159, %v1156
    %v1163 = vadd.f32 %v896, 1.0
    %v1164 = vlog2.pop %v1163
    %v1165 = vmul.f32 %v1164, 0.6931472
    %v1166 = vmul.f32 -0.5, %v896
    %v1167 = vadd.f32 %v1166, 1.0
    %v1168 = vmul.f32 %v1167, %v896
    %v1169 = vand.u32 2147483647, %v896
    %vm1170 = vcmp.lt.f32.partialorder %v1169, 0.0004427343
    %v1171 = vsel %vm1170, %v1168, %v1165
    %v1172 = vadd.f32 %v898, 1.0
    %v1173 = vlog2.pop %v1172
    %v1174 = vmul.f32 %v1173, 0.6931472
    %v1175 = vmul.f32 -0.5, %v898
    %v1176 = vadd.f32 %v1175, 1.0
    %v1177 = vmul.f32 %v1176, %v898
    %v1178 = vand.u32 2147483647, %v898
    %vm1179 = vcmp.lt.f32.partialorder %v1178, 0.0004427343
    %v1180 = vsel %vm1179, %v1177, %v1174
    %v1181 = vadd.f32 %v900, 1.0
    %v1182 = vlog2.pop %v1181
    %v1183 = vmul.f32 %v1182, 0.6931472
    %v1184 = vmul.f32 -0.5, %v900
    %v1185 = vadd.f32 %v1184, 1.0
    %v1186 = vmul.f32 %v1185, %v900
    %v1187 = vand.u32 2147483647, %v900
    %vm1188 = vcmp.lt.f32.partialorder %v1187, 0.0004427343
    %v1189 = vsel %vm1188, %v1186, %v1183
    %v1190 = vadd.f32 %v902, 1.0
    %v1191 = vlog2.pop %v1190
    %v1192 = vmul.f32 %v1191, 0.6931472
    %v1193 = vmul.f32 -0.5, %v902
    %v1194 = vadd.f32 %v1193, 1.0
    %v1195 = vmul.f32 %v1194, %v902
    %v1196 = vand.u32 2147483647, %v902
    %vm1197 = vcmp.lt.f32.partialorder %v1196, 0.0004427343
    %v1198 = vsel %vm1197, %v1195, %v1192
    %v1199 = vadd.f32 %v904, 1.0
    %v1200 = vlog2.pop %v1199
    %v1201 = vmul.f32 %v1200, 0.6931472
    %v1202 = vmul.f32 -0.5, %v904
    %v1203 = vadd.f32 %v1202, 1.0
    %v1204 = vmul.f32 %v1203, %v904
    %v1205 = vand.u32 2147483647, %v904
    %vm1206 = vcmp.lt.f32.partialorder %v1205, 0.0004427343
    %v1207 = vsel %vm1206, %v1204, %v1201
    %v1208 = vadd.f32 %v906, 1.0
    %v1209 = vlog2.pop %v1208
    %v1210 = vmul.f32 %v1209, 0.6931472
    %v1211 = vmul.f32 -0.5, %v906
    %v1212 = vadd.f32 %v1211, 1.0
    %v1213 = vmul.f32 %v1212, %v906
    %v1214 = vand.u32 2147483647, %v906
    %vm1215 = vcmp.lt.f32.partialorder %v1214, 0.0004427343
    %v1216 = vsel %vm1215, %v1213, %v1210
    %v1217 = vadd.f32 %v908, 1.0
    %v1218 = vlog2.pop %v1217
    %v1219 = vmul.f32 %v1218, 0.6931472
    %v1220 = vmul.f32 -0.5, %v908
    %v1221 = vadd.f32 %v1220, 1.0
    %v1222 = vmul.f32 %v1221, %v908
    %v1223 = vand.u32 2147483647, %v908
    %vm1224 = vcmp.lt.f32.partialorder %v1223, 0.0004427343
    %v1225 = vsel %vm1224, %v1222, %v1219
    %v1226 = vadd.f32 %v910, 1.0
    %v1227 = vlog2.pop %v1226
    %v1228 = vmul.f32 %v1227, 0.6931472
    %v1229 = vmul.f32 -0.5, %v910
    %v1230 = vadd.f32 %v1229, 1.0
    %v1231 = vmul.f32 %v1230, %v910
    %v1232 = vand.u32 2147483647, %v910
    %vm1233 = vcmp.lt.f32.partialorder %v1232, 0.0004427343
    %v1234 = vsel %vm1233, %v1231, %v1228
    %v1235 = vadd.f32 %v912, 1.0
    %v1236 = vlog2.pop %v1235
    %v1237 = vmul.f32 %v1236, 0.6931472
    %v1238 = vmul.f32 -0.5, %v912
    %v1239 = vadd.f32 %v1238, 1.0
    %v1240 = vmul.f32 %v1239, %v912
    %v1241 = vand.u32 2147483647, %v912
    %vm1242 = vcmp.lt.f32.partialorder %v1241, 0.0004427343
    %v1243 = vsel %vm1242, %v1240, %v1237
    %v1244 = vadd.f32 %v914, 1.0
    %v1245 = vlog2.pop %v1244
    %v1246 = vmul.f32 %v1245, 0.6931472
    %v1247 = vmul.f32 -0.5, %v914
    %v1248 = vadd.f32 %v1247, 1.0
    %v1249 = vmul.f32 %v1248, %v914
    %v1250 = vand.u32 2147483647, %v914
    %vm1251 = vcmp.lt.f32.partialorder %v1250, 0.0004427343
    %v1252 = vsel %vm1251, %v1249, %v1246
    %v1253 = vadd.f32 %v916, 1.0
    %v1254 = vlog2.pop %v1253
    %v1255 = vmul.f32 %v1254, 0.6931472
    %v1256 = vmul.f32 -0.5, %v916
    %v1257 = vadd.f32 %v1256, 1.0
    %v1258 = vmul.f32 %v1257, %v916
    %v1259 = vand.u32 2147483647, %v916
    %vm1260 = vcmp.lt.f32.partialorder %v1259, 0.0004427343
    %v1261 = vsel %vm1260, %v1258, %v1255
    %v1262 = vadd.f32 %v918, 1.0
    %v1263 = vlog2.pop %v1262
    %v1264 = vmul.f32 %v1263, 0.6931472
    %v1265 = vmul.f32 -0.5, %v918
    %v1266 = vadd.f32 %v1265, 1.0
    %v1267 = vmul.f32 %v1266, %v918
    %v1268 = vand.u32 2147483647, %v918
    %vm1269 = vcmp.lt.f32.partialorder %v1268, 0.0004427343
    %v1270 = vsel %vm1269, %v1267, %v1264
    %v1271 = vadd.f32 %v920, 1.0
    %v1272 = vlog2.pop %v1271
    %v1273 = vmul.f32 %v1272, 0.6931472
    %v1274 = vmul.f32 -0.5, %v920
    %v1275 = vadd.f32 %v1274, 1.0
    %v1276 = vmul.f32 %v1275, %v920
    %v1277 = vand.u32 2147483647, %v920
    %vm1278 = vcmp.lt.f32.partialorder %v1277, 0.0004427343
    %v1279 = vsel %vm1278, %v1276, %v1273
    %v1280 = vadd.f32 %v922, 1.0
    %v1281 = vlog2.pop %v1280
    %v1282 = vmul.f32 %v1281, 0.6931472
    %v1283 = vmul.f32 -0.5, %v922
    %v1284 = vadd.f32 %v1283, 1.0
    %v1285 = vmul.f32 %v1284, %v922
    %v1286 = vand.u32 2147483647, %v922
    %vm1287 = vcmp.lt.f32.partialorder %v1286, 0.0004427343
    %v1288 = vsel %vm1287, %v1285, %v1282
    %v1289 = vadd.f32 %v924, 1.0
    %v1290 = vlog2.pop %v1289
    %v1291 = vmul.f32 %v1290, 0.6931472
    %v1292 = vmul.f32 -0.5, %v924
    %v1293 = vadd.f32 %v1292, 1.0
    %v1294 = vmul.f32 %v1293, %v924
    %v1295 = vand.u32 2147483647, %v924
    %vm1296 = vcmp.lt.f32.partialorder %v1295, 0.0004427343
    %v1297 = vsel %vm1296, %v1294, %v1291
    %v1298 = vadd.f32 %v926, 1.0
    %v1299 = vlog2.pop %v1298
    %v1300 = vmul.f32 %v1299, 0.6931472
    %v1301 = vmul.f32 -0.5, %v926
    %v1302 = vadd.f32 %v1301, 1.0
    %v1303 = vmul.f32 %v1302, %v926
    %v1304 = vand.u32 2147483647, %v926
    %vm1305 = vcmp.lt.f32.partialorder %v1304, 0.0004427343
    %v1306 = vsel %vm1305, %v1303, %v1300
    %v1307 = vadd.f32 %v928, 1.0
    %v1308 = vlog2.pop %v1307
    %v1309 = vmul.f32 %v1308, 0.6931472
    %v1310 = vmul.f32 -0.5, %v928
    %v1311 = vadd.f32 %v1310, 1.0
    %v1312 = vmul.f32 %v1311, %v928
    %v1313 = vand.u32 2147483647, %v928
    %vm1314 = vcmp.lt.f32.partialorder %v1313, 0.0004427343
    %v1315 = vsel %vm1314, %v1312, %v1309
    %v1316 = vadd.f32 %v930, 1.0
    %v1317 = vlog2.pop %v1316
    %v1318 = vmul.f32 %v1317, 0.6931472
    %v1319 = vmul.f32 -0.5, %v930
    %v1320 = vadd.f32 %v1319, 1.0
    %v1321 = vmul.f32 %v1320, %v930
    %v1322 = vand.u32 2147483647, %v930
    %vm1323 = vcmp.lt.f32.partialorder %v1322, 0.0004427343
    %v1324 = vsel %vm1323, %v1321, %v1318
    %v1325 = vadd.f32 %v932, 1.0
    %v1326 = vlog2.pop %v1325
    %v1327 = vmul.f32 %v1326, 0.6931472
    %v1328 = vmul.f32 -0.5, %v932
    %v1329 = vadd.f32 %v1328, 1.0
    %v1330 = vmul.f32 %v1329, %v932
    %v1331 = vand.u32 2147483647, %v932
    %vm1332 = vcmp.lt.f32.partialorder %v1331, 0.0004427343
    %v1333 = vsel %vm1332, %v1330, %v1327
    %v1334 = vadd.f32 %v934, 1.0
    %v1335 = vlog2.pop %v1334
    %v1336 = vmul.f32 %v1335, 0.6931472
    %v1337 = vmul.f32 -0.5, %v934
    %v1338 = vadd.f32 %v1337, 1.0
    %v1339 = vmul.f32 %v1338, %v934
    %v1340 = vand.u32 2147483647, %v934
    %vm1341 = vcmp.lt.f32.partialorder %v1340, 0.0004427343
    %v1342 = vsel %vm1341, %v1339, %v1336
    %v1343 = vadd.f32 %v936, 1.0
    %v1344 = vlog2.pop %v1343
    %v1345 = vmul.f32 %v1344, 0.6931472
    %v1346 = vmul.f32 -0.5, %v936
    %v1347 = vadd.f32 %v1346, 1.0
    %v1348 = vmul.f32 %v1347, %v936
    %v1349 = vand.u32 2147483647, %v936
    %vm1350 = vcmp.lt.f32.partialorder %v1349, 0.0004427343
    %v1351 = vsel %vm1350, %v1348, %v1345
    %v1352 = vadd.f32 %v938, 1.0
    %v1353 = vlog2.pop %v1352
    %v1354 = vmul.f32 %v1353, 0.6931472
    %v1355 = vmul.f32 -0.5, %v938
    %v1356 = vadd.f32 %v1355, 1.0
    %v1357 = vmul.f32 %v1356, %v938
    %v1358 = vand.u32 2147483647, %v938
    %vm1359 = vcmp.lt.f32.partialorder %v1358, 0.0004427343
    %v1360 = vsel %vm1359, %v1357, %v1354
    %v1361 = vadd.f32 %v940, 1.0
    %v1362 = vlog2.pop %v1361
    %v1363 = vmul.f32 %v1362, 0.6931472
    %v1364 = vmul.f32 -0.5, %v940
    %v1365 = vadd.f32 %v1364, 1.0
    %v1366 = vmul.f32 %v1365, %v940
    %v1367 = vand.u32 2147483647, %v940
    %vm1368 = vcmp.lt.f32.partialorder %v1367, 0.0004427343
    %v1369 = vsel %vm1368, %v1366, %v1363
    %v1370 = vadd.f32 %v942, 1.0
    %v1371 = vlog2.pop %v1370
    %v1372 = vmul.f32 %v1371, 0.6931472
    %v1373 = vmul.f32 -0.5, %v942
    %v1374 = vadd.f32 %v1373, 1.0
    %v1375 = vmul.f32 %v1374, %v942
    %v1376 = vand.u32 2147483647, %v942
    %vm1377 = vcmp.lt.f32.partialorder %v1376, 0.0004427343
    %v1378 = vsel %vm1377, %v1375, %v1372
    %v1379 = vadd.f32 %v944, 1.0
    %v1380 = vlog2.pop %v1379
    %v1381 = vmul.f32 %v1380, 0.6931472
    %v1382 = vmul.f32 -0.5, %v944
    %v1383 = vadd.f32 %v1382, 1.0
    %v1384 = vmul.f32 %v1383, %v944
    %v1385 = vand.u32 2147483647, %v944
    %vm1386 = vcmp.lt.f32.partialorder %v1385, 0.0004427343
    %v1387 = vsel %vm1386, %v1384, %v1381
    %v1388 = vadd.f32 %v946, 1.0
    %v1389 = vlog2.pop %v1388
    %v1390 = vmul.f32 %v1389, 0.6931472
    %v1391 = vmul.f32 -0.5, %v946
    %v1392 = vadd.f32 %v1391, 1.0
    %v1393 = vmul.f32 %v1392, %v946
    %v1394 = vand.u32 2147483647, %v946
    %vm1395 = vcmp.lt.f32.partialorder %v1394, 0.0004427343
    %v1396 = vsel %vm1395, %v1393, %v1390
    %v1397 = vadd.f32 %v948, 1.0
    %v1398 = vlog2.pop %v1397
    %v1399 = vmul.f32 %v1398, 0.6931472
    %v1400 = vmul.f32 -0.5, %v948
    %v1401 = vadd.f32 %v1400, 1.0
    %v1402 = vmul.f32 %v1401, %v948
    %v1403 = vand.u32 2147483647, %v948
    %vm1404 = vcmp.lt.f32.partialorder %v1403, 0.0004427343
    %v1405 = vsel %vm1404, %v1402, %v1399
    %v1406 = vadd.f32 %v950, 1.0
    %v1407 = vlog2.pop %v1406
    %v1408 = vmul.f32 %v1407, 0.6931472
    %v1409 = vmul.f32 -0.5, %v950
    %v1410 = vadd.f32 %v1409, 1.0
    %v1411 = vmul.f32 %v1410, %v950
    %v1412 = vand.u32 2147483647, %v950
    %vm1413 = vcmp.lt.f32.partialorder %v1412, 0.0004427343
    %v1414 = vsel %vm1413, %v1411, %v1408
    %v1415 = vadd.f32 %v952, 1.0
    %v1416 = vlog2.pop %v1415
    %v1417 = vmul.f32 %v1416, 0.6931472
    %v1418 = vmul.f32 -0.5, %v952
    %v1419 = vadd.f32 %v1418, 1.0
    %v1420 = vmul.f32 %v1419, %v952
    %v1421 = vand.u32 2147483647, %v952
    %vm1422 = vcmp.lt.f32.partialorder %v1421, 0.0004427343
    %v1423 = vsel %vm1422, %v1420, %v1417
    %v1424 = vadd.f32 %v954, 1.0
    %v1425 = vlog2.pop %v1424
    %v1426 = vmul.f32 %v1425, 0.6931472
    %v1427 = vmul.f32 -0.5, %v954
    %v1428 = vadd.f32 %v1427, 1.0
    %v1429 = vmul.f32 %v1428, %v954
    %v1430 = vand.u32 2147483647, %v954
    %vm1431 = vcmp.lt.f32.partialorder %v1430, 0.0004427343
    %v1432 = vsel %vm1431, %v1429, %v1426
    %v1433 = vadd.f32 %v956, 1.0
    %v1434 = vlog2.pop %v1433
    %v1435 = vmul.f32 %v1434, 0.6931472
    %v1436 = vmul.f32 -0.5, %v956
    %v1437 = vadd.f32 %v1436, 1.0
    %v1438 = vmul.f32 %v1437, %v956
    %v1439 = vand.u32 2147483647, %v956
    %vm1440 = vcmp.lt.f32.partialorder %v1439, 0.0004427343
    %v1441 = vsel %vm1440, %v1438, %v1435
    %v1442 = vadd.f32 %v958, 1.0
    %v1443 = vlog2.pop %v1442
    %v1444 = vmul.f32 %v1443, 0.6931472
    %v1445 = vmul.f32 -0.5, %v958
    %v1446 = vadd.f32 %v1445, 1.0
    %v1447 = vmul.f32 %v1446, %v958
    %v1448 = vand.u32 2147483647, %v958
    %vm1449 = vcmp.lt.f32.partialorder %v1448, 0.0004427343
    %v1450 = vsel %vm1449, %v1447, %v1444
    %v1451 = vadd.f32 %v960, 1.0
    %v1452 = vlog2.pop %v1451
    %v1453 = vmul.f32 %v1452, 0.6931472
    %v1454 = vmul.f32 -0.5, %v960
    %v1455 = vadd.f32 %v1454, 1.0
    %v1456 = vmul.f32 %v1455, %v960
    %v1457 = vand.u32 2147483647, %v960
    %vm1458 = vcmp.lt.f32.partialorder %v1457, 0.0004427343
    %v1459 = vsel %vm1458, %v1456, %v1453
    %v1460 = vadd.f32 %v962, 1.0
    %v1461 = vlog2.pop %v1460
    %v1462 = vmul.f32 %v1461, 0.6931472
    %v1463 = vmul.f32 -0.5, %v962
    %v1464 = vadd.f32 %v1463, 1.0
    %v1465 = vmul.f32 %v1464, %v962
    %v1466 = vand.u32 2147483647, %v962
    %vm1467 = vcmp.lt.f32.partialorder %v1466, 0.0004427343
    %v1468 = vsel %vm1467, %v1465, %v1462
    %v1469 = vadd.f32 %v964, 1.0
    %v1470 = vlog2.pop %v1469
    %v1471 = vmul.f32 %v1470, 0.6931472
    %v1472 = vmul.f32 -0.5, %v964
    %v1473 = vadd.f32 %v1472, 1.0
    %v1474 = vmul.f32 %v1473, %v964
    %v1475 = vand.u32 2147483647, %v964
    %vm1476 = vcmp.lt.f32.partialorder %v1475, 0.0004427343
    %v1477 = vsel %vm1476, %v1474, %v1471
    %v1478 = vadd.f32 %v966, 1.0
    %v1479 = vlog2.pop %v1478
    %v1480 = vmul.f32 %v1479, 0.6931472
    %v1481 = vmul.f32 -0.5, %v966
    %v1482 = vadd.f32 %v1481, 1.0
    %v1483 = vmul.f32 %v1482, %v966
    %v1484 = vand.u32 2147483647, %v966
    %vm1485 = vcmp.lt.f32.partialorder %v1484, 0.0004427343
    %v1486 = vsel %vm1485, %v1483, %v1480
    %v1487 = vadd.f32 %v968, 1.0
    %v1488 = vlog2.pop %v1487
    %v1489 = vmul.f32 %v1488, 0.6931472
    %v1490 = vmul.f32 -0.5, %v968
    %v1491 = vadd.f32 %v1490, 1.0
    %v1492 = vmul.f32 %v1491, %v968
    %v1493 = vand.u32 2147483647, %v968
    %vm1494 = vcmp.lt.f32.partialorder %v1493, 0.0004427343
    %v1495 = vsel %vm1494, %v1492, %v1489
    %v1496 = vadd.f32 %v970, 1.0
    %v1497 = vlog2.pop %v1496
    %v1498 = vmul.f32 %v1497, 0.6931472
    %v1499 = vmul.f32 -0.5, %v970
    %v1500 = vadd.f32 %v1499, 1.0
    %v1501 = vmul.f32 %v1500, %v970
    %v1502 = vand.u32 2147483647, %v970
    %vm1503 = vcmp.lt.f32.partialorder %v1502, 0.0004427343
    %v1504 = vsel %vm1503, %v1501, %v1498
    %v1505 = vadd.f32 %v972, 1.0
    %v1506 = vlog2.pop %v1505
    %v1507 = vmul.f32 %v1506, 0.6931472
    %v1508 = vmul.f32 -0.5, %v972
    %v1509 = vadd.f32 %v1508, 1.0
    %v1510 = vmul.f32 %v1509, %v972
    %v1511 = vand.u32 2147483647, %v972
    %vm1512 = vcmp.lt.f32.partialorder %v1511, 0.0004427343
    %v1513 = vsel %vm1512, %v1510, %v1507
    %v1514 = vadd.f32 %v974, 1.0
    %v1515 = vlog2.pop %v1514
    %v1516 = vmul.f32 %v1515, 0.6931472
    %v1517 = vmul.f32 -0.5, %v974
    %v1518 = vadd.f32 %v1517, 1.0
    %v1519 = vmul.f32 %v1518, %v974
    %v1520 = vand.u32 2147483647, %v974
    %vm1521 = vcmp.lt.f32.partialorder %v1520, 0.0004427343
    %v1522 = vsel %vm1521, %v1519, %v1516
    %v1523 = vadd.f32 %v976, 1.0
    %v1524 = vlog2.pop %v1523
    %v1525 = vmul.f32 %v1524, 0.6931472
    %v1526 = vmul.f32 -0.5, %v976
    %v1527 = vadd.f32 %v1526, 1.0
    %v1528 = vmul.f32 %v1527, %v976
    %v1529 = vand.u32 2147483647, %v976
    %vm1530 = vcmp.lt.f32.partialorder %v1529, 0.0004427343
    %v1531 = vsel %vm1530, %v1528, %v1525
    %v1532 = vadd.f32 %v978, 1.0
    %v1533 = vlog2.pop %v1532
    %v1534 = vmul.f32 %v1533, 0.6931472
    %v1535 = vmul.f32 -0.5, %v978
    %v1536 = vadd.f32 %v1535, 1.0
    %v1537 = vmul.f32 %v1536, %v978
    %v1538 = vand.u32 2147483647, %v978
    %vm1539 = vcmp.lt.f32.partialorder %v1538, 0.0004427343
    %v1540 = vsel %vm1539, %v1537, %v1534
    %v1541 = vadd.f32 %v980, 1.0
    %v1542 = vlog2.pop %v1541
    %v1543 = vmul.f32 %v1542, 0.6931472
    %v1544 = vmul.f32 -0.5, %v980
    %v1545 = vadd.f32 %v1544, 1.0
    %v1546 = vmul.f32 %v1545, %v980
    %v1547 = vand.u32 2147483647, %v980
    %vm1548 = vcmp.lt.f32.partialorder %v1547, 0.0004427343
    %v1549 = vsel %vm1548, %v1546, %v1543
    %v1550 = vadd.f32 %v982, 1.0
    %v1551 = vlog2.pop %v1550
    %v1552 = vmul.f32 %v1551, 0.6931472
    %v1553 = vmul.f32 -0.5, %v982
    %v1554 = vadd.f32 %v1553, 1.0
    %v1555 = vmul.f32 %v1554, %v982
    %v1556 = vand.u32 2147483647, %v982
    %vm1557 = vcmp.lt.f32.partialorder %v1556, 0.0004427343
    %v1558 = vsel %vm1557, %v1555, %v1552
    %v1559 = vadd.f32 %v663, %v991
    %v1560 = vadd.f32 %v664, %v1000
    %v1561 = vadd.f32 %v665, %v1009
    %v1562 = vadd.f32 %v666, %v1018
    %v1563 = vadd.f32 %v667, %v1027
    %v1564 = vadd.f32 %v668, %v1036
    %v1565 = vadd.f32 %v669, %v1045
    %v1566 = vadd.f32 %v670, %v1054
    %v1567 = vadd.f32 %v671, %v1063
    %v1568 = vadd.f32 %v672, %v1072
    %v1569 = vadd.f32 %v673, %v1081
    %v1570 = vadd.f32 %v674, %v1090
    %v1571 = vadd.f32 %v675, %v1099
    %v1572 = vadd.f32 %v676, %v1108
    %v1573 = vadd.f32 %v677, %v1117
    %v1574 = vadd.f32 %v678, %v1126
    %v1575 = vadd.f32 %v679, %v1135
    %v1576 = vadd.f32 %v680, %v1144
    %v1577 = vadd.f32 %v681, %v1153
    %v1578 = vadd.f32 %v682, %v1162
    %v1579 = vadd.f32 %v683, %v1171
    %v1580 = vadd.f32 %v684, %v1180
    %v1581 = vadd.f32 %v685, %v1189
    %v1582 = vadd.f32 %v686, %v1198
    %v1583 = vadd.f32 %v687, %v1207
    %v1584 = vadd.f32 %v688, %v1216
    %v1585 = vadd.f32 %v689, %v1225
    %v1586 = vadd.f32 %v690, %v1234
    %v1587 = vadd.f32 %v691, %v1243
    %v1588 = vadd.f32 %v692, %v1252
    %v1589 = vadd.f32 %v693, %v1261
    %v1590 = vadd.f32 %v694, %v1270
    %v1591 = vadd.f32 %v695, %v1279
    %v1592 = vadd.f32 %v696, %v1288
    %v1593 = vadd.f32 %v697, %v1297
    %v1594 = vadd.f32 %v698, %v1306
    %v1595 = vadd.f32 %v699, %v1315
    %v1596 = vadd.f32 %v700, %v1324
    %v1597 = vadd.f32 %v701, %v1333
    %v1598 = vadd.f32 %v702, %v1342
    %v1599 = vadd.f32 %v703, %v1351
    %v1600 = vadd.f32 %v704, %v1360
    %v1601 = vadd.f32 %v705, %v1369
    %v1602 = vadd.f32 %v706, %v1378
    %v1603 = vadd.f32 %v707, %v1387
    %v1604 = vadd.f32 %v708, %v1396
    %v1605 = vadd.f32 %v709, %v1405
    %v1606 = vadd.f32 %v710, %v1414
    %v1607 = vadd.f32 %v711, %v1423
    %v1608 = vadd.f32 %v712, %v1432
    %v1609 = vadd.f32 %v713, %v1441
    %v1610 = vadd.f32 %v714, %v1450
    %v1611 = vadd.f32 %v715, %v1459
    %v1612 = vadd.f32 %v716, %v1468
    %v1613 = vadd.f32 %v717, %v1477
    %v1614 = vadd.f32 %v718, %v1486
    %v1615 = vadd.f32 %v719, %v1495
    %v1616 = vadd.f32 %v720, %v1504
    %v1617 = vadd.f32 %v721, %v1513
    %v1618 = vadd.f32 %v722, %v1522
    %v1619 = vadd.f32 %v723, %v1531
    %v1620 = vadd.f32 %v724, %v1540
    %v1621 = vadd.f32 %v725, %v1549
    %v1622 = vadd.f32 %v726, %v1558
    %v1623 = vsub.f32 %v1559, 0.6931472
    %v1624 = vsub.f32 %v1560, 0.6931472
    %v1625 = vsub.f32 %v1561, 0.6931472
    %v1626 = vsub.f32 %v1562, 0.6931472
    %v1627 = vsub.f32 %v1563, 0.6931472
    %v1628 = vsub.f32 %v1564, 0.6931472
    %v1629 = vsub.f32 %v1565, 0.6931472
    %v1630 = vsub.f32 %v1566, 0.6931472
    %v1631 = vsub.f32 %v1567, 0.6931472
    %v1632 = vsub.f32 %v1568, 0.6931472
    %v1633 = vsub.f32 %v1569, 0.6931472
    %v1634 = vsub.f32 %v1570, 0.6931472
    %v1635 = vsub.f32 %v1571, 0.6931472
    %v1636 = vsub.f32 %v1572, 0.6931472
    %v1637 = vsub.f32 %v1573, 0.6931472
    %v1638 = vsub.f32 %v1574, 0.6931472
    %v1639 = vsub.f32 %v1575, 0.6931472
    %v1640 = vsub.f32 %v1576, 0.6931472
    %v1641 = vsub.f32 %v1577, 0.6931472
    %v1642 = vsub.f32 %v1578, 0.6931472
    %v1643 = vsub.f32 %v1579, 0.6931472
    %v1644 = vsub.f32 %v1580, 0.6931472
    %v1645 = vsub.f32 %v1581, 0.6931472
    %v1646 = vsub.f32 %v1582, 0.6931472
    %v1647 = vsub.f32 %v1583, 0.6931472
    %v1648 = vsub.f32 %v1584, 0.6931472
    %v1649 = vsub.f32 %v1585, 0.6931472
    %v1650 = vsub.f32 %v1586, 0.6931472
    %v1651 = vsub.f32 %v1587, 0.6931472
    %v1652 = vsub.f32 %v1588, 0.6931472
    %v1653 = vsub.f32 %v1589, 0.6931472
    %v1654 = vsub.f32 %v1590, 0.6931472
    %v1655 = vsub.f32 %v1591, 0.6931472
    %v1656 = vsub.f32 %v1592, 0.6931472
    %v1657 = vsub.f32 %v1593, 0.6931472
    %v1658 = vsub.f32 %v1594, 0.6931472
    %v1659 = vsub.f32 %v1595, 0.6931472
    %v1660 = vsub.f32 %v1596, 0.6931472
    %v1661 = vsub.f32 %v1597, 0.6931472
    %v1662 = vsub.f32 %v1598, 0.6931472
    %v1663 = vsub.f32 %v1599, 0.6931472
    %v1664 = vsub.f32 %v1600, 0.6931472
    %v1665 = vsub.f32 %v1601, 0.6931472
    %v1666 = vsub.f32 %v1602, 0.6931472
    %v1667 = vsub.f32 %v1603, 0.6931472
    %v1668 = vsub.f32 %v1604, 0.6931472
    %v1669 = vsub.f32 %v1605, 0.6931472
    %v1670 = vsub.f32 %v1606, 0.6931472
    %v1671 = vsub.f32 %v1607, 0.6931472
    %v1672 = vsub.f32 %v1608, 0.6931472
    %v1673 = vsub.f32 %v1609, 0.6931472
    %v1674 = vsub.f32 %v1610, 0.6931472
    %v1675 = vsub.f32 %v1611, 0.6931472
    %v1676 = vsub.f32 %v1612, 0.6931472
    %v1677 = vsub.f32 %v1613, 0.6931472
    %v1678 = vsub.f32 %v1614, 0.6931472
    %v1679 = vsub.f32 %v1615, 0.6931472
    %v1680 = vsub.f32 %v1616, 0.6931472
    %v1681 = vsub.f32 %v1617, 0.6931472
    %v1682 = vsub.f32 %v1618, 0.6931472
    %v1683 = vsub.f32 %v1619, 0.6931472
    %v1684 = vsub.f32 %v1620, 0.6931472
    %v1685 = vsub.f32 %v1621, 0.6931472
    %v1686 = vsub.f32 %v1622, 0.6931472
    %v1687 = vmul.f32 %v1623, 2.0
    %v1688 = vmul.f32 %v1624, 2.0
    %v1689 = vmul.f32 %v1625, 2.0
    %v1690 = vmul.f32 %v1626, 2.0
    %v1691 = vmul.f32 %v1627, 2.0
    %v1692 = vmul.f32 %v1628, 2.0
    %v1693 = vmul.f32 %v1629, 2.0
    %v1694 = vmul.f32 %v1630, 2.0
    %v1695 = vmul.f32 %v1631, 2.0
    %v1696 = vmul.f32 %v1632, 2.0
    %v1697 = vmul.f32 %v1633, 2.0
    %v1698 = vmul.f32 %v1634, 2.0
    %v1699 = vmul.f32 %v1635, 2.0
    %v1700 = vmul.f32 %v1636, 2.0
    %v1701 = vmul.f32 %v1637, 2.0
    %v1702 = vmul.f32 %v1638, 2.0
    %v1703 = vmul.f32 %v1639, 2.0
    %v1704 = vmul.f32 %v1640, 2.0
    %v1705 = vmul.f32 %v1641, 2.0
    %v1706 = vmul.f32 %v1642, 2.0
    %v1707 = vmul.f32 %v1643, 2.0
    %v1708 = vmul.f32 %v1644, 2.0
    %v1709 = vmul.f32 %v1645, 2.0
    %v1710 = vmul.f32 %v1646, 2.0
    %v1711 = vmul.f32 %v1647, 2.0
    %v1712 = vmul.f32 %v1648, 2.0
    %v1713 = vmul.f32 %v1649, 2.0
    %v1714 = vmul.f32 %v1650, 2.0
    %v1715 = vmul.f32 %v1651, 2.0
    %v1716 = vmul.f32 %v1652, 2.0
    %v1717 = vmul.f32 %v1653, 2.0
    %v1718 = vmul.f32 %v1654, 2.0
    %v1719 = vmul.f32 %v1655, 2.0
    %v1720 = vmul.f32 %v1656, 2.0
    %v1721 = vmul.f32 %v1657, 2.0
    %v1722 = vmul.f32 %v1658, 2.0
    %v1723 = vmul.f32 %v1659, 2.0
    %v1724 = vmul.f32 %v1660, 2.0
    %v1725 = vmul.f32 %v1661, 2.0
    %v1726 = vmul.f32 %v1662, 2.0
    %v1727 = vmul.f32 %v1663, 2.0
    %v1728 = vmul.f32 %v1664, 2.0
    %v1729 = vmul.f32 %v1665, 2.0
    %v1730 = vmul.f32 %v1666, 2.0
    %v1731 = vmul.f32 %v1667, 2.0
    %v1732 = vmul.f32 %v1668, 2.0
    %v1733 = vmul.f32 %v1669, 2.0
    %v1734 = vmul.f32 %v1670, 2.0
    %v1735 = vmul.f32 %v1671, 2.0
    %v1736 = vmul.f32 %v1672, 2.0
    %v1737 = vmul.f32 %v1673, 2.0
    %v1738 = vmul.f32 %v1674, 2.0
    %v1739 = vmul.f32 %v1675, 2.0
    %v1740 = vmul.f32 %v1676, 2.0
    %v1741 = vmul.f32 %v1677, 2.0
    %v1742 = vmul.f32 %v1678, 2.0
    %v1743 = vmul.f32 %v1679, 2.0
    %v1744 = vmul.f32 %v1680, 2.0
    %v1745 = vmul.f32 %v1681, 2.0
    %v1746 = vmul.f32 %v1682, 2.0
    %v1747 = vmul.f32 %v1683, 2.0
    %v1748 = vmul.f32 %v1684, 2.0
    %v1749 = vmul.f32 %v1685, 2.0
    %v1750 = vmul.f32 %v1686, 2.0
    %v1751 = vld [vmem:[%s1 + $0x8] sm:$0xff]
    %v1752 = vld [vmem:[%s1 + $0x10] sm:$0xff]
    %v1753 = vld [vmem:[%s1 + $0x18] sm:$0xff]
    %v1754 = vld [vmem:[%s1 + $0x20] sm:$0xff]
    %v1755 = vld [vmem:[%s1 + $0x28] sm:$0xff]
    %v1756 = vld [vmem:[%s1 + $0x30] sm:$0xff]
    %v1757 = vld [vmem:[%s1 + $0x38] sm:$0xff]
    %v1758 = vld [vmem:[%s1 + $0x40] sm:$0xff]
    %v1759 = vld [vmem:[%s1 + $0x48] sm:$0xff]
    %v1760 = vld [vmem:[%s1 + $0x50] sm:$0xff]
    %v1761 = vld [vmem:[%s1 + $0x58] sm:$0xff]
    %v1762 = vld [vmem:[%s1 + $0x60] sm:$0xff]
    %v1763 = vld [vmem:[%s1 + $0x68] sm:$0xff]
    %v1764 = vld [vmem:[%s1 + $0x70] sm:$0xff]
    %v1765 = vld [vmem:[%s1 + $0x78] sm:$0xff]
    %v1766 = vld [vmem:[%s1 + $0x80] sm:$0xff]
    %v1767 = vld [vmem:[%s2 + $0x1] sm:$0x1]
    %v1768 = vlaneseq
    %v1769 = vshrl.u32 %v1768, 7
    %v1770 = vsub.s32 0, %v1769
    %v1771 = vrot.slane %v1767, %v1770
    %1772 = vmatprep.subr.mxu0 0.0
    %1773 = vmatpush1.msra.mxu0 %v1766
    %1774 = vmatprep.subr.mxu0 0.0
    %1775 = vmatpush1.msra.mxu0 %v1765
    %1776 = vmatprep.subr.mxu0 0.0
    %1777 = vmatpush1.msra.mxu0 %v1764
    %1778 = vmatprep.subr.mxu0 0.0
    %1779 = vmatpush1.msra.mxu0 %v1763
    %1780 = vmatprep.subr.mxu0 0.0
    %1781 = vmatpush1.msra.mxu0 %v1762
    %1782 = vmatprep.subr.mxu0 0.0
    %1783 = vmatpush1.msra.mxu0 %v1761
    %1784 = vmatprep.subr.mxu0 0.0
    %1785 = vmatpush1.msra.mxu0 %v1760
    %1786 = vmatprep.subr.mxu0 0.0
    %1787 = vmatpush1.msra.mxu0 %v1759
    %1788 = vmatprep.subr.mxu0 0.0
    %1789 = vmatpush1.msra.mxu0 %v1758
    %1790 = vmatprep.subr.mxu0 0.0
    %1791 = vmatpush1.msra.mxu0 %v1757
    %1792 = vmatprep.subr.mxu0 0.0
    %1793 = vmatpush1.msra.mxu0 %v1756
    %1794 = vmatprep.subr.mxu0 0.0
    %1795 = vmatpush1.msra.mxu0 %v1755
    %1796 = vmatprep.subr.mxu0 0.0
    %1797 = vmatpush1.msra.mxu0 %v1754
    %1798 = vmatprep.subr.mxu0 0.0
    %1799 = vmatpush1.msra.mxu0 %v1753
    %1800 = vmatprep.subr.mxu0 0.0
    %1801 = vmatpush1.msra.mxu0 %v1752
    %1802 = vmatprep.subr.mxu0 0.0
    %1803 = vmatpush1.msra.mxu0 %v1751
    %1804 = vmatprep.subr.mxu0 0.0
    %1805 = vmatpush2.msra.mxu0 0.0
    %1806 = vmatprep.subr.mxu0 0.0
    %1807 = vmatpush2.msra.mxu0 0.0
    %1808 = vmatprep.subr.mxu0 0.0
    %1809 = vmatpush2.msra.mxu0 0.0
    %1810 = vmatprep.subr.mxu0 0.0
    %1811 = vmatpush2.msra.mxu0 0.0
    %1812 = vmatprep.subr.mxu0 0.0
    %1813 = vmatpush2.msra.mxu0 0.0
    %1814 = vmatprep.subr.mxu0 0.0
    %1815 = vmatpush2.msra.mxu0 0.0
    %1816 = vmatprep.subr.mxu0 0.0
    %1817 = vmatpush2.msra.mxu0 0.0
    %1818 = vmatprep.subr.mxu0 0.0
    %1819 = vmatpush2.msra.mxu0 0.0
    %1820 = vmatprep.subr.mxu0 0.0
    %1821 = vmatpush2.msra.mxu0 0.0
    %1822 = vmatprep.subr.mxu0 0.0
    %1823 = vmatpush2.msra.mxu0 0.0
    %1824 = vmatprep.subr.mxu0 0.0
    %1825 = vmatpush2.msra.mxu0 0.0
    %1826 = vmatprep.subr.mxu0 0.0
    %1827 = vmatpush2.msra.mxu0 0.0
    %1828 = vmatprep.subr.mxu0 0.0
    %1829 = vmatpush2.msra.mxu0 0.0
    %1830 = vmatprep.subr.mxu0 0.0
    %1831 = vmatpush2.msra.mxu0 0.0
    %1832 = vmatprep.subr.mxu0 0.0
    %1833 = vmatpush2.msra.mxu0 0.0
    %1834 = vmatprep.subr.mxu0 0.0
    %1835 = vmatpush2.msra.mxu0 0.0
    %1836 = vmatprep.mubr.f32.mxu0 0.0
    %1837 = vmatmul.mubr.f32.gmra.mxu0 %v1687
    %v1838 = vpop.f32.mrf.mxu0
    %v1839 = vadd.f32 %v1771, %v1838
    %v1840 = vpop.f32.mrf.mxu0
    %1841 = vmatprep.mubr.f32.mxu0 0.0
    %1842 = vmatmul.mubr.f32.gmra.mxu0 %v1688
    %v1843 = vpop.f32.mrf.mxu0
    %v1844 = vadd.f32 %v1771, %v1843
    %v1845 = vpop.f32.mrf.mxu0
    %1846 = vmatprep.mubr.f32.mxu0 0.0
    %1847 = vmatmul.mubr.f32.gmra.mxu0 %v1689
    %v1848 = vpop.f32.mrf.mxu0
    %v1849 = vadd.f32 %v1771, %v1848
    %v1850 = vpop.f32.mrf.mxu0
    %1851 = vmatprep.mubr.f32.mxu0 0.0
    %1852 = vmatmul.mubr.f32.gmra.mxu0 %v1690
    %v1853 = vpop.f32.mrf.mxu0
    %v1854 = vadd.f32 %v1771, %v1853
    %v1855 = vpop.f32.mrf.mxu0
    %1856 = vmatprep.mubr.f32.mxu0 0.0
    %1857 = vmatmul.mubr.f32.gmra.mxu0 %v1691
    %v1858 = vpop.f32.mrf.mxu0
    %v1859 = vadd.f32 %v1771, %v1858
    %v1860 = vpop.f32.mrf.mxu0
    %1861 = vmatprep.mubr.f32.mxu0 0.0
    %1862 = vmatmul.mubr.f32.gmra.mxu0 %v1692
    %v1863 = vpop.f32.mrf.mxu0
    %v1864 = vadd.f32 %v1771, %v1863
    %v1865 = vpop.f32.mrf.mxu0
    %1866 = vmatprep.mubr.f32.mxu0 0.0
    %1867 = vmatmul.mubr.f32.gmra.mxu0 %v1693
    %v1868 = vpop.f32.mrf.mxu0
    %v1869 = vadd.f32 %v1771, %v1868
    %v1870 = vpop.f32.mrf.mxu0
    %1871 = vmatprep.mubr.f32.mxu0 0.0
    %1872 = vmatmul.mubr.f32.gmra.mxu0 %v1694
    %v1873 = vpop.f32.mrf.mxu0
    %v1874 = vadd.f32 %v1771, %v1873
    %v1875 = vpop.f32.mrf.mxu0
    %1876 = vmatprep.mubr.f32.mxu0 0.0
    %1877 = vmatmul.mubr.f32.gmra.mxu0 %v1695
    %v1878 = vpop.f32.mrf.mxu0
    %v1879 = vadd.f32 %v1771, %v1878
    %v1880 = vpop.f32.mrf.mxu0
    %1881 = vmatprep.mubr.f32.mxu0 0.0
    %1882 = vmatmul.mubr.f32.gmra.mxu0 %v1696
    %v1883 = vpop.f32.mrf.mxu0
    %v1884 = vadd.f32 %v1771, %v1883
    %v1885 = vpop.f32.mrf.mxu0
    %1886 = vmatprep.mubr.f32.mxu0 0.0
    %1887 = vmatmul.mubr.f32.gmra.mxu0 %v1697
    %v1888 = vpop.f32.mrf.mxu0
    %v1889 = vadd.f32 %v1771, %v1888
    %v1890 = vpop.f32.mrf.mxu0
    %1891 = vmatprep.mubr.f32.mxu0 0.0
    %1892 = vmatmul.mubr.f32.gmra.mxu0 %v1698
    %v1893 = vpop.f32.mrf.mxu0
    %v1894 = vadd.f32 %v1771, %v1893
    %v1895 = vpop.f32.mrf.mxu0
    %1896 = vmatprep.mubr.f32.mxu0 0.0
    %1897 = vmatmul.mubr.f32.gmra.mxu0 %v1699
    %v1898 = vpop.f32.mrf.mxu0
    %v1899 = vadd.f32 %v1771, %v1898
    %v1900 = vpop.f32.mrf.mxu0
    %1901 = vmatprep.mubr.f32.mxu0 0.0
    %1902 = vmatmul.mubr.f32.gmra.mxu0 %v1700
    %v1903 = vpop.f32.mrf.mxu0
    %v1904 = vadd.f32 %v1771, %v1903
    %v1905 = vpop.f32.mrf.mxu0
    %1906 = vmatprep.mubr.f32.mxu0 0.0
    %1907 = vmatmul.mubr.f32.gmra.mxu0 %v1701
    %v1908 = vpop.f32.mrf.mxu0
    %v1909 = vadd.f32 %v1771, %v1908
    %v1910 = vpop.f32.mrf.mxu0
    %1911 = vmatprep.mubr.f32.mxu0 0.0
    %1912 = vmatmul.mubr.f32.gmra.mxu0 %v1702
    %v1913 = vpop.f32.mrf.mxu0
    %v1914 = vadd.f32 %v1771, %v1913
    %v1915 = vpop.f32.mrf.mxu0
    %1916 = vmatprep.mubr.f32.mxu0 0.0
    %1917 = vmatmul.mubr.f32.gmra.mxu0 %v1703
    %v1918 = vpop.f32.mrf.mxu0
    %v1919 = vadd.f32 %v1771, %v1918
    %v1920 = vpop.f32.mrf.mxu0
    %1921 = vmatprep.mubr.f32.mxu0 0.0
    %1922 = vmatmul.mubr.f32.gmra.mxu0 %v1704
    %v1923 = vpop.f32.mrf.mxu0
    %v1924 = vadd.f32 %v1771, %v1923
    %v1925 = vpop.f32.mrf.mxu0
    %1926 = vmatprep.mubr.f32.mxu0 0.0
    %1927 = vmatmul.mubr.f32.gmra.mxu0 %v1705
    %v1928 = vpop.f32.mrf.mxu0
    %v1929 = vadd.f32 %v1771, %v1928
    %v1930 = vpop.f32.mrf.mxu0
    %1931 = vmatprep.mubr.f32.mxu0 0.0
    %1932 = vmatmul.mubr.f32.gmra.mxu0 %v1706
    %v1933 = vpop.f32.mrf.mxu0
    %v1934 = vadd.f32 %v1771, %v1933
    %v1935 = vpop.f32.mrf.mxu0
    %1936 = vmatprep.mubr.f32.mxu0 0.0
    %1937 = vmatmul.mubr.f32.gmra.mxu0 %v1707
    %v1938 = vpop.f32.mrf.mxu0
    %v1939 = vadd.f32 %v1771, %v1938
    %v1940 = vpop.f32.mrf.mxu0
    %1941 = vmatprep.mubr.f32.mxu0 0.0
    %1942 = vmatmul.mubr.f32.gmra.mxu0 %v1708
    %v1943 = vpop.f32.mrf.mxu0
    %v1944 = vadd.f32 %v1771, %v1943
    %v1945 = vpop.f32.mrf.mxu0
    %1946 = vmatprep.mubr.f32.mxu0 0.0
    %1947 = vmatmul.mubr.f32.gmra.mxu0 %v1709
    %v1948 = vpop.f32.mrf.mxu0
    %v1949 = vadd.f32 %v1771, %v1948
    %v1950 = vpop.f32.mrf.mxu0
    %1951 = vmatprep.mubr.f32.mxu0 0.0
    %1952 = vmatmul.mubr.f32.gmra.mxu0 %v1710
    %v1953 = vpop.f32.mrf.mxu0
    %v1954 = vadd.f32 %v1771, %v1953
    %v1955 = vpop.f32.mrf.mxu0
    %1956 = vmatprep.mubr.f32.mxu0 0.0
    %1957 = vmatmul.mubr.f32.gmra.mxu0 %v1711
    %v1958 = vpop.f32.mrf.mxu0
    %v1959 = vadd.f32 %v1771, %v1958
    %v1960 = vpop.f32.mrf.mxu0
    %1961 = vmatprep.mubr.f32.mxu0 0.0
    %1962 = vmatmul.mubr.f32.gmra.mxu0 %v1712
    %v1963 = vpop.f32.mrf.mxu0
    %v1964 = vadd.f32 %v1771, %v1963
    %v1965 = vpop.f32.mrf.mxu0
    %1966 = vmatprep.mubr.f32.mxu0 0.0
    %1967 = vmatmul.mubr.f32.gmra.mxu0 %v1713
    %v1968 = vpop.f32.mrf.mxu0
    %v1969 = vadd.f32 %v1771, %v1968
    %v1970 = vpop.f32.mrf.mxu0
    %1971 = vmatprep.mubr.f32.mxu0 0.0
    %1972 = vmatmul.mubr.f32.gmra.mxu0 %v1714
    %v1973 = vpop.f32.mrf.mxu0
    %v1974 = vadd.f32 %v1771, %v1973
    %v1975 = vpop.f32.mrf.mxu0
    %1976 = vmatprep.mubr.f32.mxu0 0.0
    %1977 = vmatmul.mubr.f32.gmra.mxu0 %v1715
    %v1978 = vpop.f32.mrf.mxu0
    %v1979 = vadd.f32 %v1771, %v1978
    %v1980 = vpop.f32.mrf.mxu0
    %1981 = vmatprep.mubr.f32.mxu0 0.0
    %1982 = vmatmul.mubr.f32.gmra.mxu0 %v1716
    %v1983 = vpop.f32.mrf.mxu0
    %v1984 = vadd.f32 %v1771, %v1983
    %v1985 = vpop.f32.mrf.mxu0
    %1986 = vmatprep.mubr.f32.mxu0 0.0
    %1987 = vmatmul.mubr.f32.gmra.mxu0 %v1717
    %v1988 = vpop.f32.mrf.mxu0
    %v1989 = vadd.f32 %v1771, %v1988
    %v1990 = vpop.f32.mrf.mxu0
    %1991 = vmatprep.mubr.f32.mxu0 0.0
    %1992 = vmatmul.mubr.f32.gmra.mxu0 %v1718
    %v1993 = vpop.f32.mrf.mxu0
    %v1994 = vadd.f32 %v1771, %v1993
    %v1995 = vpop.f32.mrf.mxu0
    %1996 = vmatprep.mubr.f32.mxu0 0.0
    %1997 = vmatmul.mubr.f32.gmra.mxu0 %v1719
    %v1998 = vpop.f32.mrf.mxu0
    %v1999 = vadd.f32 %v1771, %v1998
    %v2000 = vpop.f32.mrf.mxu0
    %2001 = vmatprep.mubr.f32.mxu0 0.0
    %2002 = vmatmul.mubr.f32.gmra.mxu0 %v1720
    %v2003 = vpop.f32.mrf.mxu0
    %v2004 = vadd.f32 %v1771, %v2003
    %v2005 = vpop.f32.mrf.mxu0
    %2006 = vmatprep.mubr.f32.mxu0 0.0
    %2007 = vmatmul.mubr.f32.gmra.mxu0 %v1721
    %v2008 = vpop.f32.mrf.mxu0
    %v2009 = vadd.f32 %v1771, %v2008
    %v2010 = vpop.f32.mrf.mxu0
    %2011 = vmatprep.mubr.f32.mxu0 0.0
    %2012 = vmatmul.mubr.f32.gmra.mxu0 %v1722
    %v2013 = vpop.f32.mrf.mxu0
    %v2014 = vadd.f32 %v1771, %v2013
    %v2015 = vpop.f32.mrf.mxu0
    %2016 = vmatprep.mubr.f32.mxu0 0.0
    %2017 = vmatmul.mubr.f32.gmra.mxu0 %v1723
    %v2018 = vpop.f32.mrf.mxu0
    %v2019 = vadd.f32 %v1771, %v2018
    %v2020 = vpop.f32.mrf.mxu0
    %2021 = vmatprep.mubr.f32.mxu0 0.0
    %2022 = vmatmul.mubr.f32.gmra.mxu0 %v1724
    %v2023 = vpop.f32.mrf.mxu0
    %v2024 = vadd.f32 %v1771, %v2023
    %v2025 = vpop.f32.mrf.mxu0
    %2026 = vmatprep.mubr.f32.mxu0 0.0
    %2027 = vmatmul.mubr.f32.gmra.mxu0 %v1725
    %v2028 = vpop.f32.mrf.mxu0
    %v2029 = vadd.f32 %v1771, %v2028
    %v2030 = vpop.f32.mrf.mxu0
    %2031 = vmatprep.mubr.f32.mxu0 0.0
    %2032 = vmatmul.mubr.f32.gmra.mxu0 %v1726
    %v2033 = vpop.f32.mrf.mxu0
    %v2034 = vadd.f32 %v1771, %v2033
    %v2035 = vpop.f32.mrf.mxu0
    %2036 = vmatprep.mubr.f32.mxu0 0.0
    %2037 = vmatmul.mubr.f32.gmra.mxu0 %v1727
    %v2038 = vpop.f32.mrf.mxu0
    %v2039 = vadd.f32 %v1771, %v2038
    %v2040 = vpop.f32.mrf.mxu0
    %2041 = vmatprep.mubr.f32.mxu0 0.0
    %2042 = vmatmul.mubr.f32.gmra.mxu0 %v1728
    %v2043 = vpop.f32.mrf.mxu0
    %v2044 = vadd.f32 %v1771, %v2043
    %v2045 = vpop.f32.mrf.mxu0
    %2046 = vmatprep.mubr.f32.mxu0 0.0
    %2047 = vmatmul.mubr.f32.gmra.mxu0 %v1729
    %v2048 = vpop.f32.mrf.mxu0
    %v2049 = vadd.f32 %v1771, %v2048
    %v2050 = vpop.f32.mrf.mxu0
    %2051 = vmatprep.mubr.f32.mxu0 0.0
    %2052 = vmatmul.mubr.f32.gmra.mxu0 %v1730
    %v2053 = vpop.f32.mrf.mxu0
    %v2054 = vadd.f32 %v1771, %v2053
    %v2055 = vpop.f32.mrf.mxu0
    %2056 = vmatprep.mubr.f32.mxu0 0.0
    %2057 = vmatmul.mubr.f32.gmra.mxu0 %v1731
    %v2058 = vpop.f32.mrf.mxu0
    %v2059 = vadd.f32 %v1771, %v2058
    %v2060 = vpop.f32.mrf.mxu0
    %2061 = vmatprep.mubr.f32.mxu0 0.0
    %2062 = vmatmul.mubr.f32.gmra.mxu0 %v1732
    %v2063 = vpop.f32.mrf.mxu0
    %v2064 = vadd.f32 %v1771, %v2063
    %v2065 = vpop.f32.mrf.mxu0
    %2066 = vmatprep.mubr.f32.mxu0 0.0
    %2067 = vmatmul.mubr.f32.gmra.mxu0 %v1733
    %v2068 = vpop.f32.mrf.mxu0
    %v2069 = vadd.f32 %v1771, %v2068
    %v2070 = vpop.f32.mrf.mxu0
    %2071 = vmatprep.mubr.f32.mxu0 0.0
    %2072 = vmatmul.mubr.f32.gmra.mxu0 %v1734
    %v2073 = vpop.f32.mrf.mxu0
    %v2074 = vadd.f32 %v1771, %v2073
    %v2075 = vpop.f32.mrf.mxu0
    %2076 = vmatprep.mubr.f32.mxu0 0.0
    %2077 = vmatmul.mubr.f32.gmra.mxu0 %v1735
    %v2078 = vpop.f32.mrf.mxu0
    %v2079 = vadd.f32 %v1771, %v2078
    %v2080 = vpop.f32.mrf.mxu0
    %2081 = vmatprep.mubr.f32.mxu0 0.0
    %2082 = vmatmul.mubr.f32.gmra.mxu0 %v1736
    %v2083 = vpop.f32.mrf.mxu0
    %v2084 = vadd.f32 %v1771, %v2083
    %v2085 = vpop.f32.mrf.mxu0
    %2086 = vmatprep.mubr.f32.mxu0 0.0
    %2087 = vmatmul.mubr.f32.gmra.mxu0 %v1737
    %v2088 = vpop.f32.mrf.mxu0
    %v2089 = vadd.f32 %v1771, %v2088
    %v2090 = vpop.f32.mrf.mxu0
    %2091 = vmatprep.mubr.f32.mxu0 0.0
    %2092 = vmatmul.mubr.f32.gmra.mxu0 %v1738
    %v2093 = vpop.f32.mrf.mxu0
    %v2094 = vadd.f32 %v1771, %v2093
    %v2095 = vpop.f32.mrf.mxu0
    %2096 = vmatprep.mubr.f32.mxu0 0.0
    %2097 = vmatmul.mubr.f32.gmra.mxu0 %v1739
    %v2098 = vpop.f32.mrf.mxu0
    %v2099 = vadd.f32 %v1771, %v2098
    %v2100 = vpop.f32.mrf.mxu0
    %2101 = vmatprep.mubr.f32.mxu0 0.0
    %2102 = vmatmul.mubr.f32.gmra.mxu0 %v1740
    %v2103 = vpop.f32.mrf.mxu0
    %v2104 = vadd.f32 %v1771, %v2103
    %v2105 = vpop.f32.mrf.mxu0
    %2106 = vmatprep.mubr.f32.mxu0 0.0
    %2107 = vmatmul.mubr.f32.gmra.mxu0 %v1741
    %v2108 = vpop.f32.mrf.mxu0
    %v2109 = vadd.f32 %v1771, %v2108
    %v2110 = vpop.f32.mrf.mxu0
    %2111 = vmatprep.mubr.f32.mxu0 0.0
    %2112 = vmatmul.mubr.f32.gmra.mxu0 %v1742
    %v2113 = vpop.f32.mrf.mxu0
    %v2114 = vadd.f32 %v1771, %v2113
    %v2115 = vpop.f32.mrf.mxu0
    %2116 = vmatprep.mubr.f32.mxu0 0.0
    %2117 = vmatmul.mubr.f32.gmra.mxu0 %v1743
    %v2118 = vpop.f32.mrf.mxu0
    %v2119 = vadd.f32 %v1771, %v2118
    %v2120 = vpop.f32.mrf.mxu0
    %2121 = vmatprep.mubr.f32.mxu0 0.0
    %2122 = vmatmul.mubr.f32.gmra.mxu0 %v1744
    %v2123 = vpop.f32.mrf.mxu0
    %v2124 = vadd.f32 %v1771, %v2123
    %v2125 = vpop.f32.mrf.mxu0
    %2126 = vmatprep.mubr.f32.mxu0 0.0
    %2127 = vmatmul.mubr.f32.gmra.mxu0 %v1745
    %v2128 = vpop.f32.mrf.mxu0
    %v2129 = vadd.f32 %v1771, %v2128
    %v2130 = vpop.f32.mrf.mxu0
    %2131 = vmatprep.mubr.f32.mxu0 0.0
    %2132 = vmatmul.mubr.f32.gmra.mxu0 %v1746
    %v2133 = vpop.f32.mrf.mxu0
    %v2134 = vadd.f32 %v1771, %v2133
    %v2135 = vpop.f32.mrf.mxu0
    %2136 = vmatprep.mubr.f32.mxu0 0.0
    %2137 = vmatmul.mubr.f32.gmra.mxu0 %v1747
    %v2138 = vpop.f32.mrf.mxu0
    %v2139 = vadd.f32 %v1771, %v2138
    %v2140 = vpop.f32.mrf.mxu0
    %2141 = vmatprep.mubr.f32.mxu0 0.0
    %2142 = vmatmul.mubr.f32.gmra.mxu0 %v1748
    %v2143 = vpop.f32.mrf.mxu0
    %v2144 = vadd.f32 %v1771, %v2143
    %v2145 = vpop.f32.mrf.mxu0
    %2146 = vmatprep.mubr.f32.mxu0 0.0
    %2147 = vmatmul.mubr.f32.gmra.mxu0 %v1749
    %v2148 = vpop.f32.mrf.mxu0
    %v2149 = vadd.f32 %v1771, %v2148
    %v2150 = vpop.f32.mrf.mxu0
    %2151 = vmatprep.mubr.f32.mxu0 0.0
    %2152 = vmatmul.mubr.f32.gmra.mxu0 %v1750
    %v2153 = vpop.f32.mrf.mxu0
    %v2154 = vadd.f32 %v1771, %v2153
    %v2155 = vpop.f32.mrf.mxu0
    %2156 = vdwg.mxu0
    %v2157 = vmax.f32 %v1839, 0.0
    %v2158 = vmax.f32 %v1844, 0.0
    %v2159 = vmax.f32 %v1849, 0.0
    %v2160 = vmax.f32 %v1854, 0.0
    %v2161 = vmax.f32 %v1859, 0.0
    %v2162 = vmax.f32 %v1864, 0.0
    %v2163 = vmax.f32 %v1869, 0.0
    %v2164 = vmax.f32 %v1874, 0.0
    %v2165 = vmax.f32 %v1879, 0.0
    %v2166 = vmax.f32 %v1884, 0.0
    %v2167 = vmax.f32 %v1889, 0.0
    %v2168 = vmax.f32 %v1894, 0.0
    %v2169 = vmax.f32 %v1899, 0.0
    %v2170 = vmax.f32 %v1904, 0.0
    %v2171 = vmax.f32 %v1909, 0.0
    %v2172 = vmax.f32 %v1914, 0.0
    %v2173 = vmax.f32 %v1919, 0.0
    %v2174 = vmax.f32 %v1924, 0.0
    %v2175 = vmax.f32 %v1929, 0.0
    %v2176 = vmax.f32 %v1934, 0.0
    %v2177 = vmax.f32 %v1939, 0.0
    %v2178 = vmax.f32 %v1944, 0.0
    %v2179 = vmax.f32 %v1949, 0.0
    %v2180 = vmax.f32 %v1954, 0.0
    %v2181 = vmax.f32 %v1959, 0.0
    %v2182 = vmax.f32 %v1964, 0.0
    %v2183 = vmax.f32 %v1969, 0.0
    %v2184 = vmax.f32 %v1974, 0.0
    %v2185 = vmax.f32 %v1979, 0.0
    %v2186 = vmax.f32 %v1984, 0.0
    %v2187 = vmax.f32 %v1989, 0.0
    %v2188 = vmax.f32 %v1994, 0.0
    %v2189 = vmax.f32 %v1999, 0.0
    %v2190 = vmax.f32 %v2004, 0.0
    %v2191 = vmax.f32 %v2009, 0.0
    %v2192 = vmax.f32 %v2014, 0.0
    %v2193 = vmax.f32 %v2019, 0.0
    %v2194 = vmax.f32 %v2024, 0.0
    %v2195 = vmax.f32 %v2029, 0.0
    %v2196 = vmax.f32 %v2034, 0.0
    %v2197 = vmax.f32 %v2039, 0.0
    %v2198 = vmax.f32 %v2044, 0.0
    %v2199 = vmax.f32 %v2049, 0.0
    %v2200 = vmax.f32 %v2054, 0.0
    %v2201 = vmax.f32 %v2059, 0.0
    %v2202 = vmax.f32 %v2064, 0.0
    %v2203 = vmax.f32 %v2069, 0.0
    %v2204 = vmax.f32 %v2074, 0.0
    %v2205 = vmax.f32 %v2079, 0.0
    %v2206 = vmax.f32 %v2084, 0.0
    %v2207 = vmax.f32 %v2089, 0.0
    %v2208 = vmax.f32 %v2094, 0.0
    %v2209 = vmax.f32 %v2099, 0.0
    %v2210 = vmax.f32 %v2104, 0.0
    %v2211 = vmax.f32 %v2109, 0.0
    %v2212 = vmax.f32 %v2114, 0.0
    %v2213 = vmax.f32 %v2119, 0.0
    %v2214 = vmax.f32 %v2124, 0.0
    %v2215 = vmax.f32 %v2129, 0.0
    %v2216 = vmax.f32 %v2134, 0.0
    %v2217 = vmax.f32 %v2139, 0.0
    %v2218 = vmax.f32 %v2144, 0.0
    %v2219 = vmax.f32 %v2149, 0.0
    %v2220 = vmax.f32 %v2154, 0.0
    %v2221 = vand.u32 2147483647, %v1839
    %v2222 = vand.u32 2147483647, %v1844
    %v2223 = vand.u32 2147483647, %v1849
    %v2224 = vand.u32 2147483647, %v1854
    %v2225 = vand.u32 2147483647, %v1859
    %v2226 = vand.u32 2147483647, %v1864
    %v2227 = vand.u32 2147483647, %v1869
    %v2228 = vand.u32 2147483647, %v1874
    %v2229 = vand.u32 2147483647, %v1879
    %v2230 = vand.u32 2147483647, %v1884
    %v2231 = vand.u32 2147483647, %v1889
    %v2232 = vand.u32 2147483647, %v1894
    %v2233 = vand.u32 2147483647, %v1899
    %v2234 = vand.u32 2147483647, %v1904
    %v2235 = vand.u32 2147483647, %v1909
    %v2236 = vand.u32 2147483647, %v1914
    %v2237 = vand.u32 2147483647, %v1919
    %v2238 = vand.u32 2147483647, %v1924
    %v2239 = vand.u32 2147483647, %v1929
    %v2240 = vand.u32 2147483647, %v1934
    %v2241 = vand.u32 2147483647, %v1939
    %v2242 = vand.u32 2147483647, %v1944
    %v2243 = vand.u32 2147483647, %v1949
    %v2244 = vand.u32 2147483647, %v1954
    %v2245 = vand.u32 2147483647, %v1959
    %v2246 = vand.u32 2147483647, %v1964
    %v2247 = vand.u32 2147483647, %v1969
    %v2248 = vand.u32 2147483647, %v1974
    %v2249 = vand.u32 2147483647, %v1979
    %v2250 = vand.u32 2147483647, %v1984
    %v2251 = vand.u32 2147483647, %v1989
    %v2252 = vand.u32 2147483647, %v1994
    %v2253 = vand.u32 2147483647, %v1999
    %v2254 = vand.u32 2147483647, %v2004
    %v2255 = vand.u32 2147483647, %v2009
    %v2256 = vand.u32 2147483647, %v2014
    %v2257 = vand.u32 2147483647, %v2019
    %v2258 = vand.u32 2147483647, %v2024
    %v2259 = vand.u32 2147483647, %v2029
    %v2260 = vand.u32 2147483647, %v2034
    %v2261 = vand.u32 2147483647, %v2039
    %v2262 = vand.u32 2147483647, %v2044
    %v2263 = vand.u32 2147483647, %v2049
    %v2264 = vand.u32 2147483647, %v2054
    %v2265 = vand.u32 2147483647, %v2059
    %v2266 = vand.u32 2147483647, %v2064
    %v2267 = vand.u32 2147483647, %v2069
    %v2268 = vand.u32 2147483647, %v2074
    %v2269 = vand.u32 2147483647, %v2079
    %v2270 = vand.u32 2147483647, %v2084
    %v2271 = vand.u32 2147483647, %v2089
    %v2272 = vand.u32 2147483647, %v2094
    %v2273 = vand.u32 2147483647, %v2099
    %v2274 = vand.u32 2147483647, %v2104
    %v2275 = vand.u32 2147483647, %v2109
    %v2276 = vand.u32 2147483647, %v2114
    %v2277 = vand.u32 2147483647, %v2119
    %v2278 = vand.u32 2147483647, %v2124
    %v2279 = vand.u32 2147483647, %v2129
    %v2280 = vand.u32 2147483647, %v2134
    %v2281 = vand.u32 2147483647, %v2139
    %v2282 = vand.u32 2147483647, %v2144
    %v2283 = vand.u32 2147483647, %v2149
    %v2284 = vand.u32 2147483647, %v2154
    %v2285 = vsub.f32 0.0, %v2221
    %v2286 = vsub.f32 0.0, %v2222
    %v2287 = vsub.f32 0.0, %v2223
    %v2288 = vsub.f32 0.0, %v2224
    %v2289 = vsub.f32 0.0, %v2225
    %v2290 = vsub.f32 0.0, %v2226
    %v2291 = vsub.f32 0.0, %v2227
    %v2292 = vsub.f32 0.0, %v2228
    %v2293 = vsub.f32 0.0, %v2229
    %v2294 = vsub.f32 0.0, %v2230
    %v2295 = vsub.f32 0.0, %v2231
    %v2296 = vsub.f32 0.0, %v2232
    %v2297 = vsub.f32 0.0, %v2233
    %v2298 = vsub.f32 0.0, %v2234
    %v2299 = vsub.f32 0.0, %v2235
    %v2300 = vsub.f32 0.0, %v2236
    %v2301 = vsub.f32 0.0, %v2237
    %v2302 = vsub.f32 0.0, %v2238
    %v2303 = vsub.f32 0.0, %v2239
    %v2304 = vsub.f32 0.0, %v2240
    %v2305 = vsub.f32 0.0, %v2241
    %v2306 = vsub.f32 0.0, %v2242
    %v2307 = vsub.f32 0.0, %v2243
    %v2308 = vsub.f32 0.0, %v2244
    %v2309 = vsub.f32 0.0, %v2245
    %v2310 = vsub.f32 0.0, %v2246
    %v2311 = vsub.f32 0.0, %v2247
    %v2312 = vsub.f32 0.0, %v2248
    %v2313 = vsub.f32 0.0, %v2249
    %v2314 = vsub.f32 0.0, %v2250
    %v2315 = vsub.f32 0.0, %v2251
    %v2316 = vsub.f32 0.0, %v2252
    %v2317 = vsub.f32 0.0, %v2253
    %v2318 = vsub.f32 0.0, %v2254
    %v2319 = vsub.f32 0.0, %v2255
    %v2320 = vsub.f32 0.0, %v2256
    %v2321 = vsub.f32 0.0, %v2257
    %v2322 = vsub.f32 0.0, %v2258
    %v2323 = vsub.f32 0.0, %v2259
    %v2324 = vsub.f32 0.0, %v2260
    %v2325 = vsub.f32 0.0, %v2261
    %v2326 = vsub.f32 0.0, %v2262
    %v2327 = vsub.f32 0.0, %v2263
    %v2328 = vsub.f32 0.0, %v2264
    %v2329 = vsub.f32 0.0, %v2265
    %v2330 = vsub.f32 0.0, %v2266
    %v2331 = vsub.f32 0.0, %v2267
    %v2332 = vsub.f32 0.0, %v2268
    %v2333 = vsub.f32 0.0, %v2269
    %v2334 = vsub.f32 0.0, %v2270
    %v2335 = vsub.f32 0.0, %v2271
    %v2336 = vsub.f32 0.0, %v2272
    %v2337 = vsub.f32 0.0, %v2273
    %v2338 = vsub.f32 0.0, %v2274
    %v2339 = vsub.f32 0.0, %v2275
    %v2340 = vsub.f32 0.0, %v2276
    %v2341 = vsub.f32 0.0, %v2277
    %v2342 = vsub.f32 0.0, %v2278
    %v2343 = vsub.f32 0.0, %v2279
    %v2344 = vsub.f32 0.0, %v2280
    %v2345 = vsub.f32 0.0, %v2281
    %v2346 = vsub.f32 0.0, %v2282
    %v2347 = vsub.f32 0.0, %v2283
    %v2348 = vsub.f32 0.0, %v2284
    %v2349 = vmul.f32 %v2285, 1.442695
    %v2350 = vpow.pop %v2349
    %v2351 = vmul.f32 %v2286, 1.442695
    %v2352 = vpow.pop %v2351
    %v2353 = vmul.f32 %v2287, 1.442695
    %v2354 = vpow.pop %v2353
    %v2355 = vmul.f32 %v2288, 1.442695
    %v2356 = vpow.pop %v2355
    %v2357 = vmul.f32 %v2289, 1.442695
    %v2358 = vpow.pop %v2357
    %v2359 = vmul.f32 %v2290, 1.442695
    %v2360 = vpow.pop %v2359
    %v2361 = vmul.f32 %v2291, 1.442695
    %v2362 = vpow.pop %v2361
    %v2363 = vmul.f32 %v2292, 1.442695
    %v2364 = vpow.pop %v2363
    %v2365 = vmul.f32 %v2293, 1.442695
    %v2366 = vpow.pop %v2365
    %v2367 = vmul.f32 %v2294, 1.442695
    %v2368 = vpow.pop %v2367
    %v2369 = vmul.f32 %v2295, 1.442695
    %v2370 = vpow.pop %v2369
    %v2371 = vmul.f32 %v2296, 1.442695
    %v2372 = vpow.pop %v2371
    %v2373 = vmul.f32 %v2297, 1.442695
    %v2374 = vpow.pop %v2373
    %v2375 = vmul.f32 %v2298, 1.442695
    %v2376 = vpow.pop %v2375
    %v2377 = vmul.f32 %v2299, 1.442695
    %v2378 = vpow.pop %v2377
    %v2379 = vmul.f32 %v2300, 1.442695
    %v2380 = vpow.pop %v2379
    %v2381 = vmul.f32 %v2301, 1.442695
    %v2382 = vpow.pop %v2381
    %v2383 = vmul.f32 %v2302, 1.442695
    %v2384 = vpow.pop %v2383
    %v2385 = vmul.f32 %v2303, 1.442695
    %v2386 = vpow.pop %v2385
    %v2387 = vmul.f32 %v2304, 1.442695
    %v2388 = vpow.pop %v2387
    %v2389 = vmul.f32 %v2305, 1.442695
    %v2390 = vpow.pop %v2389
    %v2391 = vmul.f32 %v2306, 1.442695
    %v2392 = vpow.pop %v2391
    %v2393 = vmul.f32 %v2307, 1.442695
    %v2394 = vpow.pop %v2393
    %v2395 = vmul.f32 %v2308, 1.442695
    %v2396 = vpow.pop %v2395
    %v2397 = vmul.f32 %v2309, 1.442695
    %v2398 = vpow.pop %v2397
    %v2399 = vmul.f32 %v2310, 1.442695
    %v2400 = vpow.pop %v2399
    %v2401 = vmul.f32 %v2311, 1.442695
    %v2402 = vpow.pop %v2401
    %v2403 = vmul.f32 %v2312, 1.442695
    %v2404 = vpow.pop %v2403
    %v2405 = vmul.f32 %v2313, 1.442695
    %v2406 = vpow.pop %v2405
    %v2407 = vmul.f32 %v2314, 1.442695
    %v2408 = vpow.pop %v2407
    %v2409 = vmul.f32 %v2315, 1.442695
    %v2410 = vpow.pop %v2409
    %v2411 = vmul.f32 %v2316, 1.442695
    %v2412 = vpow.pop %v2411
    %v2413 = vmul.f32 %v2317, 1.442695
    %v2414 = vpow.pop %v2413
    %v2415 = vmul.f32 %v2318, 1.442695
    %v2416 = vpow.pop %v2415
    %v2417 = vmul.f32 %v2319, 1.442695
    %v2418 = vpow.pop %v2417
    %v2419 = vmul.f32 %v2320, 1.442695
    %v2420 = vpow.pop %v2419
    %v2421 = vmul.f32 %v2321, 1.442695
    %v2422 = vpow.pop %v2421
    %v2423 = vmul.f32 %v2322, 1.442695
    %v2424 = vpow.pop %v2423
    %v2425 = vmul.f32 %v2323, 1.442695
    %v2426 = vpow.pop %v2425
    %v2427 = vmul.f32 %v2324, 1.442695
    %v2428 = vpow.pop %v2427
    %v2429 = vmul.f32 %v2325, 1.442695
    %v2430 = vpow.pop %v2429
    %v2431 = vmul.f32 %v2326, 1.442695
    %v2432 = vpow.pop %v2431
    %v2433 = vmul.f32 %v2327, 1.442695
    %v2434 = vpow.pop %v2433
    %v2435 = vmul.f32 %v2328, 1.442695
    %v2436 = vpow.pop %v2435
    %v2437 = vmul.f32 %v2329, 1.442695
    %v2438 = vpow.pop %v2437
    %v2439 = vmul.f32 %v2330, 1.442695
    %v2440 = vpow.pop %v2439
    %v2441 = vmul.f32 %v2331, 1.442695
    %v2442 = vpow.pop %v2441
    %v2443 = vmul.f32 %v2332, 1.442695
    %v2444 = vpow.pop %v2443
    %v2445 = vmul.f32 %v2333, 1.442695
    %v2446 = vpow.pop %v2445
    %v2447 = vmul.f32 %v2334, 1.442695
    %v2448 = vpow.pop %v2447
    %v2449 = vmul.f32 %v2335, 1.442695
    %v2450 = vpow.pop %v2449
    %v2451 = vmul.f32 %v2336, 1.442695
    %v2452 = vpow.pop %v2451
    %v2453 = vmul.f32 %v2337, 1.442695
    %v2454 = vpow.pop %v2453
    %v2455 = vmul.f32 %v2338, 1.442695
    %v2456 = vpow.pop %v2455
    %v2457 = vmul.f32 %v2339, 1.442695
    %v2458 = vpow.pop %v2457
    %v2459 = vmul.f32 %v2340, 1.442695
    %v2460 = vpow.pop %v2459
    %v2461 = vmul.f32 %v2341, 1.442695
    %v2462 = vpow.pop %v2461
    %v2463 = vmul.f32 %v2342, 1.442695
    %v2464 = vpow.pop %v2463
    %v2465 = vmul.f32 %v2343, 1.442695
    %v2466 = vpow.pop %v2465
    %v2467 = vmul.f32 %v2344, 1.442695
    %v2468 = vpow.pop %v2467
    %v2469 = vmul.f32 %v2345, 1.442695
    %v2470 = vpow.pop %v2469
    %v2471 = vmul.f32 %v2346, 1.442695
    %v2472 = vpow.pop %v2471
    %v2473 = vmul.f32 %v2347, 1.442695
    %v2474 = vpow.pop %v2473
    %v2475 = vmul.f32 %v2348, 1.442695
    %v2476 = vpow.pop %v2475
    %v2477 = vadd.f32 %v2350, 1.0
    %v2478 = vlog2.pop %v2477
    %v2479 = vmul.f32 %v2478, 0.6931472
    %v2480 = vmul.f32 -0.5, %v2350
    %v2481 = vadd.f32 %v2480, 1.0
    %v2482 = vmul.f32 %v2481, %v2350
    %v2483 = vand.u32 2147483647, %v2350
    %vm2484 = vcmp.lt.f32.partialorder %v2483, 0.0004427343
    %v2485 = vsel %vm2484, %v2482, %v2479
    %v2486 = vadd.f32 %v2352, 1.0
    %v2487 = vlog2.pop %v2486
    %v2488 = vmul.f32 %v2487, 0.6931472
    %v2489 = vmul.f32 -0.5, %v2352
    %v2490 = vadd.f32 %v2489, 1.0
    %v2491 = vmul.f32 %v2490, %v2352
    %v2492 = vand.u32 2147483647, %v2352
    %vm2493 = vcmp.lt.f32.partialorder %v2492, 0.0004427343
    %v2494 = vsel %vm2493, %v2491, %v2488
    %v2495 = vadd.f32 %v2354, 1.0
    %v2496 = vlog2.pop %v2495
    %v2497 = vmul.f32 %v2496, 0.6931472
    %v2498 = vmul.f32 -0.5, %v2354
    %v2499 = vadd.f32 %v2498, 1.0
    %v2500 = vmul.f32 %v2499, %v2354
    %v2501 = vand.u32 2147483647, %v2354
    %vm2502 = vcmp.lt.f32.partialorder %v2501, 0.0004427343
    %v2503 = vsel %vm2502, %v2500, %v2497
    %v2504 = vadd.f32 %v2356, 1.0
    %v2505 = vlog2.pop %v2504
    %v2506 = vmul.f32 %v2505, 0.6931472
    %v2507 = vmul.f32 -0.5, %v2356
    %v2508 = vadd.f32 %v2507, 1.0
    %v2509 = vmul.f32 %v2508, %v2356
    %v2510 = vand.u32 2147483647, %v2356
    %vm2511 = vcmp.lt.f32.partialorder %v2510, 0.0004427343
    %v2512 = vsel %vm2511, %v2509, %v2506
    %v2513 = vadd.f32 %v2358, 1.0
    %v2514 = vlog2.pop %v2513
    %v2515 = vmul.f32 %v2514, 0.6931472
    %v2516 = vmul.f32 -0.5, %v2358
    %v2517 = vadd.f32 %v2516, 1.0
    %v2518 = vmul.f32 %v2517, %v2358
    %v2519 = vand.u32 2147483647, %v2358
    %vm2520 = vcmp.lt.f32.partialorder %v2519, 0.0004427343
    %v2521 = vsel %vm2520, %v2518, %v2515
    %v2522 = vadd.f32 %v2360, 1.0
    %v2523 = vlog2.pop %v2522
    %v2524 = vmul.f32 %v2523, 0.6931472
    %v2525 = vmul.f32 -0.5, %v2360
    %v2526 = vadd.f32 %v2525, 1.0
    %v2527 = vmul.f32 %v2526, %v2360
    %v2528 = vand.u32 2147483647, %v2360
    %vm2529 = vcmp.lt.f32.partialorder %v2528, 0.0004427343
    %v2530 = vsel %vm2529, %v2527, %v2524
    %v2531 = vadd.f32 %v2362, 1.0
    %v2532 = vlog2.pop %v2531
    %v2533 = vmul.f32 %v2532, 0.6931472
    %v2534 = vmul.f32 -0.5, %v2362
    %v2535 = vadd.f32 %v2534, 1.0
    %v2536 = vmul.f32 %v2535, %v2362
    %v2537 = vand.u32 2147483647, %v2362
    %vm2538 = vcmp.lt.f32.partialorder %v2537, 0.0004427343
    %v2539 = vsel %vm2538, %v2536, %v2533
    %v2540 = vadd.f32 %v2364, 1.0
    %v2541 = vlog2.pop %v2540
    %v2542 = vmul.f32 %v2541, 0.6931472
    %v2543 = vmul.f32 -0.5, %v2364
    %v2544 = vadd.f32 %v2543, 1.0
    %v2545 = vmul.f32 %v2544, %v2364
    %v2546 = vand.u32 2147483647, %v2364
    %vm2547 = vcmp.lt.f32.partialorder %v2546, 0.0004427343
    %v2548 = vsel %vm2547, %v2545, %v2542
    %v2549 = vadd.f32 %v2366, 1.0
    %v2550 = vlog2.pop %v2549
    %v2551 = vmul.f32 %v2550, 0.6931472
    %v2552 = vmul.f32 -0.5, %v2366
    %v2553 = vadd.f32 %v2552, 1.0
    %v2554 = vmul.f32 %v2553, %v2366
    %v2555 = vand.u32 2147483647, %v2366
    %vm2556 = vcmp.lt.f32.partialorder %v2555, 0.0004427343
    %v2557 = vsel %vm2556, %v2554, %v2551
    %v2558 = vadd.f32 %v2368, 1.0
    %v2559 = vlog2.pop %v2558
    %v2560 = vmul.f32 %v2559, 0.6931472
    %v2561 = vmul.f32 -0.5, %v2368
    %v2562 = vadd.f32 %v2561, 1.0
    %v2563 = vmul.f32 %v2562, %v2368
    %v2564 = vand.u32 2147483647, %v2368
    %vm2565 = vcmp.lt.f32.partialorder %v2564, 0.0004427343
    %v2566 = vsel %vm2565, %v2563, %v2560
    %v2567 = vadd.f32 %v2370, 1.0
    %v2568 = vlog2.pop %v2567
    %v2569 = vmul.f32 %v2568, 0.6931472
    %v2570 = vmul.f32 -0.5, %v2370
    %v2571 = vadd.f32 %v2570, 1.0
    %v2572 = vmul.f32 %v2571, %v2370
    %v2573 = vand.u32 2147483647, %v2370
    %vm2574 = vcmp.lt.f32.partialorder %v2573, 0.0004427343
    %v2575 = vsel %vm2574, %v2572, %v2569
    %v2576 = vadd.f32 %v2372, 1.0
    %v2577 = vlog2.pop %v2576
    %v2578 = vmul.f32 %v2577, 0.6931472
    %v2579 = vmul.f32 -0.5, %v2372
    %v2580 = vadd.f32 %v2579, 1.0
    %v2581 = vmul.f32 %v2580, %v2372
    %v2582 = vand.u32 2147483647, %v2372
    %vm2583 = vcmp.lt.f32.partialorder %v2582, 0.0004427343
    %v2584 = vsel %vm2583, %v2581, %v2578
    %v2585 = vadd.f32 %v2374, 1.0
    %v2586 = vlog2.pop %v2585
    %v2587 = vmul.f32 %v2586, 0.6931472
    %v2588 = vmul.f32 -0.5, %v2374
    %v2589 = vadd.f32 %v2588, 1.0
    %v2590 = vmul.f32 %v2589, %v2374
    %v2591 = vand.u32 2147483647, %v2374
    %vm2592 = vcmp.lt.f32.partialorder %v2591, 0.0004427343
    %v2593 = vsel %vm2592, %v2590, %v2587
    %v2594 = vadd.f32 %v2376, 1.0
    %v2595 = vlog2.pop %v2594
    %v2596 = vmul.f32 %v2595, 0.6931472
    %v2597 = vmul.f32 -0.5, %v2376
    %v2598 = vadd.f32 %v2597, 1.0
    %v2599 = vmul.f32 %v2598, %v2376
    %v2600 = vand.u32 2147483647, %v2376
    %vm2601 = vcmp.lt.f32.partialorder %v2600, 0.0004427343
    %v2602 = vsel %vm2601, %v2599, %v2596
    %v2603 = vadd.f32 %v2378, 1.0
    %v2604 = vlog2.pop %v2603
    %v2605 = vmul.f32 %v2604, 0.6931472
    %v2606 = vmul.f32 -0.5, %v2378
    %v2607 = vadd.f32 %v2606, 1.0
    %v2608 = vmul.f32 %v2607, %v2378
    %v2609 = vand.u32 2147483647, %v2378
    %vm2610 = vcmp.lt.f32.partialorder %v2609, 0.0004427343
    %v2611 = vsel %vm2610, %v2608, %v2605
    %v2612 = vadd.f32 %v2380, 1.0
    %v2613 = vlog2.pop %v2612
    %v2614 = vmul.f32 %v2613, 0.6931472
    %v2615 = vmul.f32 -0.5, %v2380
    %v2616 = vadd.f32 %v2615, 1.0
    %v2617 = vmul.f32 %v2616, %v2380
    %v2618 = vand.u32 2147483647, %v2380
    %vm2619 = vcmp.lt.f32.partialorder %v2618, 0.0004427343
    %v2620 = vsel %vm2619, %v2617, %v2614
    %v2621 = vadd.f32 %v2382, 1.0
    %v2622 = vlog2.pop %v2621
    %v2623 = vmul.f32 %v2622, 0.6931472
    %v2624 = vmul.f32 -0.5, %v2382
    %v2625 = vadd.f32 %v2624, 1.0
    %v2626 = vmul.f32 %v2625, %v2382
    %v2627 = vand.u32 2147483647, %v2382
    %vm2628 = vcmp.lt.f32.partialorder %v2627, 0.0004427343
    %v2629 = vsel %vm2628, %v2626, %v2623
    %v2630 = vadd.f32 %v2384, 1.0
    %v2631 = vlog2.pop %v2630
    %v2632 = vmul.f32 %v2631, 0.6931472
    %v2633 = vmul.f32 -0.5, %v2384
    %v2634 = vadd.f32 %v2633, 1.0
    %v2635 = vmul.f32 %v2634, %v2384
    %v2636 = vand.u32 2147483647, %v2384
    %vm2637 = vcmp.lt.f32.partialorder %v2636, 0.0004427343
    %v2638 = vsel %vm2637, %v2635, %v2632
    %v2639 = vadd.f32 %v2386, 1.0
    %v2640 = vlog2.pop %v2639
    %v2641 = vmul.f32 %v2640, 0.6931472
    %v2642 = vmul.f32 -0.5, %v2386
    %v2643 = vadd.f32 %v2642, 1.0
    %v2644 = vmul.f32 %v2643, %v2386
    %v2645 = vand.u32 2147483647, %v2386
    %vm2646 = vcmp.lt.f32.partialorder %v2645, 0.0004427343
    %v2647 = vsel %vm2646, %v2644, %v2641
    %v2648 = vadd.f32 %v2388, 1.0
    %v2649 = vlog2.pop %v2648
    %v2650 = vmul.f32 %v2649, 0.6931472
    %v2651 = vmul.f32 -0.5, %v2388
    %v2652 = vadd.f32 %v2651, 1.0
    %v2653 = vmul.f32 %v2652, %v2388
    %v2654 = vand.u32 2147483647, %v2388
    %vm2655 = vcmp.lt.f32.partialorder %v2654, 0.0004427343
    %v2656 = vsel %vm2655, %v2653, %v2650
    %v2657 = vadd.f32 %v2390, 1.0
    %v2658 = vlog2.pop %v2657
    %v2659 = vmul.f32 %v2658, 0.6931472
    %v2660 = vmul.f32 -0.5, %v2390
    %v2661 = vadd.f32 %v2660, 1.0
    %v2662 = vmul.f32 %v2661, %v2390
    %v2663 = vand.u32 2147483647, %v2390
    %vm2664 = vcmp.lt.f32.partialorder %v2663, 0.0004427343
    %v2665 = vsel %vm2664, %v2662, %v2659
    %v2666 = vadd.f32 %v2392, 1.0
    %v2667 = vlog2.pop %v2666
    %v2668 = vmul.f32 %v2667, 0.6931472
    %v2669 = vmul.f32 -0.5, %v2392
    %v2670 = vadd.f32 %v2669, 1.0
    %v2671 = vmul.f32 %v2670, %v2392
    %v2672 = vand.u32 2147483647, %v2392
    %vm2673 = vcmp.lt.f32.partialorder %v2672, 0.0004427343
    %v2674 = vsel %vm2673, %v2671, %v2668
    %v2675 = vadd.f32 %v2394, 1.0
    %v2676 = vlog2.pop %v2675
    %v2677 = vmul.f32 %v2676, 0.6931472
    %v2678 = vmul.f32 -0.5, %v2394
    %v2679 = vadd.f32 %v2678, 1.0
    %v2680 = vmul.f32 %v2679, %v2394
    %v2681 = vand.u32 2147483647, %v2394
    %vm2682 = vcmp.lt.f32.partialorder %v2681, 0.0004427343
    %v2683 = vsel %vm2682, %v2680, %v2677
    %v2684 = vadd.f32 %v2396, 1.0
    %v2685 = vlog2.pop %v2684
    %v2686 = vmul.f32 %v2685, 0.6931472
    %v2687 = vmul.f32 -0.5, %v2396
    %v2688 = vadd.f32 %v2687, 1.0
    %v2689 = vmul.f32 %v2688, %v2396
    %v2690 = vand.u32 2147483647, %v2396
    %vm2691 = vcmp.lt.f32.partialorder %v2690, 0.0004427343
    %v2692 = vsel %vm2691, %v2689, %v2686
    %v2693 = vadd.f32 %v2398, 1.0
    %v2694 = vlog2.pop %v2693
    %v2695 = vmul.f32 %v2694, 0.6931472
    %v2696 = vmul.f32 -0.5, %v2398
    %v2697 = vadd.f32 %v2696, 1.0
    %v2698 = vmul.f32 %v2697, %v2398
    %v2699 = vand.u32 2147483647, %v2398
    %vm2700 = vcmp.lt.f32.partialorder %v2699, 0.0004427343
    %v2701 = vsel %vm2700, %v2698, %v2695
    %v2702 = vadd.f32 %v2400, 1.0
    %v2703 = vlog2.pop %v2702
    %v2704 = vmul.f32 %v2703, 0.6931472
    %v2705 = vmul.f32 -0.5, %v2400
    %v2706 = vadd.f32 %v2705, 1.0
    %v2707 = vmul.f32 %v2706, %v2400
    %v2708 = vand.u32 2147483647, %v2400
    %vm2709 = vcmp.lt.f32.partialorder %v2708, 0.0004427343
    %v2710 = vsel %vm2709, %v2707, %v2704
    %v2711 = vadd.f32 %v2402, 1.0
    %v2712 = vlog2.pop %v2711
    %v2713 = vmul.f32 %v2712, 0.6931472
    %v2714 = vmul.f32 -0.5, %v2402
    %v2715 = vadd.f32 %v2714, 1.0
    %v2716 = vmul.f32 %v2715, %v2402
    %v2717 = vand.u32 2147483647, %v2402
    %vm2718 = vcmp.lt.f32.partialorder %v2717, 0.0004427343
    %v2719 = vsel %vm2718, %v2716, %v2713
    %v2720 = vadd.f32 %v2404, 1.0
    %v2721 = vlog2.pop %v2720
    %v2722 = vmul.f32 %v2721, 0.6931472
    %v2723 = vmul.f32 -0.5, %v2404
    %v2724 = vadd.f32 %v2723, 1.0
    %v2725 = vmul.f32 %v2724, %v2404
    %v2726 = vand.u32 2147483647, %v2404
    %vm2727 = vcmp.lt.f32.partialorder %v2726, 0.0004427343
    %v2728 = vsel %vm2727, %v2725, %v2722
    %v2729 = vadd.f32 %v2406, 1.0
    %v2730 = vlog2.pop %v2729
    %v2731 = vmul.f32 %v2730, 0.6931472
    %v2732 = vmul.f32 -0.5, %v2406
    %v2733 = vadd.f32 %v2732, 1.0
    %v2734 = vmul.f32 %v2733, %v2406
    %v2735 = vand.u32 2147483647, %v2406
    %vm2736 = vcmp.lt.f32.partialorder %v2735, 0.0004427343
    %v2737 = vsel %vm2736, %v2734, %v2731
    %v2738 = vadd.f32 %v2408, 1.0
    %v2739 = vlog2.pop %v2738
    %v2740 = vmul.f32 %v2739, 0.6931472
    %v2741 = vmul.f32 -0.5, %v2408
    %v2742 = vadd.f32 %v2741, 1.0
    %v2743 = vmul.f32 %v2742, %v2408
    %v2744 = vand.u32 2147483647, %v2408
    %vm2745 = vcmp.lt.f32.partialorder %v2744, 0.0004427343
    %v2746 = vsel %vm2745, %v2743, %v2740
    %v2747 = vadd.f32 %v2410, 1.0
    %v2748 = vlog2.pop %v2747
    %v2749 = vmul.f32 %v2748, 0.6931472
    %v2750 = vmul.f32 -0.5, %v2410
    %v2751 = vadd.f32 %v2750, 1.0
    %v2752 = vmul.f32 %v2751, %v2410
    %v2753 = vand.u32 2147483647, %v2410
    %vm2754 = vcmp.lt.f32.partialorder %v2753, 0.0004427343
    %v2755 = vsel %vm2754, %v2752, %v2749
    %v2756 = vadd.f32 %v2412, 1.0
    %v2757 = vlog2.pop %v2756
    %v2758 = vmul.f32 %v2757, 0.6931472
    %v2759 = vmul.f32 -0.5, %v2412
    %v2760 = vadd.f32 %v2759, 1.0
    %v2761 = vmul.f32 %v2760, %v2412
    %v2762 = vand.u32 2147483647, %v2412
    %vm2763 = vcmp.lt.f32.partialorder %v2762, 0.0004427343
    %v2764 = vsel %vm2763, %v2761, %v2758
    %v2765 = vadd.f32 %v2414, 1.0
    %v2766 = vlog2.pop %v2765
    %v2767 = vmul.f32 %v2766, 0.6931472
    %v2768 = vmul.f32 -0.5, %v2414
    %v2769 = vadd.f32 %v2768, 1.0
    %v2770 = vmul.f32 %v2769, %v2414
    %v2771 = vand.u32 2147483647, %v2414
    %vm2772 = vcmp.lt.f32.partialorder %v2771, 0.0004427343
    %v2773 = vsel %vm2772, %v2770, %v2767
    %v2774 = vadd.f32 %v2416, 1.0
    %v2775 = vlog2.pop %v2774
    %v2776 = vmul.f32 %v2775, 0.6931472
    %v2777 = vmul.f32 -0.5, %v2416
    %v2778 = vadd.f32 %v2777, 1.0
    %v2779 = vmul.f32 %v2778, %v2416
    %v2780 = vand.u32 2147483647, %v2416
    %vm2781 = vcmp.lt.f32.partialorder %v2780, 0.0004427343
    %v2782 = vsel %vm2781, %v2779, %v2776
    %v2783 = vadd.f32 %v2418, 1.0
    %v2784 = vlog2.pop %v2783
    %v2785 = vmul.f32 %v2784, 0.6931472
    %v2786 = vmul.f32 -0.5, %v2418
    %v2787 = vadd.f32 %v2786, 1.0
    %v2788 = vmul.f32 %v2787, %v2418
    %v2789 = vand.u32 2147483647, %v2418
    %vm2790 = vcmp.lt.f32.partialorder %v2789, 0.0004427343
    %v2791 = vsel %vm2790, %v2788, %v2785
    %v2792 = vadd.f32 %v2420, 1.0
    %v2793 = vlog2.pop %v2792
    %v2794 = vmul.f32 %v2793, 0.6931472
    %v2795 = vmul.f32 -0.5, %v2420
    %v2796 = vadd.f32 %v2795, 1.0
    %v2797 = vmul.f32 %v2796, %v2420
    %v2798 = vand.u32 2147483647, %v2420
    %vm2799 = vcmp.lt.f32.partialorder %v2798, 0.0004427343
    %v2800 = vsel %vm2799, %v2797, %v2794
    %v2801 = vadd.f32 %v2422, 1.0
    %v2802 = vlog2.pop %v2801
    %v2803 = vmul.f32 %v2802, 0.6931472
    %v2804 = vmul.f32 -0.5, %v2422
    %v2805 = vadd.f32 %v2804, 1.0
    %v2806 = vmul.f32 %v2805, %v2422
    %v2807 = vand.u32 2147483647, %v2422
    %vm2808 = vcmp.lt.f32.partialorder %v2807, 0.0004427343
    %v2809 = vsel %vm2808, %v2806, %v2803
    %v2810 = vadd.f32 %v2424, 1.0
    %v2811 = vlog2.pop %v2810
    %v2812 = vmul.f32 %v2811, 0.6931472
    %v2813 = vmul.f32 -0.5, %v2424
    %v2814 = vadd.f32 %v2813, 1.0
    %v2815 = vmul.f32 %v2814, %v2424
    %v2816 = vand.u32 2147483647, %v2424
    %vm2817 = vcmp.lt.f32.partialorder %v2816, 0.0004427343
    %v2818 = vsel %vm2817, %v2815, %v2812
    %v2819 = vadd.f32 %v2426, 1.0
    %v2820 = vlog2.pop %v2819
    %v2821 = vmul.f32 %v2820, 0.6931472
    %v2822 = vmul.f32 -0.5, %v2426
    %v2823 = vadd.f32 %v2822, 1.0
    %v2824 = vmul.f32 %v2823, %v2426
    %v2825 = vand.u32 2147483647, %v2426
    %vm2826 = vcmp.lt.f32.partialorder %v2825, 0.0004427343
    %v2827 = vsel %vm2826, %v2824, %v2821
    %v2828 = vadd.f32 %v2428, 1.0
    %v2829 = vlog2.pop %v2828
    %v2830 = vmul.f32 %v2829, 0.6931472
    %v2831 = vmul.f32 -0.5, %v2428
    %v2832 = vadd.f32 %v2831, 1.0
    %v2833 = vmul.f32 %v2832, %v2428
    %v2834 = vand.u32 2147483647, %v2428
    %vm2835 = vcmp.lt.f32.partialorder %v2834, 0.0004427343
    %v2836 = vsel %vm2835, %v2833, %v2830
    %v2837 = vadd.f32 %v2430, 1.0
    %v2838 = vlog2.pop %v2837
    %v2839 = vmul.f32 %v2838, 0.6931472
    %v2840 = vmul.f32 -0.5, %v2430
    %v2841 = vadd.f32 %v2840, 1.0
    %v2842 = vmul.f32 %v2841, %v2430
    %v2843 = vand.u32 2147483647, %v2430
    %vm2844 = vcmp.lt.f32.partialorder %v2843, 0.0004427343
    %v2845 = vsel %vm2844, %v2842, %v2839
    %v2846 = vadd.f32 %v2432, 1.0
    %v2847 = vlog2.pop %v2846
    %v2848 = vmul.f32 %v2847, 0.6931472
    %v2849 = vmul.f32 -0.5, %v2432
    %v2850 = vadd.f32 %v2849, 1.0
    %v2851 = vmul.f32 %v2850, %v2432
    %v2852 = vand.u32 2147483647, %v2432
    %vm2853 = vcmp.lt.f32.partialorder %v2852, 0.0004427343
    %v2854 = vsel %vm2853, %v2851, %v2848
    %v2855 = vadd.f32 %v2434, 1.0
    %v2856 = vlog2.pop %v2855
    %v2857 = vmul.f32 %v2856, 0.6931472
    %v2858 = vmul.f32 -0.5, %v2434
    %v2859 = vadd.f32 %v2858, 1.0
    %v2860 = vmul.f32 %v2859, %v2434
    %v2861 = vand.u32 2147483647, %v2434
    %vm2862 = vcmp.lt.f32.partialorder %v2861, 0.0004427343
    %v2863 = vsel %vm2862, %v2860, %v2857
    %v2864 = vadd.f32 %v2436, 1.0
    %v2865 = vlog2.pop %v2864
    %v2866 = vmul.f32 %v2865, 0.6931472
    %v2867 = vmul.f32 -0.5, %v2436
    %v2868 = vadd.f32 %v2867, 1.0
    %v2869 = vmul.f32 %v2868, %v2436
    %v2870 = vand.u32 2147483647, %v2436
    %vm2871 = vcmp.lt.f32.partialorder %v2870, 0.0004427343
    %v2872 = vsel %vm2871, %v2869, %v2866
    %v2873 = vadd.f32 %v2438, 1.0
    %v2874 = vlog2.pop %v2873
    %v2875 = vmul.f32 %v2874, 0.6931472
    %v2876 = vmul.f32 -0.5, %v2438
    %v2877 = vadd.f32 %v2876, 1.0
    %v2878 = vmul.f32 %v2877, %v2438
    %v2879 = vand.u32 2147483647, %v2438
    %vm2880 = vcmp.lt.f32.partialorder %v2879, 0.0004427343
    %v2881 = vsel %vm2880, %v2878, %v2875
    %v2882 = vadd.f32 %v2440, 1.0
    %v2883 = vlog2.pop %v2882
    %v2884 = vmul.f32 %v2883, 0.6931472
    %v2885 = vmul.f32 -0.5, %v2440
    %v2886 = vadd.f32 %v2885, 1.0
    %v2887 = vmul.f32 %v2886, %v2440
    %v2888 = vand.u32 2147483647, %v2440
    %vm2889 = vcmp.lt.f32.partialorder %v2888, 0.0004427343
    %v2890 = vsel %vm2889, %v2887, %v2884
    %v2891 = vadd.f32 %v2442, 1.0
    %v2892 = vlog2.pop %v2891
    %v2893 = vmul.f32 %v2892, 0.6931472
    %v2894 = vmul.f32 -0.5, %v2442
    %v2895 = vadd.f32 %v2894, 1.0
    %v2896 = vmul.f32 %v2895, %v2442
    %v2897 = vand.u32 2147483647, %v2442
    %vm2898 = vcmp.lt.f32.partialorder %v2897, 0.0004427343
    %v2899 = vsel %vm2898, %v2896, %v2893
    %v2900 = vadd.f32 %v2444, 1.0
    %v2901 = vlog2.pop %v2900
    %v2902 = vmul.f32 %v2901, 0.6931472
    %v2903 = vmul.f32 -0.5, %v2444
    %v2904 = vadd.f32 %v2903, 1.0
    %v2905 = vmul.f32 %v2904, %v2444
    %v2906 = vand.u32 2147483647, %v2444
    %vm2907 = vcmp.lt.f32.partialorder %v2906, 0.0004427343
    %v2908 = vsel %vm2907, %v2905, %v2902
    %v2909 = vadd.f32 %v2446, 1.0
    %v2910 = vlog2.pop %v2909
    %v2911 = vmul.f32 %v2910, 0.6931472
    %v2912 = vmul.f32 -0.5, %v2446
    %v2913 = vadd.f32 %v2912, 1.0
    %v2914 = vmul.f32 %v2913, %v2446
    %v2915 = vand.u32 2147483647, %v2446
    %vm2916 = vcmp.lt.f32.partialorder %v2915, 0.0004427343
    %v2917 = vsel %vm2916, %v2914, %v2911
    %v2918 = vadd.f32 %v2448, 1.0
    %v2919 = vlog2.pop %v2918
    %v2920 = vmul.f32 %v2919, 0.6931472
    %v2921 = vmul.f32 -0.5, %v2448
    %v2922 = vadd.f32 %v2921, 1.0
    %v2923 = vmul.f32 %v2922, %v2448
    %v2924 = vand.u32 2147483647, %v2448
    %vm2925 = vcmp.lt.f32.partialorder %v2924, 0.0004427343
    %v2926 = vsel %vm2925, %v2923, %v2920
    %v2927 = vadd.f32 %v2450, 1.0
    %v2928 = vlog2.pop %v2927
    %v2929 = vmul.f32 %v2928, 0.6931472
    %v2930 = vmul.f32 -0.5, %v2450
    %v2931 = vadd.f32 %v2930, 1.0
    %v2932 = vmul.f32 %v2931, %v2450
    %v2933 = vand.u32 2147483647, %v2450
    %vm2934 = vcmp.lt.f32.partialorder %v2933, 0.0004427343
    %v2935 = vsel %vm2934, %v2932, %v2929
    %v2936 = vadd.f32 %v2452, 1.0
    %v2937 = vlog2.pop %v2936
    %v2938 = vmul.f32 %v2937, 0.6931472
    %v2939 = vmul.f32 -0.5, %v2452
    %v2940 = vadd.f32 %v2939, 1.0
    %v2941 = vmul.f32 %v2940, %v2452
    %v2942 = vand.u32 2147483647, %v2452
    %vm2943 = vcmp.lt.f32.partialorder %v2942, 0.0004427343
    %v2944 = vsel %vm2943, %v2941, %v2938
    %v2945 = vadd.f32 %v2454, 1.0
    %v2946 = vlog2.pop %v2945
    %v2947 = vmul.f32 %v2946, 0.6931472
    %v2948 = vmul.f32 -0.5, %v2454
    %v2949 = vadd.f32 %v2948, 1.0
    %v2950 = vmul.f32 %v2949, %v2454
    %v2951 = vand.u32 2147483647, %v2454
    %vm2952 = vcmp.lt.f32.partialorder %v2951, 0.0004427343
    %v2953 = vsel %vm2952, %v2950, %v2947
    %v2954 = vadd.f32 %v2456, 1.0
    %v2955 = vlog2.pop %v2954
    %v2956 = vmul.f32 %v2955, 0.6931472
    %v2957 = vmul.f32 -0.5, %v2456
    %v2958 = vadd.f32 %v2957, 1.0
    %v2959 = vmul.f32 %v2958, %v2456
    %v2960 = vand.u32 2147483647, %v2456
    %vm2961 = vcmp.lt.f32.partialorder %v2960, 0.0004427343
    %v2962 = vsel %vm2961, %v2959, %v2956
    %v2963 = vadd.f32 %v2458, 1.0
    %v2964 = vlog2.pop %v2963
    %v2965 = vmul.f32 %v2964, 0.6931472
    %v2966 = vmul.f32 -0.5, %v2458
    %v2967 = vadd.f32 %v2966, 1.0
    %v2968 = vmul.f32 %v2967, %v2458
    %v2969 = vand.u32 2147483647, %v2458
    %vm2970 = vcmp.lt.f32.partialorder %v2969, 0.0004427343
    %v2971 = vsel %vm2970, %v2968, %v2965
    %v2972 = vadd.f32 %v2460, 1.0
    %v2973 = vlog2.pop %v2972
    %v2974 = vmul.f32 %v2973, 0.6931472
    %v2975 = vmul.f32 -0.5, %v2460
    %v2976 = vadd.f32 %v2975, 1.0
    %v2977 = vmul.f32 %v2976, %v2460
    %v2978 = vand.u32 2147483647, %v2460
    %vm2979 = vcmp.lt.f32.partialorder %v2978, 0.0004427343
    %v2980 = vsel %vm2979, %v2977, %v2974
    %v2981 = vadd.f32 %v2462, 1.0
    %v2982 = vlog2.pop %v2981
    %v2983 = vmul.f32 %v2982, 0.6931472
    %v2984 = vmul.f32 -0.5, %v2462
    %v2985 = vadd.f32 %v2984, 1.0
    %v2986 = vmul.f32 %v2985, %v2462
    %v2987 = vand.u32 2147483647, %v2462
    %vm2988 = vcmp.lt.f32.partialorder %v2987, 0.0004427343
    %v2989 = vsel %vm2988, %v2986, %v2983
    %v2990 = vadd.f32 %v2464, 1.0
    %v2991 = vlog2.pop %v2990
    %v2992 = vmul.f32 %v2991, 0.6931472
    %v2993 = vmul.f32 -0.5, %v2464
    %v2994 = vadd.f32 %v2993, 1.0
    %v2995 = vmul.f32 %v2994, %v2464
    %v2996 = vand.u32 2147483647, %v2464
    %vm2997 = vcmp.lt.f32.partialorder %v2996, 0.0004427343
    %v2998 = vsel %vm2997, %v2995, %v2992
    %v2999 = vadd.f32 %v2466, 1.0
    %v3000 = vlog2.pop %v2999
    %v3001 = vmul.f32 %v3000, 0.6931472
    %v3002 = vmul.f32 -0.5, %v2466
    %v3003 = vadd.f32 %v3002, 1.0
    %v3004 = vmul.f32 %v3003, %v2466
    %v3005 = vand.u32 2147483647, %v2466
    %vm3006 = vcmp.lt.f32.partialorder %v3005, 0.0004427343
    %v3007 = vsel %vm3006, %v3004, %v3001
    %v3008 = vadd.f32 %v2468, 1.0
    %v3009 = vlog2.pop %v3008
    %v3010 = vmul.f32 %v3009, 0.6931472
    %v3011 = vmul.f32 -0.5, %v2468
    %v3012 = vadd.f32 %v3011, 1.0
    %v3013 = vmul.f32 %v3012, %v2468
    %v3014 = vand.u32 2147483647, %v2468
    %vm3015 = vcmp.lt.f32.partialorder %v3014, 0.0004427343
    %v3016 = vsel %vm3015, %v3013, %v3010
    %v3017 = vadd.f32 %v2470, 1.0
    %v3018 = vlog2.pop %v3017
    %v3019 = vmul.f32 %v3018, 0.6931472
    %v3020 = vmul.f32 -0.5, %v2470
    %v3021 = vadd.f32 %v3020, 1.0
    %v3022 = vmul.f32 %v3021, %v2470
    %v3023 = vand.u32 2147483647, %v2470
    %vm3024 = vcmp.lt.f32.partialorder %v3023, 0.0004427343
    %v3025 = vsel %vm3024, %v3022, %v3019
    %v3026 = vadd.f32 %v2472, 1.0
    %v3027 = vlog2.pop %v3026
    %v3028 = vmul.f32 %v3027, 0.6931472
    %v3029 = vmul.f32 -0.5, %v2472
    %v3030 = vadd.f32 %v3029, 1.0
    %v3031 = vmul.f32 %v3030, %v2472
    %v3032 = vand.u32 2147483647, %v2472
    %vm3033 = vcmp.lt.f32.partialorder %v3032, 0.0004427343
    %v3034 = vsel %vm3033, %v3031, %v3028
    %v3035 = vadd.f32 %v2474, 1.0
    %v3036 = vlog2.pop %v3035
    %v3037 = vmul.f32 %v3036, 0.6931472
    %v3038 = vmul.f32 -0.5, %v2474
    %v3039 = vadd.f32 %v3038, 1.0
    %v3040 = vmul.f32 %v3039, %v2474
    %v3041 = vand.u32 2147483647, %v2474
    %vm3042 = vcmp.lt.f32.partialorder %v3041, 0.0004427343
    %v3043 = vsel %vm3042, %v3040, %v3037
    %v3044 = vadd.f32 %v2476, 1.0
    %v3045 = vlog2.pop %v3044
    %v3046 = vmul.f32 %v3045, 0.6931472
    %v3047 = vmul.f32 -0.5, %v2476
    %v3048 = vadd.f32 %v3047, 1.0
    %v3049 = vmul.f32 %v3048, %v2476
    %v3050 = vand.u32 2147483647, %v2476
    %vm3051 = vcmp.lt.f32.partialorder %v3050, 0.0004427343
    %v3052 = vsel %vm3051, %v3049, %v3046
    %v3053 = vadd.f32 %v2157, %v2485
    %v3054 = vadd.f32 %v2158, %v2494
    %v3055 = vadd.f32 %v2159, %v2503
    %v3056 = vadd.f32 %v2160, %v2512
    %v3057 = vadd.f32 %v2161, %v2521
    %v3058 = vadd.f32 %v2162, %v2530
    %v3059 = vadd.f32 %v2163, %v2539
    %v3060 = vadd.f32 %v2164, %v2548
    %v3061 = vadd.f32 %v2165, %v2557
    %v3062 = vadd.f32 %v2166, %v2566
    %v3063 = vadd.f32 %v2167, %v2575
    %v3064 = vadd.f32 %v2168, %v2584
    %v3065 = vadd.f32 %v2169, %v2593
    %v3066 = vadd.f32 %v2170, %v2602
    %v3067 = vadd.f32 %v2171, %v2611
    %v3068 = vadd.f32 %v2172, %v2620
    %v3069 = vadd.f32 %v2173, %v2629
    %v3070 = vadd.f32 %v2174, %v2638
    %v3071 = vadd.f32 %v2175, %v2647
    %v3072 = vadd.f32 %v2176, %v2656
    %v3073 = vadd.f32 %v2177, %v2665
    %v3074 = vadd.f32 %v2178, %v2674
    %v3075 = vadd.f32 %v2179, %v2683
    %v3076 = vadd.f32 %v2180, %v2692
    %v3077 = vadd.f32 %v2181, %v2701
    %v3078 = vadd.f32 %v2182, %v2710
    %v3079 = vadd.f32 %v2183, %v2719
    %v3080 = vadd.f32 %v2184, %v2728
    %v3081 = vadd.f32 %v2185, %v2737
    %v3082 = vadd.f32 %v2186, %v2746
    %v3083 = vadd.f32 %v2187, %v2755
    %v3084 = vadd.f32 %v2188, %v2764
    %v3085 = vadd.f32 %v2189, %v2773
    %v3086 = vadd.f32 %v2190, %v2782
    %v3087 = vadd.f32 %v2191, %v2791
    %v3088 = vadd.f32 %v2192, %v2800
    %v3089 = vadd.f32 %v2193, %v2809
    %v3090 = vadd.f32 %v2194, %v2818
    %v3091 = vadd.f32 %v2195, %v2827
    %v3092 = vadd.f32 %v2196, %v2836
    %v3093 = vadd.f32 %v2197, %v2845
    %v3094 = vadd.f32 %v2198, %v2854
    %v3095 = vadd.f32 %v2199, %v2863
    %v3096 = vadd.f32 %v2200, %v2872
    %v3097 = vadd.f32 %v2201, %v2881
    %v3098 = vadd.f32 %v2202, %v2890
    %v3099 = vadd.f32 %v2203, %v2899
    %v3100 = vadd.f32 %v2204, %v2908
    %v3101 = vadd.f32 %v2205, %v2917
    %v3102 = vadd.f32 %v2206, %v2926
    %v3103 = vadd.f32 %v2207, %v2935
    %v3104 = vadd.f32 %v2208, %v2944
    %v3105 = vadd.f32 %v2209, %v2953
    %v3106 = vadd.f32 %v2210, %v2962
    %v3107 = vadd.f32 %v2211, %v2971
    %v3108 = vadd.f32 %v2212, %v2980
    %v3109 = vadd.f32 %v2213, %v2989
    %v3110 = vadd.f32 %v2214, %v2998
    %v3111 = vadd.f32 %v2215, %v3007
    %v3112 = vadd.f32 %v2216, %v3016
    %v3113 = vadd.f32 %v2217, %v3025
    %v3114 = vadd.f32 %v2218, %v3034
    %v3115 = vadd.f32 %v2219, %v3043
    %v3116 = vadd.f32 %v2220, %v3052
    %v3117 = vsub.f32 %v3053, 0.6931472
    %v3118 = vsub.f32 %v3054, 0.6931472
    %v3119 = vsub.f32 %v3055, 0.6931472
    %v3120 = vsub.f32 %v3056, 0.6931472
    %v3121 = vsub.f32 %v3057, 0.6931472
    %v3122 = vsub.f32 %v3058, 0.6931472
    %v3123 = vsub.f32 %v3059, 0.6931472
    %v3124 = vsub.f32 %v3060, 0.6931472
    %v3125 = vsub.f32 %v3061, 0.6931472
    %v3126 = vsub.f32 %v3062, 0.6931472
    %v3127 = vsub.f32 %v3063, 0.6931472
    %v3128 = vsub.f32 %v3064, 0.6931472
    %v3129 = vsub.f32 %v3065, 0.6931472
    %v3130 = vsub.f32 %v3066, 0.6931472
    %v3131 = vsub.f32 %v3067, 0.6931472
    %v3132 = vsub.f32 %v3068, 0.6931472
    %v3133 = vsub.f32 %v3069, 0.6931472
    %v3134 = vsub.f32 %v3070, 0.6931472
    %v3135 = vsub.f32 %v3071, 0.6931472
    %v3136 = vsub.f32 %v3072, 0.6931472
    %v3137 = vsub.f32 %v3073, 0.6931472
    %v3138 = vsub.f32 %v3074, 0.6931472
    %v3139 = vsub.f32 %v3075, 0.6931472
    %v3140 = vsub.f32 %v3076, 0.6931472
    %v3141 = vsub.f32 %v3077, 0.6931472
    %v3142 = vsub.f32 %v3078, 0.6931472
    %v3143 = vsub.f32 %v3079, 0.6931472
    %v3144 = vsub.f32 %v3080, 0.6931472
    %v3145 = vsub.f32 %v3081, 0.6931472
    %v3146 = vsub.f32 %v3082, 0.6931472
    %v3147 = vsub.f32 %v3083, 0.6931472
    %v3148 = vsub.f32 %v3084, 0.6931472
    %v3149 = vsub.f32 %v3085, 0.6931472
    %v3150 = vsub.f32 %v3086, 0.6931472
    %v3151 = vsub.f32 %v3087, 0.6931472
    %v3152 = vsub.f32 %v3088, 0.6931472
    %v3153 = vsub.f32 %v3089, 0.6931472
    %v3154 = vsub.f32 %v3090, 0.6931472
    %v3155 = vsub.f32 %v3091, 0.6931472
    %v3156 = vsub.f32 %v3092, 0.6931472
    %v3157 = vsub.f32 %v3093, 0.6931472
    %v3158 = vsub.f32 %v3094, 0.6931472
    %v3159 = vsub.f32 %v3095, 0.6931472
    %v3160 = vsub.f32 %v3096, 0.6931472
    %v3161 = vsub.f32 %v3097, 0.6931472
    %v3162 = vsub.f32 %v3098, 0.6931472
    %v3163 = vsub.f32 %v3099, 0.6931472
    %v3164 = vsub.f32 %v3100, 0.6931472
    %v3165 = vsub.f32 %v3101, 0.6931472
    %v3166 = vsub.f32 %v3102, 0.6931472
    %v3167 = vsub.f32 %v3103, 0.6931472
    %v3168 = vsub.f32 %v3104, 0.6931472
    %v3169 = vsub.f32 %v3105, 0.6931472
    %v3170 = vsub.f32 %v3106, 0.6931472
    %v3171 = vsub.f32 %v3107, 0.6931472
    %v3172 = vsub.f32 %v3108, 0.6931472
    %v3173 = vsub.f32 %v3109, 0.6931472
    %v3174 = vsub.f32 %v3110, 0.6931472
    %v3175 = vsub.f32 %v3111, 0.6931472
    %v3176 = vsub.f32 %v3112, 0.6931472
    %v3177 = vsub.f32 %v3113, 0.6931472
    %v3178 = vsub.f32 %v3114, 0.6931472
    %v3179 = vsub.f32 %v3115, 0.6931472
    %v3180 = vsub.f32 %v3116, 0.6931472
    %v3181 = vmul.f32 %v3117, 2.0
    %v3182 = vmul.f32 %v3118, 2.0
    %v3183 = vmul.f32 %v3119, 2.0
    %v3184 = vmul.f32 %v3120, 2.0
    %v3185 = vmul.f32 %v3121, 2.0
    %v3186 = vmul.f32 %v3122, 2.0
    %v3187 = vmul.f32 %v3123, 2.0
    %v3188 = vmul.f32 %v3124, 2.0
    %v3189 = vmul.f32 %v3125, 2.0
    %v3190 = vmul.f32 %v3126, 2.0
    %v3191 = vmul.f32 %v3127, 2.0
    %v3192 = vmul.f32 %v3128, 2.0
    %v3193 = vmul.f32 %v3129, 2.0
    %v3194 = vmul.f32 %v3130, 2.0
    %v3195 = vmul.f32 %v3131, 2.0
    %v3196 = vmul.f32 %v3132, 2.0
    %v3197 = vmul.f32 %v3133, 2.0
    %v3198 = vmul.f32 %v3134, 2.0
    %v3199 = vmul.f32 %v3135, 2.0
    %v3200 = vmul.f32 %v3136, 2.0
    %v3201 = vmul.f32 %v3137, 2.0
    %v3202 = vmul.f32 %v3138, 2.0
    %v3203 = vmul.f32 %v3139, 2.0
    %v3204 = vmul.f32 %v3140, 2.0
    %v3205 = vmul.f32 %v3141, 2.0
    %v3206 = vmul.f32 %v3142, 2.0
    %v3207 = vmul.f32 %v3143, 2.0
    %v3208 = vmul.f32 %v3144, 2.0
    %v3209 = vmul.f32 %v3145, 2.0
    %v3210 = vmul.f32 %v3146, 2.0
    %v3211 = vmul.f32 %v3147, 2.0
    %v3212 = vmul.f32 %v3148, 2.0
    %v3213 = vmul.f32 %v3149, 2.0
    %v3214 = vmul.f32 %v3150, 2.0
    %v3215 = vmul.f32 %v3151, 2.0
    %v3216 = vmul.f32 %v3152, 2.0
    %v3217 = vmul.f32 %v3153, 2.0
    %v3218 = vmul.f32 %v3154, 2.0
    %v3219 = vmul.f32 %v3155, 2.0
    %v3220 = vmul.f32 %v3156, 2.0
    %v3221 = vmul.f32 %v3157, 2.0
    %v3222 = vmul.f32 %v3158, 2.0
    %v3223 = vmul.f32 %v3159, 2.0
    %v3224 = vmul.f32 %v3160, 2.0
    %v3225 = vmul.f32 %v3161, 2.0
    %v3226 = vmul.f32 %v3162, 2.0
    %v3227 = vmul.f32 %v3163, 2.0
    %v3228 = vmul.f32 %v3164, 2.0
    %v3229 = vmul.f32 %v3165, 2.0
    %v3230 = vmul.f32 %v3166, 2.0
    %v3231 = vmul.f32 %v3167, 2.0
    %v3232 = vmul.f32 %v3168, 2.0
    %v3233 = vmul.f32 %v3169, 2.0
    %v3234 = vmul.f32 %v3170, 2.0
    %v3235 = vmul.f32 %v3171, 2.0
    %v3236 = vmul.f32 %v3172, 2.0
    %v3237 = vmul.f32 %v3173, 2.0
    %v3238 = vmul.f32 %v3174, 2.0
    %v3239 = vmul.f32 %v3175, 2.0
    %v3240 = vmul.f32 %v3176, 2.0
    %v3241 = vmul.f32 %v3177, 2.0
    %v3242 = vmul.f32 %v3178, 2.0
    %v3243 = vmul.f32 %v3179, 2.0
    %v3244 = vmul.f32 %v3180, 2.0
    %v3245 = vld [vmem:[%s1 + $0x88] sm:$0xff]
    %v3246 = vld [vmem:[%s1 + $0x90] sm:$0xff]
    %v3247 = vld [vmem:[%s1 + $0x98] sm:$0xff]
    %v3248 = vld [vmem:[%s1 + $0xa0] sm:$0xff]
    %v3249 = vld [vmem:[%s1 + $0xa8] sm:$0xff]
    %v3250 = vld [vmem:[%s1 + $0xb0] sm:$0xff]
    %v3251 = vld [vmem:[%s1 + $0xb8] sm:$0xff]
    %v3252 = vld [vmem:[%s1 + $0xc0] sm:$0xff]
    %v3253 = vld [vmem:[%s1 + $0xc8] sm:$0xff]
    %v3254 = vld [vmem:[%s1 + $0xd0] sm:$0xff]
    %v3255 = vld [vmem:[%s1 + $0xd8] sm:$0xff]
    %v3256 = vld [vmem:[%s1 + $0xe0] sm:$0xff]
    %v3257 = vld [vmem:[%s1 + $0xe8] sm:$0xff]
    %v3258 = vld [vmem:[%s1 + $0xf0] sm:$0xff]
    %v3259 = vld [vmem:[%s1 + $0xf8] sm:$0xff]
    %v3260 = vld [vmem:[%s1 + $0x100] sm:$0xff]
    %v3261 = vld [vmem:[%s2 + $0x2] sm:$0x1]
    %v3262 = vlaneseq
    %v3263 = vshrl.u32 %v3262, 7
    %v3264 = vsub.s32 0, %v3263
    %v3265 = vrot.slane %v3261, %v3264
    %3266 = vmatprep.subr.mxu0 0.0
    %3267 = vmatpush1.msra.mxu0 %v3260
    %3268 = vmatprep.subr.mxu0 0.0
    %3269 = vmatpush1.msra.mxu0 %v3259
    %3270 = vmatprep.subr.mxu0 0.0
    %3271 = vmatpush1.msra.mxu0 %v3258
    %3272 = vmatprep.subr.mxu0 0.0
    %3273 = vmatpush1.msra.mxu0 %v3257
    %3274 = vmatprep.subr.mxu0 0.0
    %3275 = vmatpush1.msra.mxu0 %v3256
    %3276 = vmatprep.subr.mxu0 0.0
    %3277 = vmatpush1.msra.mxu0 %v3255
    %3278 = vmatprep.subr.mxu0 0.0
    %3279 = vmatpush1.msra.mxu0 %v3254
    %3280 = vmatprep.subr.mxu0 0.0
    %3281 = vmatpush1.msra.mxu0 %v3253
    %3282 = vmatprep.subr.mxu0 0.0
    %3283 = vmatpush1.msra.mxu0 %v3252
    %3284 = vmatprep.subr.mxu0 0.0
    %3285 = vmatpush1.msra.mxu0 %v3251
    %3286 = vmatprep.subr.mxu0 0.0
    %3287 = vmatpush1.msra.mxu0 %v3250
    %3288 = vmatprep.subr.mxu0 0.0
    %3289 = vmatpush1.msra.mxu0 %v3249
    %3290 = vmatprep.subr.mxu0 0.0
    %3291 = vmatpush1.msra.mxu0 %v3248
    %3292 = vmatprep.subr.mxu0 0.0
    %3293 = vmatpush1.msra.mxu0 %v3247
    %3294 = vmatprep.subr.mxu0 0.0
    %3295 = vmatpush1.msra.mxu0 %v3246
    %3296 = vmatprep.subr.mxu0 0.0
    %3297 = vmatpush1.msra.mxu0 %v3245
    %3298 = vmatprep.subr.mxu0 0.0
    %3299 = vmatpush2.msra.mxu0 0.0
    %3300 = vmatprep.subr.mxu0 0.0
    %3301 = vmatpush2.msra.mxu0 0.0
    %3302 = vmatprep.subr.mxu0 0.0
    %3303 = vmatpush2.msra.mxu0 0.0
    %3304 = vmatprep.subr.mxu0 0.0
    %3305 = vmatpush2.msra.mxu0 0.0
    %3306 = vmatprep.subr.mxu0 0.0
    %3307 = vmatpush2.msra.mxu0 0.0
    %3308 = vmatprep.subr.mxu0 0.0
    %3309 = vmatpush2.msra.mxu0 0.0
    %3310 = vmatprep.subr.mxu0 0.0
    %3311 = vmatpush2.msra.mxu0 0.0
    %3312 = vmatprep.subr.mxu0 0.0
    %3313 = vmatpush2.msra.mxu0 0.0
    %3314 = vmatprep.subr.mxu0 0.0
    %3315 = vmatpush2.msra.mxu0 0.0
    %3316 = vmatprep.subr.mxu0 0.0
    %3317 = vmatpush2.msra.mxu0 0.0
    %3318 = vmatprep.subr.mxu0 0.0
    %3319 = vmatpush2.msra.mxu0 0.0
    %3320 = vmatprep.subr.mxu0 0.0
    %3321 = vmatpush2.msra.mxu0 0.0
    %3322 = vmatprep.subr.mxu0 0.0
    %3323 = vmatpush2.msra.mxu0 0.0
    %3324 = vmatprep.subr.mxu0 0.0
    %3325 = vmatpush2.msra.mxu0 0.0
    %3326 = vmatprep.subr.mxu0 0.0
    %3327 = vmatpush2.msra.mxu0 0.0
    %3328 = vmatprep.subr.mxu0 0.0
    %3329 = vmatpush2.msra.mxu0 0.0
    %3330 = vmatprep.mubr.f32.mxu0 0.0
    %3331 = vmatmul.mubr.f32.gmra.mxu0 %v3181
    %v3332 = vpop.f32.mrf.mxu0
    %v3333 = vadd.f32 %v3265, %v3332
    %v3334 = vpop.f32.mrf.mxu0
    %3335 = vmatprep.mubr.f32.mxu0 0.0
    %3336 = vmatmul.mubr.f32.gmra.mxu0 %v3182
    %v3337 = vpop.f32.mrf.mxu0
    %v3338 = vadd.f32 %v3265, %v3337
    %v3339 = vpop.f32.mrf.mxu0
    %3340 = vmatprep.mubr.f32.mxu0 0.0
    %3341 = vmatmul.mubr.f32.gmra.mxu0 %v3183
    %v3342 = vpop.f32.mrf.mxu0
    %v3343 = vadd.f32 %v3265, %v3342
    %v3344 = vpop.f32.mrf.mxu0
    %3345 = vmatprep.mubr.f32.mxu0 0.0
    %3346 = vmatmul.mubr.f32.gmra.mxu0 %v3184
    %v3347 = vpop.f32.mrf.mxu0
    %v3348 = vadd.f32 %v3265, %v3347
    %v3349 = vpop.f32.mrf.mxu0
    %3350 = vmatprep.mubr.f32.mxu0 0.0
    %3351 = vmatmul.mubr.f32.gmra.mxu0 %v3185
    %v3352 = vpop.f32.mrf.mxu0
    %v3353 = vadd.f32 %v3265, %v3352
    %v3354 = vpop.f32.mrf.mxu0
    %3355 = vmatprep.mubr.f32.mxu0 0.0
    %3356 = vmatmul.mubr.f32.gmra.mxu0 %v3186
    %v3357 = vpop.f32.mrf.mxu0
    %v3358 = vadd.f32 %v3265, %v3357
    %v3359 = vpop.f32.mrf.mxu0
    %3360 = vmatprep.mubr.f32.mxu0 0.0
    %3361 = vmatmul.mubr.f32.gmra.mxu0 %v3187
    %v3362 = vpop.f32.mrf.mxu0
    %v3363 = vadd.f32 %v3265, %v3362
    %v3364 = vpop.f32.mrf.mxu0
    %3365 = vmatprep.mubr.f32.mxu0 0.0
    %3366 = vmatmul.mubr.f32.gmra.mxu0 %v3188
    %v3367 = vpop.f32.mrf.mxu0
    %v3368 = vadd.f32 %v3265, %v3367
    %v3369 = vpop.f32.mrf.mxu0
    %3370 = vmatprep.mubr.f32.mxu0 0.0
    %3371 = vmatmul.mubr.f32.gmra.mxu0 %v3189
    %v3372 = vpop.f32.mrf.mxu0
    %v3373 = vadd.f32 %v3265, %v3372
    %v3374 = vpop.f32.mrf.mxu0
    %3375 = vmatprep.mubr.f32.mxu0 0.0
    %3376 = vmatmul.mubr.f32.gmra.mxu0 %v3190
    %v3377 = vpop.f32.mrf.mxu0
    %v3378 = vadd.f32 %v3265, %v3377
    %v3379 = vpop.f32.mrf.mxu0
    %3380 = vmatprep.mubr.f32.mxu0 0.0
    %3381 = vmatmul.mubr.f32.gmra.mxu0 %v3191
    %v3382 = vpop.f32.mrf.mxu0
    %v3383 = vadd.f32 %v3265, %v3382
    %v3384 = vpop.f32.mrf.mxu0
    %3385 = vmatprep.mubr.f32.mxu0 0.0
    %3386 = vmatmul.mubr.f32.gmra.mxu0 %v3192
    %v3387 = vpop.f32.mrf.mxu0
    %v3388 = vadd.f32 %v3265, %v3387
    %v3389 = vpop.f32.mrf.mxu0
    %3390 = vmatprep.mubr.f32.mxu0 0.0
    %3391 = vmatmul.mubr.f32.gmra.mxu0 %v3193
    %v3392 = vpop.f32.mrf.mxu0
    %v3393 = vadd.f32 %v3265, %v3392
    %v3394 = vpop.f32.mrf.mxu0
    %3395 = vmatprep.mubr.f32.mxu0 0.0
    %3396 = vmatmul.mubr.f32.gmra.mxu0 %v3194
    %v3397 = vpop.f32.mrf.mxu0
    %v3398 = vadd.f32 %v3265, %v3397
    %v3399 = vpop.f32.mrf.mxu0
    %3400 = vmatprep.mubr.f32.mxu0 0.0
    %3401 = vmatmul.mubr.f32.gmra.mxu0 %v3195
    %v3402 = vpop.f32.mrf.mxu0
    %v3403 = vadd.f32 %v3265, %v3402
    %v3404 = vpop.f32.mrf.mxu0
    %3405 = vmatprep.mubr.f32.mxu0 0.0
    %3406 = vmatmul.mubr.f32.gmra.mxu0 %v3196
    %v3407 = vpop.f32.mrf.mxu0
    %v3408 = vadd.f32 %v3265, %v3407
    %v3409 = vpop.f32.mrf.mxu0
    %3410 = vmatprep.mubr.f32.mxu0 0.0
    %3411 = vmatmul.mubr.f32.gmra.mxu0 %v3197
    %v3412 = vpop.f32.mrf.mxu0
    %v3413 = vadd.f32 %v3265, %v3412
    %v3414 = vpop.f32.mrf.mxu0
    %3415 = vmatprep.mubr.f32.mxu0 0.0
    %3416 = vmatmul.mubr.f32.gmra.mxu0 %v3198
    %v3417 = vpop.f32.mrf.mxu0
    %v3418 = vadd.f32 %v3265, %v3417
    %v3419 = vpop.f32.mrf.mxu0
    %3420 = vmatprep.mubr.f32.mxu0 0.0
    %3421 = vmatmul.mubr.f32.gmra.mxu0 %v3199
    %v3422 = vpop.f32.mrf.mxu0
    %v3423 = vadd.f32 %v3265, %v3422
    %v3424 = vpop.f32.mrf.mxu0
    %3425 = vmatprep.mubr.f32.mxu0 0.0
    %3426 = vmatmul.mubr.f32.gmra.mxu0 %v3200
    %v3427 = vpop.f32.mrf.mxu0
    %v3428 = vadd.f32 %v3265, %v3427
    %v3429 = vpop.f32.mrf.mxu0
    %3430 = vmatprep.mubr.f32.mxu0 0.0
    %3431 = vmatmul.mubr.f32.gmra.mxu0 %v3201
    %v3432 = vpop.f32.mrf.mxu0
    %v3433 = vadd.f32 %v3265, %v3432
    %v3434 = vpop.f32.mrf.mxu0
    %3435 = vmatprep.mubr.f32.mxu0 0.0
    %3436 = vmatmul.mubr.f32.gmra.mxu0 %v3202
    %v3437 = vpop.f32.mrf.mxu0
    %v3438 = vadd.f32 %v3265, %v3437
    %v3439 = vpop.f32.mrf.mxu0
    %3440 = vmatprep.mubr.f32.mxu0 0.0
    %3441 = vmatmul.mubr.f32.gmra.mxu0 %v3203
    %v3442 = vpop.f32.mrf.mxu0
    %v3443 = vadd.f32 %v3265, %v3442
    %v3444 = vpop.f32.mrf.mxu0
    %3445 = vmatprep.mubr.f32.mxu0 0.0
    %3446 = vmatmul.mubr.f32.gmra.mxu0 %v3204
    %v3447 = vpop.f32.mrf.mxu0
    %v3448 = vadd.f32 %v3265, %v3447
    %v3449 = vpop.f32.mrf.mxu0
    %3450 = vmatprep.mubr.f32.mxu0 0.0
    %3451 = vmatmul.mubr.f32.gmra.mxu0 %v3205
    %v3452 = vpop.f32.mrf.mxu0
    %v3453 = vadd.f32 %v3265, %v3452
    %v3454 = vpop.f32.mrf.mxu0
    %3455 = vmatprep.mubr.f32.mxu0 0.0
    %3456 = vmatmul.mubr.f32.gmra.mxu0 %v3206
    %v3457 = vpop.f32.mrf.mxu0
    %v3458 = vadd.f32 %v3265, %v3457
    %v3459 = vpop.f32.mrf.mxu0
    %3460 = vmatprep.mubr.f32.mxu0 0.0
    %3461 = vmatmul.mubr.f32.gmra.mxu0 %v3207
    %v3462 = vpop.f32.mrf.mxu0
    %v3463 = vadd.f32 %v3265, %v3462
    %v3464 = vpop.f32.mrf.mxu0
    %3465 = vmatprep.mubr.f32.mxu0 0.0
    %3466 = vmatmul.mubr.f32.gmra.mxu0 %v3208
    %v3467 = vpop.f32.mrf.mxu0
    %v3468 = vadd.f32 %v3265, %v3467
    %v3469 = vpop.f32.mrf.mxu0
    %3470 = vmatprep.mubr.f32.mxu0 0.0
    %3471 = vmatmul.mubr.f32.gmra.mxu0 %v3209
    %v3472 = vpop.f32.mrf.mxu0
    %v3473 = vadd.f32 %v3265, %v3472
    %v3474 = vpop.f32.mrf.mxu0
    %3475 = vmatprep.mubr.f32.mxu0 0.0
    %3476 = vmatmul.mubr.f32.gmra.mxu0 %v3210
    %v3477 = vpop.f32.mrf.mxu0
    %v3478 = vadd.f32 %v3265, %v3477
    %v3479 = vpop.f32.mrf.mxu0
    %3480 = vmatprep.mubr.f32.mxu0 0.0
    %3481 = vmatmul.mubr.f32.gmra.mxu0 %v3211
    %v3482 = vpop.f32.mrf.mxu0
    %v3483 = vadd.f32 %v3265, %v3482
    %v3484 = vpop.f32.mrf.mxu0
    %3485 = vmatprep.mubr.f32.mxu0 0.0
    %3486 = vmatmul.mubr.f32.gmra.mxu0 %v3212
    %v3487 = vpop.f32.mrf.mxu0
    %v3488 = vadd.f32 %v3265, %v3487
    %v3489 = vpop.f32.mrf.mxu0
    %3490 = vmatprep.mubr.f32.mxu0 0.0
    %3491 = vmatmul.mubr.f32.gmra.mxu0 %v3213
    %v3492 = vpop.f32.mrf.mxu0
    %v3493 = vadd.f32 %v3265, %v3492
    %v3494 = vpop.f32.mrf.mxu0
    %3495 = vmatprep.mubr.f32.mxu0 0.0
    %3496 = vmatmul.mubr.f32.gmra.mxu0 %v3214
    %v3497 = vpop.f32.mrf.mxu0
    %v3498 = vadd.f32 %v3265, %v3497
    %v3499 = vpop.f32.mrf.mxu0
    %3500 = vmatprep.mubr.f32.mxu0 0.0
    %3501 = vmatmul.mubr.f32.gmra.mxu0 %v3215
    %v3502 = vpop.f32.mrf.mxu0
    %v3503 = vadd.f32 %v3265, %v3502
    %v3504 = vpop.f32.mrf.mxu0
    %3505 = vmatprep.mubr.f32.mxu0 0.0
    %3506 = vmatmul.mubr.f32.gmra.mxu0 %v3216
    %v3507 = vpop.f32.mrf.mxu0
    %v3508 = vadd.f32 %v3265, %v3507
    %v3509 = vpop.f32.mrf.mxu0
    %3510 = vmatprep.mubr.f32.mxu0 0.0
    %3511 = vmatmul.mubr.f32.gmra.mxu0 %v3217
    %v3512 = vpop.f32.mrf.mxu0
    %v3513 = vadd.f32 %v3265, %v3512
    %v3514 = vpop.f32.mrf.mxu0
    %3515 = vmatprep.mubr.f32.mxu0 0.0
    %3516 = vmatmul.mubr.f32.gmra.mxu0 %v3218
    %v3517 = vpop.f32.mrf.mxu0
    %v3518 = vadd.f32 %v3265, %v3517
    %v3519 = vpop.f32.mrf.mxu0
    %3520 = vmatprep.mubr.f32.mxu0 0.0
    %3521 = vmatmul.mubr.f32.gmra.mxu0 %v3219
    %v3522 = vpop.f32.mrf.mxu0
    %v3523 = vadd.f32 %v3265, %v3522
    %v3524 = vpop.f32.mrf.mxu0
    %3525 = vmatprep.mubr.f32.mxu0 0.0
    %3526 = vmatmul.mubr.f32.gmra.mxu0 %v3220
    %v3527 = vpop.f32.mrf.mxu0
    %v3528 = vadd.f32 %v3265, %v3527
    %v3529 = vpop.f32.mrf.mxu0
    %3530 = vmatprep.mubr.f32.mxu0 0.0
    %3531 = vmatmul.mubr.f32.gmra.mxu0 %v3221
    %v3532 = vpop.f32.mrf.mxu0
    %v3533 = vadd.f32 %v3265, %v3532
    %v3534 = vpop.f32.mrf.mxu0
    %3535 = vmatprep.mubr.f32.mxu0 0.0
    %3536 = vmatmul.mubr.f32.gmra.mxu0 %v3222
    %v3537 = vpop.f32.mrf.mxu0
    %v3538 = vadd.f32 %v3265, %v3537
    %v3539 = vpop.f32.mrf.mxu0
    %3540 = vmatprep.mubr.f32.mxu0 0.0
    %3541 = vmatmul.mubr.f32.gmra.mxu0 %v3223
    %v3542 = vpop.f32.mrf.mxu0
    %v3543 = vadd.f32 %v3265, %v3542
    %v3544 = vpop.f32.mrf.mxu0
    %3545 = vmatprep.mubr.f32.mxu0 0.0
    %3546 = vmatmul.mubr.f32.gmra.mxu0 %v3224
    %v3547 = vpop.f32.mrf.mxu0
    %v3548 = vadd.f32 %v3265, %v3547
    %v3549 = vpop.f32.mrf.mxu0
    %3550 = vmatprep.mubr.f32.mxu0 0.0
    %3551 = vmatmul.mubr.f32.gmra.mxu0 %v3225
    %v3552 = vpop.f32.mrf.mxu0
    %v3553 = vadd.f32 %v3265, %v3552
    %v3554 = vpop.f32.mrf.mxu0
    %3555 = vmatprep.mubr.f32.mxu0 0.0
    %3556 = vmatmul.mubr.f32.gmra.mxu0 %v3226
    %v3557 = vpop.f32.mrf.mxu0
    %v3558 = vadd.f32 %v3265, %v3557
    %v3559 = vpop.f32.mrf.mxu0
    %3560 = vmatprep.mubr.f32.mxu0 0.0
    %3561 = vmatmul.mubr.f32.gmra.mxu0 %v3227
    %v3562 = vpop.f32.mrf.mxu0
    %v3563 = vadd.f32 %v3265, %v3562
    %v3564 = vpop.f32.mrf.mxu0
    %3565 = vmatprep.mubr.f32.mxu0 0.0
    %3566 = vmatmul.mubr.f32.gmra.mxu0 %v3228
    %v3567 = vpop.f32.mrf.mxu0
    %v3568 = vadd.f32 %v3265, %v3567
    %v3569 = vpop.f32.mrf.mxu0
    %3570 = vmatprep.mubr.f32.mxu0 0.0
    %3571 = vmatmul.mubr.f32.gmra.mxu0 %v3229
    %v3572 = vpop.f32.mrf.mxu0
    %v3573 = vadd.f32 %v3265, %v3572
    %v3574 = vpop.f32.mrf.mxu0
    %3575 = vmatprep.mubr.f32.mxu0 0.0
    %3576 = vmatmul.mubr.f32.gmra.mxu0 %v3230
    %v3577 = vpop.f32.mrf.mxu0
    %v3578 = vadd.f32 %v3265, %v3577
    %v3579 = vpop.f32.mrf.mxu0
    %3580 = vmatprep.mubr.f32.mxu0 0.0
    %3581 = vmatmul.mubr.f32.gmra.mxu0 %v3231
    %v3582 = vpop.f32.mrf.mxu0
    %v3583 = vadd.f32 %v3265, %v3582
    %v3584 = vpop.f32.mrf.mxu0
    %3585 = vmatprep.mubr.f32.mxu0 0.0
    %3586 = vmatmul.mubr.f32.gmra.mxu0 %v3232
    %v3587 = vpop.f32.mrf.mxu0
    %v3588 = vadd.f32 %v3265, %v3587
    %v3589 = vpop.f32.mrf.mxu0
    %3590 = vmatprep.mubr.f32.mxu0 0.0
    %3591 = vmatmul.mubr.f32.gmra.mxu0 %v3233
    %v3592 = vpop.f32.mrf.mxu0
    %v3593 = vadd.f32 %v3265, %v3592
    %v3594 = vpop.f32.mrf.mxu0
    %3595 = vmatprep.mubr.f32.mxu0 0.0
    %3596 = vmatmul.mubr.f32.gmra.mxu0 %v3234
    %v3597 = vpop.f32.mrf.mxu0
    %v3598 = vadd.f32 %v3265, %v3597
    %v3599 = vpop.f32.mrf.mxu0
    %3600 = vmatprep.mubr.f32.mxu0 0.0
    %3601 = vmatmul.mubr.f32.gmra.mxu0 %v3235
    %v3602 = vpop.f32.mrf.mxu0
    %v3603 = vadd.f32 %v3265, %v3602
    %v3604 = vpop.f32.mrf.mxu0
    %3605 = vmatprep.mubr.f32.mxu0 0.0
    %3606 = vmatmul.mubr.f32.gmra.mxu0 %v3236
    %v3607 = vpop.f32.mrf.mxu0
    %v3608 = vadd.f32 %v3265, %v3607
    %v3609 = vpop.f32.mrf.mxu0
    %3610 = vmatprep.mubr.f32.mxu0 0.0
    %3611 = vmatmul.mubr.f32.gmra.mxu0 %v3237
    %v3612 = vpop.f32.mrf.mxu0
    %v3613 = vadd.f32 %v3265, %v3612
    %v3614 = vpop.f32.mrf.mxu0
    %3615 = vmatprep.mubr.f32.mxu0 0.0
    %3616 = vmatmul.mubr.f32.gmra.mxu0 %v3238
    %v3617 = vpop.f32.mrf.mxu0
    %v3618 = vadd.f32 %v3265, %v3617
    %v3619 = vpop.f32.mrf.mxu0
    %3620 = vmatprep.mubr.f32.mxu0 0.0
    %3621 = vmatmul.mubr.f32.gmra.mxu0 %v3239
    %v3622 = vpop.f32.mrf.mxu0
    %v3623 = vadd.f32 %v3265, %v3622
    %v3624 = vpop.f32.mrf.mxu0
    %3625 = vmatprep.mubr.f32.mxu0 0.0
    %3626 = vmatmul.mubr.f32.gmra.mxu0 %v3240
    %v3627 = vpop.f32.mrf.mxu0
    %v3628 = vadd.f32 %v3265, %v3627
    %v3629 = vpop.f32.mrf.mxu0
    %3630 = vmatprep.mubr.f32.mxu0 0.0
    %3631 = vmatmul.mubr.f32.gmra.mxu0 %v3241
    %v3632 = vpop.f32.mrf.mxu0
    %v3633 = vadd.f32 %v3265, %v3632
    %v3634 = vpop.f32.mrf.mxu0
    %3635 = vmatprep.mubr.f32.mxu0 0.0
    %3636 = vmatmul.mubr.f32.gmra.mxu0 %v3242
    %v3637 = vpop.f32.mrf.mxu0
    %v3638 = vadd.f32 %v3265, %v3637
    %v3639 = vpop.f32.mrf.mxu0
    %3640 = vmatprep.mubr.f32.mxu0 0.0
    %3641 = vmatmul.mubr.f32.gmra.mxu0 %v3243
    %v3642 = vpop.f32.mrf.mxu0
    %v3643 = vadd.f32 %v3265, %v3642
    %v3644 = vpop.f32.mrf.mxu0
    %3645 = vmatprep.mubr.f32.mxu0 0.0
    %3646 = vmatmul.mubr.f32.gmra.mxu0 %v3244
    %v3647 = vpop.f32.mrf.mxu0
    %v3648 = vadd.f32 %v3265, %v3647
    %v3649 = vpop.f32.mrf.mxu0
    %3650 = vdwg.mxu0
    %v3651 = vmax.f32 %v3333, 0.0
    %v3652 = vmax.f32 %v3338, 0.0
    %v3653 = vmax.f32 %v3343, 0.0
    %v3654 = vmax.f32 %v3348, 0.0
    %v3655 = vmax.f32 %v3353, 0.0
    %v3656 = vmax.f32 %v3358, 0.0
    %v3657 = vmax.f32 %v3363, 0.0
    %v3658 = vmax.f32 %v3368, 0.0
    %v3659 = vmax.f32 %v3373, 0.0
    %v3660 = vmax.f32 %v3378, 0.0
    %v3661 = vmax.f32 %v3383, 0.0
    %v3662 = vmax.f32 %v3388, 0.0
    %v3663 = vmax.f32 %v3393, 0.0
    %v3664 = vmax.f32 %v3398, 0.0
    %v3665 = vmax.f32 %v3403, 0.0
    %v3666 = vmax.f32 %v3408, 0.0
    %v3667 = vmax.f32 %v3413, 0.0
    %v3668 = vmax.f32 %v3418, 0.0
    %v3669 = vmax.f32 %v3423, 0.0
    %v3670 = vmax.f32 %v3428, 0.0
    %v3671 = vmax.f32 %v3433, 0.0
    %v3672 = vmax.f32 %v3438, 0.0
    %v3673 = vmax.f32 %v3443, 0.0
    %v3674 = vmax.f32 %v3448, 0.0
    %v3675 = vmax.f32 %v3453, 0.0
    %v3676 = vmax.f32 %v3458, 0.0
    %v3677 = vmax.f32 %v3463, 0.0
    %v3678 = vmax.f32 %v3468, 0.0
    %v3679 = vmax.f32 %v3473, 0.0
    %v3680 = vmax.f32 %v3478, 0.0
    %v3681 = vmax.f32 %v3483, 0.0
    %v3682 = vmax.f32 %v3488, 0.0
    %v3683 = vmax.f32 %v3493, 0.0
    %v3684 = vmax.f32 %v3498, 0.0
    %v3685 = vmax.f32 %v3503, 0.0
    %v3686 = vmax.f32 %v3508, 0.0
    %v3687 = vmax.f32 %v3513, 0.0
    %v3688 = vmax.f32 %v3518, 0.0
    %v3689 = vmax.f32 %v3523, 0.0
    %v3690 = vmax.f32 %v3528, 0.0
    %v3691 = vmax.f32 %v3533, 0.0
    %v3692 = vmax.f32 %v3538, 0.0
    %v3693 = vmax.f32 %v3543, 0.0
    %v3694 = vmax.f32 %v3548, 0.0
    %v3695 = vmax.f32 %v3553, 0.0
    %v3696 = vmax.f32 %v3558, 0.0
    %v3697 = vmax.f32 %v3563, 0.0
    %v3698 = vmax.f32 %v3568, 0.0
    %v3699 = vmax.f32 %v3573, 0.0
    %v3700 = vmax.f32 %v3578, 0.0
    %v3701 = vmax.f32 %v3583, 0.0
    %v3702 = vmax.f32 %v3588, 0.0
    %v3703 = vmax.f32 %v3593, 0.0
    %v3704 = vmax.f32 %v3598, 0.0
    %v3705 = vmax.f32 %v3603, 0.0
    %v3706 = vmax.f32 %v3608, 0.0
    %v3707 = vmax.f32 %v3613, 0.0
    %v3708 = vmax.f32 %v3618, 0.0
    %v3709 = vmax.f32 %v3623, 0.0
    %v3710 = vmax.f32 %v3628, 0.0
    %v3711 = vmax.f32 %v3633, 0.0
    %v3712 = vmax.f32 %v3638, 0.0
    %v3713 = vmax.f32 %v3643, 0.0
    %v3714 = vmax.f32 %v3648, 0.0
    %v3715 = vand.u32 2147483647, %v3333
    %v3716 = vand.u32 2147483647, %v3338
    %v3717 = vand.u32 2147483647, %v3343
    %v3718 = vand.u32 2147483647, %v3348
    %v3719 = vand.u32 2147483647, %v3353
    %v3720 = vand.u32 2147483647, %v3358
    %v3721 = vand.u32 2147483647, %v3363
    %v3722 = vand.u32 2147483647, %v3368
    %v3723 = vand.u32 2147483647, %v3373
    %v3724 = vand.u32 2147483647, %v3378
    %v3725 = vand.u32 2147483647, %v3383
    %v3726 = vand.u32 2147483647, %v3388
    %v3727 = vand.u32 2147483647, %v3393
    %v3728 = vand.u32 2147483647, %v3398
    %v3729 = vand.u32 2147483647, %v3403
    %v3730 = vand.u32 2147483647, %v3408
    %v3731 = vand.u32 2147483647, %v3413
    %v3732 = vand.u32 2147483647, %v3418
    %v3733 = vand.u32 2147483647, %v3423
    %v3734 = vand.u32 2147483647, %v3428
    %v3735 = vand.u32 2147483647, %v3433
    %v3736 = vand.u32 2147483647, %v3438
    %v3737 = vand.u32 2147483647, %v3443
    %v3738 = vand.u32 2147483647, %v3448
    %v3739 = vand.u32 2147483647, %v3453
    %v3740 = vand.u32 2147483647, %v3458
    %v3741 = vand.u32 2147483647, %v3463
    %v3742 = vand.u32 2147483647, %v3468
    %v3743 = vand.u32 2147483647, %v3473
    %v3744 = vand.u32 2147483647, %v3478
    %v3745 = vand.u32 2147483647, %v3483
    %v3746 = vand.u32 2147483647, %v3488
    %v3747 = vand.u32 2147483647, %v3493
    %v3748 = vand.u32 2147483647, %v3498
    %v3749 = vand.u32 2147483647, %v3503
    %v3750 = vand.u32 2147483647, %v3508
    %v3751 = vand.u32 2147483647, %v3513
    %v3752 = vand.u32 2147483647, %v3518
    %v3753 = vand.u32 2147483647, %v3523
    %v3754 = vand.u32 2147483647, %v3528
    %v3755 = vand.u32 2147483647, %v3533
    %v3756 = vand.u32 2147483647, %v3538
    %v3757 = vand.u32 2147483647, %v3543
    %v3758 = vand.u32 2147483647, %v3548
    %v3759 = vand.u32 2147483647, %v3553
    %v3760 = vand.u32 2147483647, %v3558
    %v3761 = vand.u32 2147483647, %v3563
    %v3762 = vand.u32 2147483647, %v3568
    %v3763 = vand.u32 2147483647, %v3573
    %v3764 = vand.u32 2147483647, %v3578
    %v3765 = vand.u32 2147483647, %v3583
    %v3766 = vand.u32 2147483647, %v3588
    %v3767 = vand.u32 2147483647, %v3593
    %v3768 = vand.u32 2147483647, %v3598
    %v3769 = vand.u32 2147483647, %v3603
    %v3770 = vand.u32 2147483647, %v3608
    %v3771 = vand.u32 2147483647, %v3613
    %v3772 = vand.u32 2147483647, %v3618
    %v3773 = vand.u32 2147483647, %v3623
    %v3774 = vand.u32 2147483647, %v3628
    %v3775 = vand.u32 2147483647, %v3633
    %v3776 = vand.u32 2147483647, %v3638
    %v3777 = vand.u32 2147483647, %v3643
    %v3778 = vand.u32 2147483647, %v3648
    %v3779 = vsub.f32 0.0, %v3715
    %v3780 = vsub.f32 0.0, %v3716
    %v3781 = vsub.f32 0.0, %v3717
    %v3782 = vsub.f32 0.0, %v3718
    %v3783 = vsub.f32 0.0, %v3719
    %v3784 = vsub.f32 0.0, %v3720
    %v3785 = vsub.f32 0.0, %v3721
    %v3786 = vsub.f32 0.0, %v3722
    %v3787 = vsub.f32 0.0, %v3723
    %v3788 = vsub.f32 0.0, %v3724
    %v3789 = vsub.f32 0.0, %v3725
    %v3790 = vsub.f32 0.0, %v3726
    %v3791 = vsub.f32 0.0, %v3727
    %v3792 = vsub.f32 0.0, %v3728
    %v3793 = vsub.f32 0.0, %v3729
    %v3794 = vsub.f32 0.0, %v3730
    %v3795 = vsub.f32 0.0, %v3731
    %v3796 = vsub.f32 0.0, %v3732
    %v3797 = vsub.f32 0.0, %v3733
    %v3798 = vsub.f32 0.0, %v3734
    %v3799 = vsub.f32 0.0, %v3735
    %v3800 = vsub.f32 0.0, %v3736
    %v3801 = vsub.f32 0.0, %v3737
    %v3802 = vsub.f32 0.0, %v3738
    %v3803 = vsub.f32 0.0, %v3739
    %v3804 = vsub.f32 0.0, %v3740
    %v3805 = vsub.f32 0.0, %v3741
    %v3806 = vsub.f32 0.0, %v3742
    %v3807 = vsub.f32 0.0, %v3743
    %v3808 = vsub.f32 0.0, %v3744
    %v3809 = vsub.f32 0.0, %v3745
    %v3810 = vsub.f32 0.0, %v3746
    %v3811 = vsub.f32 0.0, %v3747
    %v3812 = vsub.f32 0.0, %v3748
    %v3813 = vsub.f32 0.0, %v3749
    %v3814 = vsub.f32 0.0, %v3750
    %v3815 = vsub.f32 0.0, %v3751
    %v3816 = vsub.f32 0.0, %v3752
    %v3817 = vsub.f32 0.0, %v3753
    %v3818 = vsub.f32 0.0, %v3754
    %v3819 = vsub.f32 0.0, %v3755
    %v3820 = vsub.f32 0.0, %v3756
    %v3821 = vsub.f32 0.0, %v3757
    %v3822 = vsub.f32 0.0, %v3758
    %v3823 = vsub.f32 0.0, %v3759
    %v3824 = vsub.f32 0.0, %v3760
    %v3825 = vsub.f32 0.0, %v3761
    %v3826 = vsub.f32 0.0, %v3762
    %v3827 = vsub.f32 0.0, %v3763
    %v3828 = vsub.f32 0.0, %v3764
    %v3829 = vsub.f32 0.0, %v3765
    %v3830 = vsub.f32 0.0, %v3766
    %v3831 = vsub.f32 0.0, %v3767
    %v3832 = vsub.f32 0.0, %v3768
    %v3833 = vsub.f32 0.0, %v3769
    %v3834 = vsub.f32 0.0, %v3770
    %v3835 = vsub.f32 0.0, %v3771
    %v3836 = vsub.f32 0.0, %v3772
    %v3837 = vsub.f32 0.0, %v3773
    %v3838 = vsub.f32 0.0, %v3774
    %v3839 = vsub.f32 0.0, %v3775
    %v3840 = vsub.f32 0.0, %v3776
    %v3841 = vsub.f32 0.0, %v3777
    %v3842 = vsub.f32 0.0, %v3778
    %v3843 = vmul.f32 %v3779, 1.442695
    %v3844 = vpow.pop %v3843
    %v3845 = vmul.f32 %v3780, 1.442695
    %v3846 = vpow.pop %v3845
    %v3847 = vmul.f32 %v3781, 1.442695
    %v3848 = vpow.pop %v3847
    %v3849 = vmul.f32 %v3782, 1.442695
    %v3850 = vpow.pop %v3849
    %v3851 = vmul.f32 %v3783, 1.442695
    %v3852 = vpow.pop %v3851
    %v3853 = vmul.f32 %v3784, 1.442695
    %v3854 = vpow.pop %v3853
    %v3855 = vmul.f32 %v3785, 1.442695
    %v3856 = vpow.pop %v3855
    %v3857 = vmul.f32 %v3786, 1.442695
    %v3858 = vpow.pop %v3857
    %v3859 = vmul.f32 %v3787, 1.442695
    %v3860 = vpow.pop %v3859
    %v3861 = vmul.f32 %v3788, 1.442695
    %v3862 = vpow.pop %v3861
    %v3863 = vmul.f32 %v3789, 1.442695
    %v3864 = vpow.pop %v3863
    %v3865 = vmul.f32 %v3790, 1.442695
    %v3866 = vpow.pop %v3865
    %v3867 = vmul.f32 %v3791, 1.442695
    %v3868 = vpow.pop %v3867
    %v3869 = vmul.f32 %v3792, 1.442695
    %v3870 = vpow.pop %v3869
    %v3871 = vmul.f32 %v3793, 1.442695
    %v3872 = vpow.pop %v3871
    %v3873 = vmul.f32 %v3794, 1.442695
    %v3874 = vpow.pop %v3873
    %v3875 = vmul.f32 %v3795, 1.442695
    %v3876 = vpow.pop %v3875
    %v3877 = vmul.f32 %v3796, 1.442695
    %v3878 = vpow.pop %v3877
    %v3879 = vmul.f32 %v3797, 1.442695
    %v3880 = vpow.pop %v3879
    %v3881 = vmul.f32 %v3798, 1.442695
    %v3882 = vpow.pop %v3881
    %v3883 = vmul.f32 %v3799, 1.442695
    %v3884 = vpow.pop %v3883
    %v3885 = vmul.f32 %v3800, 1.442695
    %v3886 = vpow.pop %v3885
    %v3887 = vmul.f32 %v3801, 1.442695
    %v3888 = vpow.pop %v3887
    %v3889 = vmul.f32 %v3802, 1.442695
    %v3890 = vpow.pop %v3889
    %v3891 = vmul.f32 %v3803, 1.442695
    %v3892 = vpow.pop %v3891
    %v3893 = vmul.f32 %v3804, 1.442695
    %v3894 = vpow.pop %v3893
    %v3895 = vmul.f32 %v3805, 1.442695
    %v3896 = vpow.pop %v3895
    %v3897 = vmul.f32 %v3806, 1.442695
    %v3898 = vpow.pop %v3897
    %v3899 = vmul.f32 %v3807, 1.442695
    %v3900 = vpow.pop %v3899
    %v3901 = vmul.f32 %v3808, 1.442695
    %v3902 = vpow.pop %v3901
    %v3903 = vmul.f32 %v3809, 1.442695
    %v3904 = vpow.pop %v3903
    %v3905 = vmul.f32 %v3810, 1.442695
    %v3906 = vpow.pop %v3905
    %v3907 = vmul.f32 %v3811, 1.442695
    %v3908 = vpow.pop %v3907
    %v3909 = vmul.f32 %v3812, 1.442695
    %v3910 = vpow.pop %v3909
    %v3911 = vmul.f32 %v3813, 1.442695
    %v3912 = vpow.pop %v3911
    %v3913 = vmul.f32 %v3814, 1.442695
    %v3914 = vpow.pop %v3913
    %v3915 = vmul.f32 %v3815, 1.442695
    %v3916 = vpow.pop %v3915
    %v3917 = vmul.f32 %v3816, 1.442695
    %v3918 = vpow.pop %v3917
    %v3919 = vmul.f32 %v3817, 1.442695
    %v3920 = vpow.pop %v3919
    %v3921 = vmul.f32 %v3818, 1.442695
    %v3922 = vpow.pop %v3921
    %v3923 = vmul.f32 %v3819, 1.442695
    %v3924 = vpow.pop %v3923
    %v3925 = vmul.f32 %v3820, 1.442695
    %v3926 = vpow.pop %v3925
    %v3927 = vmul.f32 %v3821, 1.442695
    %v3928 = vpow.pop %v3927
    %v3929 = vmul.f32 %v3822, 1.442695
    %v3930 = vpow.pop %v3929
    %v3931 = vmul.f32 %v3823, 1.442695
    %v3932 = vpow.pop %v3931
    %v3933 = vmul.f32 %v3824, 1.442695
    %v3934 = vpow.pop %v3933
    %v3935 = vmul.f32 %v3825, 1.442695
    %v3936 = vpow.pop %v3935
    %v3937 = vmul.f32 %v3826, 1.442695
    %v3938 = vpow.pop %v3937
    %v3939 = vmul.f32 %v3827, 1.442695
    %v3940 = vpow.pop %v3939
    %v3941 = vmul.f32 %v3828, 1.442695
    %v3942 = vpow.pop %v3941
    %v3943 = vmul.f32 %v3829, 1.442695
    %v3944 = vpow.pop %v3943
    %v3945 = vmul.f32 %v3830, 1.442695
    %v3946 = vpow.pop %v3945
    %v3947 = vmul.f32 %v3831, 1.442695
    %v3948 = vpow.pop %v3947
    %v3949 = vmul.f32 %v3832, 1.442695
    %v3950 = vpow.pop %v3949
    %v3951 = vmul.f32 %v3833, 1.442695
    %v3952 = vpow.pop %v3951
    %v3953 = vmul.f32 %v3834, 1.442695
    %v3954 = vpow.pop %v3953
    %v3955 = vmul.f32 %v3835, 1.442695
    %v3956 = vpow.pop %v3955
    %v3957 = vmul.f32 %v3836, 1.442695
    %v3958 = vpow.pop %v3957
    %v3959 = vmul.f32 %v3837, 1.442695
    %v3960 = vpow.pop %v3959
    %v3961 = vmul.f32 %v3838, 1.442695
    %v3962 = vpow.pop %v3961
    %v3963 = vmul.f32 %v3839, 1.442695
    %v3964 = vpow.pop %v3963
    %v3965 = vmul.f32 %v3840, 1.442695
    %v3966 = vpow.pop %v3965
    %v3967 = vmul.f32 %v3841, 1.442695
    %v3968 = vpow.pop %v3967
    %v3969 = vmul.f32 %v3842, 1.442695
    %v3970 = vpow.pop %v3969
    %v3971 = vadd.f32 %v3844, 1.0
    %v3972 = vlog2.pop %v3971
    %v3973 = vmul.f32 %v3972, 0.6931472
    %v3974 = vmul.f32 -0.5, %v3844
    %v3975 = vadd.f32 %v3974, 1.0
    %v3976 = vmul.f32 %v3975, %v3844
    %v3977 = vand.u32 2147483647, %v3844
    %vm3978 = vcmp.lt.f32.partialorder %v3977, 0.0004427343
    %v3979 = vsel %vm3978, %v3976, %v3973
    %v3980 = vadd.f32 %v3846, 1.0
    %v3981 = vlog2.pop %v3980
    %v3982 = vmul.f32 %v3981, 0.6931472
    %v3983 = vmul.f32 -0.5, %v3846
    %v3984 = vadd.f32 %v3983, 1.0
    %v3985 = vmul.f32 %v3984, %v3846
    %v3986 = vand.u32 2147483647, %v3846
    %vm3987 = vcmp.lt.f32.partialorder %v3986, 0.0004427343
    %v3988 = vsel %vm3987, %v3985, %v3982
    %v3989 = vadd.f32 %v3848, 1.0
    %v3990 = vlog2.pop %v3989
    %v3991 = vmul.f32 %v3990, 0.6931472
    %v3992 = vmul.f32 -0.5, %v3848
    %v3993 = vadd.f32 %v3992, 1.0
    %v3994 = vmul.f32 %v3993, %v3848
    %v3995 = vand.u32 2147483647, %v3848
    %vm3996 = vcmp.lt.f32.partialorder %v3995, 0.0004427343
    %v3997 = vsel %vm3996, %v3994, %v3991
    %v3998 = vadd.f32 %v3850, 1.0
    %v3999 = vlog2.pop %v3998
    %v4000 = vmul.f32 %v3999, 0.6931472
    %v4001 = vmul.f32 -0.5, %v3850
    %v4002 = vadd.f32 %v4001, 1.0
    %v4003 = vmul.f32 %v4002, %v3850
    %v4004 = vand.u32 2147483647, %v3850
    %vm4005 = vcmp.lt.f32.partialorder %v4004, 0.0004427343
    %v4006 = vsel %vm4005, %v4003, %v4000
    %v4007 = vadd.f32 %v3852, 1.0
    %v4008 = vlog2.pop %v4007
    %v4009 = vmul.f32 %v4008, 0.6931472
    %v4010 = vmul.f32 -0.5, %v3852
    %v4011 = vadd.f32 %v4010, 1.0
    %v4012 = vmul.f32 %v4011, %v3852
    %v4013 = vand.u32 2147483647, %v3852
    %vm4014 = vcmp.lt.f32.partialorder %v4013, 0.0004427343
    %v4015 = vsel %vm4014, %v4012, %v4009
    %v4016 = vadd.f32 %v3854, 1.0
    %v4017 = vlog2.pop %v4016
    %v4018 = vmul.f32 %v4017, 0.6931472
    %v4019 = vmul.f32 -0.5, %v3854
    %v4020 = vadd.f32 %v4019, 1.0
    %v4021 = vmul.f32 %v4020, %v3854
    %v4022 = vand.u32 2147483647, %v3854
    %vm4023 = vcmp.lt.f32.partialorder %v4022, 0.0004427343
    %v4024 = vsel %vm4023, %v4021, %v4018
    %v4025 = vadd.f32 %v3856, 1.0
    %v4026 = vlog2.pop %v4025
    %v4027 = vmul.f32 %v4026, 0.6931472
    %v4028 = vmul.f32 -0.5, %v3856
    %v4029 = vadd.f32 %v4028, 1.0
    %v4030 = vmul.f32 %v4029, %v3856
    %v4031 = vand.u32 2147483647, %v3856
    %vm4032 = vcmp.lt.f32.partialorder %v4031, 0.0004427343
    %v4033 = vsel %vm4032, %v4030, %v4027
    %v4034 = vadd.f32 %v3858, 1.0
    %v4035 = vlog2.pop %v4034
    %v4036 = vmul.f32 %v4035, 0.6931472
    %v4037 = vmul.f32 -0.5, %v3858
    %v4038 = vadd.f32 %v4037, 1.0
    %v4039 = vmul.f32 %v4038, %v3858
    %v4040 = vand.u32 2147483647, %v3858
    %vm4041 = vcmp.lt.f32.partialorder %v4040, 0.0004427343
    %v4042 = vsel %vm4041, %v4039, %v4036
    %v4043 = vadd.f32 %v3860, 1.0
    %v4044 = vlog2.pop %v4043
    %v4045 = vmul.f32 %v4044, 0.6931472
    %v4046 = vmul.f32 -0.5, %v3860
    %v4047 = vadd.f32 %v4046, 1.0
    %v4048 = vmul.f32 %v4047, %v3860
    %v4049 = vand.u32 2147483647, %v3860
    %vm4050 = vcmp.lt.f32.partialorder %v4049, 0.0004427343
    %v4051 = vsel %vm4050, %v4048, %v4045
    %v4052 = vadd.f32 %v3862, 1.0
    %v4053 = vlog2.pop %v4052
    %v4054 = vmul.f32 %v4053, 0.6931472
    %v4055 = vmul.f32 -0.5, %v3862
    %v4056 = vadd.f32 %v4055, 1.0
    %v4057 = vmul.f32 %v4056, %v3862
    %v4058 = vand.u32 2147483647, %v3862
    %vm4059 = vcmp.lt.f32.partialorder %v4058, 0.0004427343
    %v4060 = vsel %vm4059, %v4057, %v4054
    %v4061 = vadd.f32 %v3864, 1.0
    %v4062 = vlog2.pop %v4061
    %v4063 = vmul.f32 %v4062, 0.6931472
    %v4064 = vmul.f32 -0.5, %v3864
    %v4065 = vadd.f32 %v4064, 1.0
    %v4066 = vmul.f32 %v4065, %v3864
    %v4067 = vand.u32 2147483647, %v3864
    %vm4068 = vcmp.lt.f32.partialorder %v4067, 0.0004427343
    %v4069 = vsel %vm4068, %v4066, %v4063
    %v4070 = vadd.f32 %v3866, 1.0
    %v4071 = vlog2.pop %v4070
    %v4072 = vmul.f32 %v4071, 0.6931472
    %v4073 = vmul.f32 -0.5, %v3866
    %v4074 = vadd.f32 %v4073, 1.0
    %v4075 = vmul.f32 %v4074, %v3866
    %v4076 = vand.u32 2147483647, %v3866
    %vm4077 = vcmp.lt.f32.partialorder %v4076, 0.0004427343
    %v4078 = vsel %vm4077, %v4075, %v4072
    %v4079 = vadd.f32 %v3868, 1.0
    %v4080 = vlog2.pop %v4079
    %v4081 = vmul.f32 %v4080, 0.6931472
    %v4082 = vmul.f32 -0.5, %v3868
    %v4083 = vadd.f32 %v4082, 1.0
    %v4084 = vmul.f32 %v4083, %v3868
    %v4085 = vand.u32 2147483647, %v3868
    %vm4086 = vcmp.lt.f32.partialorder %v4085, 0.0004427343
    %v4087 = vsel %vm4086, %v4084, %v4081
    %v4088 = vadd.f32 %v3870, 1.0
    %v4089 = vlog2.pop %v4088
    %v4090 = vmul.f32 %v4089, 0.6931472
    %v4091 = vmul.f32 -0.5, %v3870
    %v4092 = vadd.f32 %v4091, 1.0
    %v4093 = vmul.f32 %v4092, %v3870
    %v4094 = vand.u32 2147483647, %v3870
    %vm4095 = vcmp.lt.f32.partialorder %v4094, 0.0004427343
    %v4096 = vsel %vm4095, %v4093, %v4090
    %v4097 = vadd.f32 %v3872, 1.0
    %v4098 = vlog2.pop %v4097
    %v4099 = vmul.f32 %v4098, 0.6931472
    %v4100 = vmul.f32 -0.5, %v3872
    %v4101 = vadd.f32 %v4100, 1.0
    %v4102 = vmul.f32 %v4101, %v3872
    %v4103 = vand.u32 2147483647, %v3872
    %vm4104 = vcmp.lt.f32.partialorder %v4103, 0.0004427343
    %v4105 = vsel %vm4104, %v4102, %v4099
    %v4106 = vadd.f32 %v3874, 1.0
    %v4107 = vlog2.pop %v4106
    %v4108 = vmul.f32 %v4107, 0.6931472
    %v4109 = vmul.f32 -0.5, %v3874
    %v4110 = vadd.f32 %v4109, 1.0
    %v4111 = vmul.f32 %v4110, %v3874
    %v4112 = vand.u32 2147483647, %v3874
    %vm4113 = vcmp.lt.f32.partialorder %v4112, 0.0004427343
    %v4114 = vsel %vm4113, %v4111, %v4108
    %v4115 = vadd.f32 %v3876, 1.0
    %v4116 = vlog2.pop %v4115
    %v4117 = vmul.f32 %v4116, 0.6931472
    %v4118 = vmul.f32 -0.5, %v3876
    %v4119 = vadd.f32 %v4118, 1.0
    %v4120 = vmul.f32 %v4119, %v3876
    %v4121 = vand.u32 2147483647, %v3876
    %vm4122 = vcmp.lt.f32.partialorder %v4121, 0.0004427343
    %v4123 = vsel %vm4122, %v4120, %v4117
    %v4124 = vadd.f32 %v3878, 1.0
    %v4125 = vlog2.pop %v4124
    %v4126 = vmul.f32 %v4125, 0.6931472
    %v4127 = vmul.f32 -0.5, %v3878
    %v4128 = vadd.f32 %v4127, 1.0
    %v4129 = vmul.f32 %v4128, %v3878
    %v4130 = vand.u32 2147483647, %v3878
    %vm4131 = vcmp.lt.f32.partialorder %v4130, 0.0004427343
    %v4132 = vsel %vm4131, %v4129, %v4126
    %v4133 = vadd.f32 %v3880, 1.0
    %v4134 = vlog2.pop %v4133
    %v4135 = vmul.f32 %v4134, 0.6931472
    %v4136 = vmul.f32 -0.5, %v3880
    %v4137 = vadd.f32 %v4136, 1.0
    %v4138 = vmul.f32 %v4137, %v3880
    %v4139 = vand.u32 2147483647, %v3880
    %vm4140 = vcmp.lt.f32.partialorder %v4139, 0.0004427343
    %v4141 = vsel %vm4140, %v4138, %v4135
    %v4142 = vadd.f32 %v3882, 1.0
    %v4143 = vlog2.pop %v4142
    %v4144 = vmul.f32 %v4143, 0.6931472
    %v4145 = vmul.f32 -0.5, %v3882
    %v4146 = vadd.f32 %v4145, 1.0
    %v4147 = vmul.f32 %v4146, %v3882
    %v4148 = vand.u32 2147483647, %v3882
    %vm4149 = vcmp.lt.f32.partialorder %v4148, 0.0004427343
    %v4150 = vsel %vm4149, %v4147, %v4144
    %v4151 = vadd.f32 %v3884, 1.0
    %v4152 = vlog2.pop %v4151
    %v4153 = vmul.f32 %v4152, 0.6931472
    %v4154 = vmul.f32 -0.5, %v3884
    %v4155 = vadd.f32 %v4154, 1.0
    %v4156 = vmul.f32 %v4155, %v3884
    %v4157 = vand.u32 2147483647, %v3884
    %vm4158 = vcmp.lt.f32.partialorder %v4157, 0.0004427343
    %v4159 = vsel %vm4158, %v4156, %v4153
    %v4160 = vadd.f32 %v3886, 1.0
    %v4161 = vlog2.pop %v4160
    %v4162 = vmul.f32 %v4161, 0.6931472
    %v4163 = vmul.f32 -0.5, %v3886
    %v4164 = vadd.f32 %v4163, 1.0
    %v4165 = vmul.f32 %v4164, %v3886
    %v4166 = vand.u32 2147483647, %v3886
    %vm4167 = vcmp.lt.f32.partialorder %v4166, 0.0004427343
    %v4168 = vsel %vm4167, %v4165, %v4162
    %v4169 = vadd.f32 %v3888, 1.0
    %v4170 = vlog2.pop %v4169
    %v4171 = vmul.f32 %v4170, 0.6931472
    %v4172 = vmul.f32 -0.5, %v3888
    %v4173 = vadd.f32 %v4172, 1.0
    %v4174 = vmul.f32 %v4173, %v3888
    %v4175 = vand.u32 2147483647, %v3888
    %vm4176 = vcmp.lt.f32.partialorder %v4175, 0.0004427343
    %v4177 = vsel %vm4176, %v4174, %v4171
    %v4178 = vadd.f32 %v3890, 1.0
    %v4179 = vlog2.pop %v4178
    %v4180 = vmul.f32 %v4179, 0.6931472
    %v4181 = vmul.f32 -0.5, %v3890
    %v4182 = vadd.f32 %v4181, 1.0
    %v4183 = vmul.f32 %v4182, %v3890
    %v4184 = vand.u32 2147483647, %v3890
    %vm4185 = vcmp.lt.f32.partialorder %v4184, 0.0004427343
    %v4186 = vsel %vm4185, %v4183, %v4180
    %v4187 = vadd.f32 %v3892, 1.0
    %v4188 = vlog2.pop %v4187
    %v4189 = vmul.f32 %v4188, 0.6931472
    %v4190 = vmul.f32 -0.5, %v3892
    %v4191 = vadd.f32 %v4190, 1.0
    %v4192 = vmul.f32 %v4191, %v3892
    %v4193 = vand.u32 2147483647, %v3892
    %vm4194 = vcmp.lt.f32.partialorder %v4193, 0.0004427343
    %v4195 = vsel %vm4194, %v4192, %v4189
    %v4196 = vadd.f32 %v3894, 1.0
    %v4197 = vlog2.pop %v4196
    %v4198 = vmul.f32 %v4197, 0.6931472
    %v4199 = vmul.f32 -0.5, %v3894
    %v4200 = vadd.f32 %v4199, 1.0
    %v4201 = vmul.f32 %v4200, %v3894
    %v4202 = vand.u32 2147483647, %v3894
    %vm4203 = vcmp.lt.f32.partialorder %v4202, 0.0004427343
    %v4204 = vsel %vm4203, %v4201, %v4198
    %v4205 = vadd.f32 %v3896, 1.0
    %v4206 = vlog2.pop %v4205
    %v4207 = vmul.f32 %v4206, 0.6931472
    %v4208 = vmul.f32 -0.5, %v3896
    %v4209 = vadd.f32 %v4208, 1.0
    %v4210 = vmul.f32 %v4209, %v3896
    %v4211 = vand.u32 2147483647, %v3896
    %vm4212 = vcmp.lt.f32.partialorder %v4211, 0.0004427343
    %v4213 = vsel %vm4212, %v4210, %v4207
    %v4214 = vadd.f32 %v3898, 1.0
    %v4215 = vlog2.pop %v4214
    %v4216 = vmul.f32 %v4215, 0.6931472
    %v4217 = vmul.f32 -0.5, %v3898
    %v4218 = vadd.f32 %v4217, 1.0
    %v4219 = vmul.f32 %v4218, %v3898
    %v4220 = vand.u32 2147483647, %v3898
    %vm4221 = vcmp.lt.f32.partialorder %v4220, 0.0004427343
    %v4222 = vsel %vm4221, %v4219, %v4216
    %v4223 = vadd.f32 %v3900, 1.0
    %v4224 = vlog2.pop %v4223
    %v4225 = vmul.f32 %v4224, 0.6931472
    %v4226 = vmul.f32 -0.5, %v3900
    %v4227 = vadd.f32 %v4226, 1.0
    %v4228 = vmul.f32 %v4227, %v3900
    %v4229 = vand.u32 2147483647, %v3900
    %vm4230 = vcmp.lt.f32.partialorder %v4229, 0.0004427343
    %v4231 = vsel %vm4230, %v4228, %v4225
    %v4232 = vadd.f32 %v3902, 1.0
    %v4233 = vlog2.pop %v4232
    %v4234 = vmul.f32 %v4233, 0.6931472
    %v4235 = vmul.f32 -0.5, %v3902
    %v4236 = vadd.f32 %v4235, 1.0
    %v4237 = vmul.f32 %v4236, %v3902
    %v4238 = vand.u32 2147483647, %v3902
    %vm4239 = vcmp.lt.f32.partialorder %v4238, 0.0004427343
    %v4240 = vsel %vm4239, %v4237, %v4234
    %v4241 = vadd.f32 %v3904, 1.0
    %v4242 = vlog2.pop %v4241
    %v4243 = vmul.f32 %v4242, 0.6931472
    %v4244 = vmul.f32 -0.5, %v3904
    %v4245 = vadd.f32 %v4244, 1.0
    %v4246 = vmul.f32 %v4245, %v3904
    %v4247 = vand.u32 2147483647, %v3904
    %vm4248 = vcmp.lt.f32.partialorder %v4247, 0.0004427343
    %v4249 = vsel %vm4248, %v4246, %v4243
    %v4250 = vadd.f32 %v3906, 1.0
    %v4251 = vlog2.pop %v4250
    %v4252 = vmul.f32 %v4251, 0.6931472
    %v4253 = vmul.f32 -0.5, %v3906
    %v4254 = vadd.f32 %v4253, 1.0
    %v4255 = vmul.f32 %v4254, %v3906
    %v4256 = vand.u32 2147483647, %v3906
    %vm4257 = vcmp.lt.f32.partialorder %v4256, 0.0004427343
    %v4258 = vsel %vm4257, %v4255, %v4252
    %v4259 = vadd.f32 %v3908, 1.0
    %v4260 = vlog2.pop %v4259
    %v4261 = vmul.f32 %v4260, 0.6931472
    %v4262 = vmul.f32 -0.5, %v3908
    %v4263 = vadd.f32 %v4262, 1.0
    %v4264 = vmul.f32 %v4263, %v3908
    %v4265 = vand.u32 2147483647, %v3908
    %vm4266 = vcmp.lt.f32.partialorder %v4265, 0.0004427343
    %v4267 = vsel %vm4266, %v4264, %v4261
    %v4268 = vadd.f32 %v3910, 1.0
    %v4269 = vlog2.pop %v4268
    %v4270 = vmul.f32 %v4269, 0.6931472
    %v4271 = vmul.f32 -0.5, %v3910
    %v4272 = vadd.f32 %v4271, 1.0
    %v4273 = vmul.f32 %v4272, %v3910
    %v4274 = vand.u32 2147483647, %v3910
    %vm4275 = vcmp.lt.f32.partialorder %v4274, 0.0004427343
    %v4276 = vsel %vm4275, %v4273, %v4270
    %v4277 = vadd.f32 %v3912, 1.0
    %v4278 = vlog2.pop %v4277
    %v4279 = vmul.f32 %v4278, 0.6931472
    %v4280 = vmul.f32 -0.5, %v3912
    %v4281 = vadd.f32 %v4280, 1.0
    %v4282 = vmul.f32 %v4281, %v3912
    %v4283 = vand.u32 2147483647, %v3912
    %vm4284 = vcmp.lt.f32.partialorder %v4283, 0.0004427343
    %v4285 = vsel %vm4284, %v4282, %v4279
    %v4286 = vadd.f32 %v3914, 1.0
    %v4287 = vlog2.pop %v4286
    %v4288 = vmul.f32 %v4287, 0.6931472
    %v4289 = vmul.f32 -0.5, %v3914
    %v4290 = vadd.f32 %v4289, 1.0
    %v4291 = vmul.f32 %v4290, %v3914
    %v4292 = vand.u32 2147483647, %v3914
    %vm4293 = vcmp.lt.f32.partialorder %v4292, 0.0004427343
    %v4294 = vsel %vm4293, %v4291, %v4288
    %v4295 = vadd.f32 %v3916, 1.0
    %v4296 = vlog2.pop %v4295
    %v4297 = vmul.f32 %v4296, 0.6931472
    %v4298 = vmul.f32 -0.5, %v3916
    %v4299 = vadd.f32 %v4298, 1.0
    %v4300 = vmul.f32 %v4299, %v3916
    %v4301 = vand.u32 2147483647, %v3916
    %vm4302 = vcmp.lt.f32.partialorder %v4301, 0.0004427343
    %v4303 = vsel %vm4302, %v4300, %v4297
    %v4304 = vadd.f32 %v3918, 1.0
    %v4305 = vlog2.pop %v4304
    %v4306 = vmul.f32 %v4305, 0.6931472
    %v4307 = vmul.f32 -0.5, %v3918
    %v4308 = vadd.f32 %v4307, 1.0
    %v4309 = vmul.f32 %v4308, %v3918
    %v4310 = vand.u32 2147483647, %v3918
    %vm4311 = vcmp.lt.f32.partialorder %v4310, 0.0004427343
    %v4312 = vsel %vm4311, %v4309, %v4306
    %v4313 = vadd.f32 %v3920, 1.0
    %v4314 = vlog2.pop %v4313
    %v4315 = vmul.f32 %v4314, 0.6931472
    %v4316 = vmul.f32 -0.5, %v3920
    %v4317 = vadd.f32 %v4316, 1.0
    %v4318 = vmul.f32 %v4317, %v3920
    %v4319 = vand.u32 2147483647, %v3920
    %vm4320 = vcmp.lt.f32.partialorder %v4319, 0.0004427343
    %v4321 = vsel %vm4320, %v4318, %v4315
    %v4322 = vadd.f32 %v3922, 1.0
    %v4323 = vlog2.pop %v4322
    %v4324 = vmul.f32 %v4323, 0.6931472
    %v4325 = vmul.f32 -0.5, %v3922
    %v4326 = vadd.f32 %v4325, 1.0
    %v4327 = vmul.f32 %v4326, %v3922
    %v4328 = vand.u32 2147483647, %v3922
    %vm4329 = vcmp.lt.f32.partialorder %v4328, 0.0004427343
    %v4330 = vsel %vm4329, %v4327, %v4324
    %v4331 = vadd.f32 %v3924, 1.0
    %v4332 = vlog2.pop %v4331
    %v4333 = vmul.f32 %v4332, 0.6931472
    %v4334 = vmul.f32 -0.5, %v3924
    %v4335 = vadd.f32 %v4334, 1.0
    %v4336 = vmul.f32 %v4335, %v3924
    %v4337 = vand.u32 2147483647, %v3924
    %vm4338 = vcmp.lt.f32.partialorder %v4337, 0.0004427343
    %v4339 = vsel %vm4338, %v4336, %v4333
    %v4340 = vadd.f32 %v3926, 1.0
    %v4341 = vlog2.pop %v4340
    %v4342 = vmul.f32 %v4341, 0.6931472
    %v4343 = vmul.f32 -0.5, %v3926
    %v4344 = vadd.f32 %v4343, 1.0
    %v4345 = vmul.f32 %v4344, %v3926
    %v4346 = vand.u32 2147483647, %v3926
    %vm4347 = vcmp.lt.f32.partialorder %v4346, 0.0004427343
    %v4348 = vsel %vm4347, %v4345, %v4342
    %v4349 = vadd.f32 %v3928, 1.0
    %v4350 = vlog2.pop %v4349
    %v4351 = vmul.f32 %v4350, 0.6931472
    %v4352 = vmul.f32 -0.5, %v3928
    %v4353 = vadd.f32 %v4352, 1.0
    %v4354 = vmul.f32 %v4353, %v3928
    %v4355 = vand.u32 2147483647, %v3928
    %vm4356 = vcmp.lt.f32.partialorder %v4355, 0.0004427343
    %v4357 = vsel %vm4356, %v4354, %v4351
    %v4358 = vadd.f32 %v3930, 1.0
    %v4359 = vlog2.pop %v4358
    %v4360 = vmul.f32 %v4359, 0.6931472
    %v4361 = vmul.f32 -0.5, %v3930
    %v4362 = vadd.f32 %v4361, 1.0
    %v4363 = vmul.f32 %v4362, %v3930
    %v4364 = vand.u32 2147483647, %v3930
    %vm4365 = vcmp.lt.f32.partialorder %v4364, 0.0004427343
    %v4366 = vsel %vm4365, %v4363, %v4360
    %v4367 = vadd.f32 %v3932, 1.0
    %v4368 = vlog2.pop %v4367
    %v4369 = vmul.f32 %v4368, 0.6931472
    %v4370 = vmul.f32 -0.5, %v3932
    %v4371 = vadd.f32 %v4370, 1.0
    %v4372 = vmul.f32 %v4371, %v3932
    %v4373 = vand.u32 2147483647, %v3932
    %vm4374 = vcmp.lt.f32.partialorder %v4373, 0.0004427343
    %v4375 = vsel %vm4374, %v4372, %v4369
    %v4376 = vadd.f32 %v3934, 1.0
    %v4377 = vlog2.pop %v4376
    %v4378 = vmul.f32 %v4377, 0.6931472
    %v4379 = vmul.f32 -0.5, %v3934
    %v4380 = vadd.f32 %v4379, 1.0
    %v4381 = vmul.f32 %v4380, %v3934
    %v4382 = vand.u32 2147483647, %v3934
    %vm4383 = vcmp.lt.f32.partialorder %v4382, 0.0004427343
    %v4384 = vsel %vm4383, %v4381, %v4378
    %v4385 = vadd.f32 %v3936, 1.0
    %v4386 = vlog2.pop %v4385
    %v4387 = vmul.f32 %v4386, 0.6931472
    %v4388 = vmul.f32 -0.5, %v3936
    %v4389 = vadd.f32 %v4388, 1.0
    %v4390 = vmul.f32 %v4389, %v3936
    %v4391 = vand.u32 2147483647, %v3936
    %vm4392 = vcmp.lt.f32.partialorder %v4391, 0.0004427343
    %v4393 = vsel %vm4392, %v4390, %v4387
    %v4394 = vadd.f32 %v3938, 1.0
    %v4395 = vlog2.pop %v4394
    %v4396 = vmul.f32 %v4395, 0.6931472
    %v4397 = vmul.f32 -0.5, %v3938
    %v4398 = vadd.f32 %v4397, 1.0
    %v4399 = vmul.f32 %v4398, %v3938
    %v4400 = vand.u32 2147483647, %v3938
    %vm4401 = vcmp.lt.f32.partialorder %v4400, 0.0004427343
    %v4402 = vsel %vm4401, %v4399, %v4396
    %v4403 = vadd.f32 %v3940, 1.0
    %v4404 = vlog2.pop %v4403
    %v4405 = vmul.f32 %v4404, 0.6931472
    %v4406 = vmul.f32 -0.5, %v3940
    %v4407 = vadd.f32 %v4406, 1.0
    %v4408 = vmul.f32 %v4407, %v3940
    %v4409 = vand.u32 2147483647, %v3940
    %vm4410 = vcmp.lt.f32.partialorder %v4409, 0.0004427343
    %v4411 = vsel %vm4410, %v4408, %v4405
    %v4412 = vadd.f32 %v3942, 1.0
    %v4413 = vlog2.pop %v4412
    %v4414 = vmul.f32 %v4413, 0.6931472
    %v4415 = vmul.f32 -0.5, %v3942
    %v4416 = vadd.f32 %v4415, 1.0
    %v4417 = vmul.f32 %v4416, %v3942
    %v4418 = vand.u32 2147483647, %v3942
    %vm4419 = vcmp.lt.f32.partialorder %v4418, 0.0004427343
    %v4420 = vsel %vm4419, %v4417, %v4414
    %v4421 = vadd.f32 %v3944, 1.0
    %v4422 = vlog2.pop %v4421
    %v4423 = vmul.f32 %v4422, 0.6931472
    %v4424 = vmul.f32 -0.5, %v3944
    %v4425 = vadd.f32 %v4424, 1.0
    %v4426 = vmul.f32 %v4425, %v3944
    %v4427 = vand.u32 2147483647, %v3944
    %vm4428 = vcmp.lt.f32.partialorder %v4427, 0.0004427343
    %v4429 = vsel %vm4428, %v4426, %v4423
    %v4430 = vadd.f32 %v3946, 1.0
    %v4431 = vlog2.pop %v4430
    %v4432 = vmul.f32 %v4431, 0.6931472
    %v4433 = vmul.f32 -0.5, %v3946
    %v4434 = vadd.f32 %v4433, 1.0
    %v4435 = vmul.f32 %v4434, %v3946
    %v4436 = vand.u32 2147483647, %v3946
    %vm4437 = vcmp.lt.f32.partialorder %v4436, 0.0004427343
    %v4438 = vsel %vm4437, %v4435, %v4432
    %v4439 = vadd.f32 %v3948, 1.0
    %v4440 = vlog2.pop %v4439
    %v4441 = vmul.f32 %v4440, 0.6931472
    %v4442 = vmul.f32 -0.5, %v3948
    %v4443 = vadd.f32 %v4442, 1.0
    %v4444 = vmul.f32 %v4443, %v3948
    %v4445 = vand.u32 2147483647, %v3948
    %vm4446 = vcmp.lt.f32.partialorder %v4445, 0.0004427343
    %v4447 = vsel %vm4446, %v4444, %v4441
    %v4448 = vadd.f32 %v3950, 1.0
    %v4449 = vlog2.pop %v4448
    %v4450 = vmul.f32 %v4449, 0.6931472
    %v4451 = vmul.f32 -0.5, %v3950
    %v4452 = vadd.f32 %v4451, 1.0
    %v4453 = vmul.f32 %v4452, %v3950
    %v4454 = vand.u32 2147483647, %v3950
    %vm4455 = vcmp.lt.f32.partialorder %v4454, 0.0004427343
    %v4456 = vsel %vm4455, %v4453, %v4450
    %v4457 = vadd.f32 %v3952, 1.0
    %v4458 = vlog2.pop %v4457
    %v4459 = vmul.f32 %v4458, 0.6931472
    %v4460 = vmul.f32 -0.5, %v3952
    %v4461 = vadd.f32 %v4460, 1.0
    %v4462 = vmul.f32 %v4461, %v3952
    %v4463 = vand.u32 2147483647, %v3952
    %vm4464 = vcmp.lt.f32.partialorder %v4463, 0.0004427343
    %v4465 = vsel %vm4464, %v4462, %v4459
    %v4466 = vadd.f32 %v3954, 1.0
    %v4467 = vlog2.pop %v4466
    %v4468 = vmul.f32 %v4467, 0.6931472
    %v4469 = vmul.f32 -0.5, %v3954
    %v4470 = vadd.f32 %v4469, 1.0
    %v4471 = vmul.f32 %v4470, %v3954
    %v4472 = vand.u32 2147483647, %v3954
    %vm4473 = vcmp.lt.f32.partialorder %v4472, 0.0004427343
    %v4474 = vsel %vm4473, %v4471, %v4468
    %v4475 = vadd.f32 %v3956, 1.0
    %v4476 = vlog2.pop %v4475
    %v4477 = vmul.f32 %v4476, 0.6931472
    %v4478 = vmul.f32 -0.5, %v3956
    %v4479 = vadd.f32 %v4478, 1.0
    %v4480 = vmul.f32 %v4479, %v3956
    %v4481 = vand.u32 2147483647, %v3956
    %vm4482 = vcmp.lt.f32.partialorder %v4481, 0.0004427343
    %v4483 = vsel %vm4482, %v4480, %v4477
    %v4484 = vadd.f32 %v3958, 1.0
    %v4485 = vlog2.pop %v4484
    %v4486 = vmul.f32 %v4485, 0.6931472
    %v4487 = vmul.f32 -0.5, %v3958
    %v4488 = vadd.f32 %v4487, 1.0
    %v4489 = vmul.f32 %v4488, %v3958
    %v4490 = vand.u32 2147483647, %v3958
    %vm4491 = vcmp.lt.f32.partialorder %v4490, 0.0004427343
    %v4492 = vsel %vm4491, %v4489, %v4486
    %v4493 = vadd.f32 %v3960, 1.0
    %v4494 = vlog2.pop %v4493
    %v4495 = vmul.f32 %v4494, 0.6931472
    %v4496 = vmul.f32 -0.5, %v3960
    %v4497 = vadd.f32 %v4496, 1.0
    %v4498 = vmul.f32 %v4497, %v3960
    %v4499 = vand.u32 2147483647, %v3960
    %vm4500 = vcmp.lt.f32.partialorder %v4499, 0.0004427343
    %v4501 = vsel %vm4500, %v4498, %v4495
    %v4502 = vadd.f32 %v3962, 1.0
    %v4503 = vlog2.pop %v4502
    %v4504 = vmul.f32 %v4503, 0.6931472
    %v4505 = vmul.f32 -0.5, %v3962
    %v4506 = vadd.f32 %v4505, 1.0
    %v4507 = vmul.f32 %v4506, %v3962
    %v4508 = vand.u32 2147483647, %v3962
    %vm4509 = vcmp.lt.f32.partialorder %v4508, 0.0004427343
    %v4510 = vsel %vm4509, %v4507, %v4504
    %v4511 = vadd.f32 %v3964, 1.0
    %v4512 = vlog2.pop %v4511
    %v4513 = vmul.f32 %v4512, 0.6931472
    %v4514 = vmul.f32 -0.5, %v3964
    %v4515 = vadd.f32 %v4514, 1.0
    %v4516 = vmul.f32 %v4515, %v3964
    %v4517 = vand.u32 2147483647, %v3964
    %vm4518 = vcmp.lt.f32.partialorder %v4517, 0.0004427343
    %v4519 = vsel %vm4518, %v4516, %v4513
    %v4520 = vadd.f32 %v3966, 1.0
    %v4521 = vlog2.pop %v4520
    %v4522 = vmul.f32 %v4521, 0.6931472
    %v4523 = vmul.f32 -0.5, %v3966
    %v4524 = vadd.f32 %v4523, 1.0
    %v4525 = vmul.f32 %v4524, %v3966
    %v4526 = vand.u32 2147483647, %v3966
    %vm4527 = vcmp.lt.f32.partialorder %v4526, 0.0004427343
    %v4528 = vsel %vm4527, %v4525, %v4522
    %v4529 = vadd.f32 %v3968, 1.0
    %v4530 = vlog2.pop %v4529
    %v4531 = vmul.f32 %v4530, 0.6931472
    %v4532 = vmul.f32 -0.5, %v3968
    %v4533 = vadd.f32 %v4532, 1.0
    %v4534 = vmul.f32 %v4533, %v3968
    %v4535 = vand.u32 2147483647, %v3968
    %vm4536 = vcmp.lt.f32.partialorder %v4535, 0.0004427343
    %v4537 = vsel %vm4536, %v4534, %v4531
    %v4538 = vadd.f32 %v3970, 1.0
    %v4539 = vlog2.pop %v4538
    %v4540 = vmul.f32 %v4539, 0.6931472
    %v4541 = vmul.f32 -0.5, %v3970
    %v4542 = vadd.f32 %v4541, 1.0
    %v4543 = vmul.f32 %v4542, %v3970
    %v4544 = vand.u32 2147483647, %v3970
    %vm4545 = vcmp.lt.f32.partialorder %v4544, 0.0004427343
    %v4546 = vsel %vm4545, %v4543, %v4540
    %v4547 = vadd.f32 %v3651, %v3979
    %v4548 = vadd.f32 %v3652, %v3988
    %v4549 = vadd.f32 %v3653, %v3997
    %v4550 = vadd.f32 %v3654, %v4006
    %v4551 = vadd.f32 %v3655, %v4015
    %v4552 = vadd.f32 %v3656, %v4024
    %v4553 = vadd.f32 %v3657, %v4033
    %v4554 = vadd.f32 %v3658, %v4042
    %v4555 = vadd.f32 %v3659, %v4051
    %v4556 = vadd.f32 %v3660, %v4060
    %v4557 = vadd.f32 %v3661, %v4069
    %v4558 = vadd.f32 %v3662, %v4078
    %v4559 = vadd.f32 %v3663, %v4087
    %v4560 = vadd.f32 %v3664, %v4096
    %v4561 = vadd.f32 %v3665, %v4105
    %v4562 = vadd.f32 %v3666, %v4114
    %v4563 = vadd.f32 %v3667, %v4123
    %v4564 = vadd.f32 %v3668, %v4132
    %v4565 = vadd.f32 %v3669, %v4141
    %v4566 = vadd.f32 %v3670, %v4150
    %v4567 = vadd.f32 %v3671, %v4159
    %v4568 = vadd.f32 %v3672, %v4168
    %v4569 = vadd.f32 %v3673, %v4177
    %v4570 = vadd.f32 %v3674, %v4186
    %v4571 = vadd.f32 %v3675, %v4195
    %v4572 = vadd.f32 %v3676, %v4204
    %v4573 = vadd.f32 %v3677, %v4213
    %v4574 = vadd.f32 %v3678, %v4222
    %v4575 = vadd.f32 %v3679, %v4231
    %v4576 = vadd.f32 %v3680, %v4240
    %v4577 = vadd.f32 %v3681, %v4249
    %v4578 = vadd.f32 %v3682, %v4258
    %v4579 = vadd.f32 %v3683, %v4267
    %v4580 = vadd.f32 %v3684, %v4276
    %v4581 = vadd.f32 %v3685, %v4285
    %v4582 = vadd.f32 %v3686, %v4294
    %v4583 = vadd.f32 %v3687, %v4303
    %v4584 = vadd.f32 %v3688, %v4312
    %v4585 = vadd.f32 %v3689, %v4321
    %v4586 = vadd.f32 %v3690, %v4330
    %v4587 = vadd.f32 %v3691, %v4339
    %v4588 = vadd.f32 %v3692, %v4348
    %v4589 = vadd.f32 %v3693, %v4357
    %v4590 = vadd.f32 %v3694, %v4366
    %v4591 = vadd.f32 %v3695, %v4375
    %v4592 = vadd.f32 %v3696, %v4384
    %v4593 = vadd.f32 %v3697, %v4393
    %v4594 = vadd.f32 %v3698, %v4402
    %v4595 = vadd.f32 %v3699, %v4411
    %v4596 = vadd.f32 %v3700, %v4420
    %v4597 = vadd.f32 %v3701, %v4429
    %v4598 = vadd.f32 %v3702, %v4438
    %v4599 = vadd.f32 %v3703, %v4447
    %v4600 = vadd.f32 %v3704, %v4456
    %v4601 = vadd.f32 %v3705, %v4465
    %v4602 = vadd.f32 %v3706, %v4474
    %v4603 = vadd.f32 %v3707, %v4483
    %v4604 = vadd.f32 %v3708, %v4492
    %v4605 = vadd.f32 %v3709, %v4501
    %v4606 = vadd.f32 %v3710, %v4510
    %v4607 = vadd.f32 %v3711, %v4519
    %v4608 = vadd.f32 %v3712, %v4528
    %v4609 = vadd.f32 %v3713, %v4537
    %v4610 = vadd.f32 %v3714, %v4546
    %v4611 = vsub.f32 %v4547, 0.6931472
    %v4612 = vsub.f32 %v4548, 0.6931472
    %v4613 = vsub.f32 %v4549, 0.6931472
    %v4614 = vsub.f32 %v4550, 0.6931472
    %v4615 = vsub.f32 %v4551, 0.6931472
    %v4616 = vsub.f32 %v4552, 0.6931472
    %v4617 = vsub.f32 %v4553, 0.6931472
    %v4618 = vsub.f32 %v4554, 0.6931472
    %v4619 = vsub.f32 %v4555, 0.6931472
    %v4620 = vsub.f32 %v4556, 0.6931472
    %v4621 = vsub.f32 %v4557, 0.6931472
    %v4622 = vsub.f32 %v4558, 0.6931472
    %v4623 = vsub.f32 %v4559, 0.6931472
    %v4624 = vsub.f32 %v4560, 0.6931472
    %v4625 = vsub.f32 %v4561, 0.6931472
    %v4626 = vsub.f32 %v4562, 0.6931472
    %v4627 = vsub.f32 %v4563, 0.6931472
    %v4628 = vsub.f32 %v4564, 0.6931472
    %v4629 = vsub.f32 %v4565, 0.6931472
    %v4630 = vsub.f32 %v4566, 0.6931472
    %v4631 = vsub.f32 %v4567, 0.6931472
    %v4632 = vsub.f32 %v4568, 0.6931472
    %v4633 = vsub.f32 %v4569, 0.6931472
    %v4634 = vsub.f32 %v4570, 0.6931472
    %v4635 = vsub.f32 %v4571, 0.6931472
    %v4636 = vsub.f32 %v4572, 0.6931472
    %v4637 = vsub.f32 %v4573, 0.6931472
    %v4638 = vsub.f32 %v4574, 0.6931472
    %v4639 = vsub.f32 %v4575, 0.6931472
    %v4640 = vsub.f32 %v4576, 0.6931472
    %v4641 = vsub.f32 %v4577, 0.6931472
    %v4642 = vsub.f32 %v4578, 0.6931472
    %v4643 = vsub.f32 %v4579, 0.6931472
    %v4644 = vsub.f32 %v4580, 0.6931472
    %v4645 = vsub.f32 %v4581, 0.6931472
    %v4646 = vsub.f32 %v4582, 0.6931472
    %v4647 = vsub.f32 %v4583, 0.6931472
    %v4648 = vsub.f32 %v4584, 0.6931472
    %v4649 = vsub.f32 %v4585, 0.6931472
    %v4650 = vsub.f32 %v4586, 0.6931472
    %v4651 = vsub.f32 %v4587, 0.6931472
    %v4652 = vsub.f32 %v4588, 0.6931472
    %v4653 = vsub.f32 %v4589, 0.6931472
    %v4654 = vsub.f32 %v4590, 0.6931472
    %v4655 = vsub.f32 %v4591, 0.6931472
    %v4656 = vsub.f32 %v4592, 0.6931472
    %v4657 = vsub.f32 %v4593, 0.6931472
    %v4658 = vsub.f32 %v4594, 0.6931472
    %v4659 = vsub.f32 %v4595, 0.6931472
    %v4660 = vsub.f32 %v4596, 0.6931472
    %v4661 = vsub.f32 %v4597, 0.6931472
    %v4662 = vsub.f32 %v4598, 0.6931472
    %v4663 = vsub.f32 %v4599, 0.6931472
    %v4664 = vsub.f32 %v4600, 0.6931472
    %v4665 = vsub.f32 %v4601, 0.6931472
    %v4666 = vsub.f32 %v4602, 0.6931472
    %v4667 = vsub.f32 %v4603, 0.6931472
    %v4668 = vsub.f32 %v4604, 0.6931472
    %v4669 = vsub.f32 %v4605, 0.6931472
    %v4670 = vsub.f32 %v4606, 0.6931472
    %v4671 = vsub.f32 %v4607, 0.6931472
    %v4672 = vsub.f32 %v4608, 0.6931472
    %v4673 = vsub.f32 %v4609, 0.6931472
    %v4674 = vsub.f32 %v4610, 0.6931472
    %v4675 = vmul.f32 %v4611, 2.0
    %v4676 = vmul.f32 %v4612, 2.0
    %v4677 = vmul.f32 %v4613, 2.0
    %v4678 = vmul.f32 %v4614, 2.0
    %v4679 = vmul.f32 %v4615, 2.0
    %v4680 = vmul.f32 %v4616, 2.0
    %v4681 = vmul.f32 %v4617, 2.0
    %v4682 = vmul.f32 %v4618, 2.0
    %v4683 = vmul.f32 %v4619, 2.0
    %v4684 = vmul.f32 %v4620, 2.0
    %v4685 = vmul.f32 %v4621, 2.0
    %v4686 = vmul.f32 %v4622, 2.0
    %v4687 = vmul.f32 %v4623, 2.0
    %v4688 = vmul.f32 %v4624, 2.0
    %v4689 = vmul.f32 %v4625, 2.0
    %v4690 = vmul.f32 %v4626, 2.0
    %v4691 = vmul.f32 %v4627, 2.0
    %v4692 = vmul.f32 %v4628, 2.0
    %v4693 = vmul.f32 %v4629, 2.0
    %v4694 = vmul.f32 %v4630, 2.0
    %v4695 = vmul.f32 %v4631, 2.0
    %v4696 = vmul.f32 %v4632, 2.0
    %v4697 = vmul.f32 %v4633, 2.0
    %v4698 = vmul.f32 %v4634, 2.0
    %v4699 = vmul.f32 %v4635, 2.0
    %v4700 = vmul.f32 %v4636, 2.0
    %v4701 = vmul.f32 %v4637, 2.0
    %v4702 = vmul.f32 %v4638, 2.0
    %v4703 = vmul.f32 %v4639, 2.0
    %v4704 = vmul.f32 %v4640, 2.0
    %v4705 = vmul.f32 %v4641, 2.0
    %v4706 = vmul.f32 %v4642, 2.0
    %v4707 = vmul.f32 %v4643, 2.0
    %v4708 = vmul.f32 %v4644, 2.0
    %v4709 = vmul.f32 %v4645, 2.0
    %v4710 = vmul.f32 %v4646, 2.0
    %v4711 = vmul.f32 %v4647, 2.0
    %v4712 = vmul.f32 %v4648, 2.0
    %v4713 = vmul.f32 %v4649, 2.0
    %v4714 = vmul.f32 %v4650, 2.0
    %v4715 = vmul.f32 %v4651, 2.0
    %v4716 = vmul.f32 %v4652, 2.0
    %v4717 = vmul.f32 %v4653, 2.0
    %v4718 = vmul.f32 %v4654, 2.0
    %v4719 = vmul.f32 %v4655, 2.0
    %v4720 = vmul.f32 %v4656, 2.0
    %v4721 = vmul.f32 %v4657, 2.0
    %v4722 = vmul.f32 %v4658, 2.0
    %v4723 = vmul.f32 %v4659, 2.0
    %v4724 = vmul.f32 %v4660, 2.0
    %v4725 = vmul.f32 %v4661, 2.0
    %v4726 = vmul.f32 %v4662, 2.0
    %v4727 = vmul.f32 %v4663, 2.0
    %v4728 = vmul.f32 %v4664, 2.0
    %v4729 = vmul.f32 %v4665, 2.0
    %v4730 = vmul.f32 %v4666, 2.0
    %v4731 = vmul.f32 %v4667, 2.0
    %v4732 = vmul.f32 %v4668, 2.0
    %v4733 = vmul.f32 %v4669, 2.0
    %v4734 = vmul.f32 %v4670, 2.0
    %v4735 = vmul.f32 %v4671, 2.0
    %v4736 = vmul.f32 %v4672, 2.0
    %v4737 = vmul.f32 %v4673, 2.0
    %v4738 = vmul.f32 %v4674, 2.0
    %v4739 = vld [vmem:[%s1 + $0x108] sm:$0xff]
    %v4740 = vld [vmem:[%s1 + $0x110] sm:$0xff]
    %v4741 = vld [vmem:[%s1 + $0x118] sm:$0xff]
    %v4742 = vld [vmem:[%s1 + $0x120] sm:$0xff]
    %v4743 = vld [vmem:[%s1 + $0x128] sm:$0xff]
    %v4744 = vld [vmem:[%s1 + $0x130] sm:$0xff]
    %v4745 = vld [vmem:[%s1 + $0x138] sm:$0xff]
    %v4746 = vld [vmem:[%s1 + $0x140] sm:$0xff]
    %v4747 = vld [vmem:[%s1 + $0x148] sm:$0xff]
    %v4748 = vld [vmem:[%s1 + $0x150] sm:$0xff]
    %v4749 = vld [vmem:[%s1 + $0x158] sm:$0xff]
    %v4750 = vld [vmem:[%s1 + $0x160] sm:$0xff]
    %v4751 = vld [vmem:[%s1 + $0x168] sm:$0xff]
    %v4752 = vld [vmem:[%s1 + $0x170] sm:$0xff]
    %v4753 = vld [vmem:[%s1 + $0x178] sm:$0xff]
    %v4754 = vld [vmem:[%s1 + $0x180] sm:$0xff]
    %v4755 = vld [vmem:[%s2 + $0x3] sm:$0x1]
    %v4756 = vlaneseq
    %v4757 = vshrl.u32 %v4756, 7
    %v4758 = vsub.s32 0, %v4757
    %v4759 = vrot.slane %v4755, %v4758
    %4760 = vmatprep.subr.mxu0 0.0
    %4761 = vmatpush1.msra.mxu0 %v4754
    %4762 = vmatprep.subr.mxu0 0.0
    %4763 = vmatpush1.msra.mxu0 %v4753
    %4764 = vmatprep.subr.mxu0 0.0
    %4765 = vmatpush1.msra.mxu0 %v4752
    %4766 = vmatprep.subr.mxu0 0.0
    %4767 = vmatpush1.msra.mxu0 %v4751
    %4768 = vmatprep.subr.mxu0 0.0
    %4769 = vmatpush1.msra.mxu0 %v4750
    %4770 = vmatprep.subr.mxu0 0.0
    %4771 = vmatpush1.msra.mxu0 %v4749
    %4772 = vmatprep.subr.mxu0 0.0
    %4773 = vmatpush1.msra.mxu0 %v4748
    %4774 = vmatprep.subr.mxu0 0.0
    %4775 = vmatpush1.msra.mxu0 %v4747
    %4776 = vmatprep.subr.mxu0 0.0
    %4777 = vmatpush1.msra.mxu0 %v4746
    %4778 = vmatprep.subr.mxu0 0.0
    %4779 = vmatpush1.msra.mxu0 %v4745
    %4780 = vmatprep.subr.mxu0 0.0
    %4781 = vmatpush1.msra.mxu0 %v4744
    %4782 = vmatprep.subr.mxu0 0.0
    %4783 = vmatpush1.msra.mxu0 %v4743
    %4784 = vmatprep.subr.mxu0 0.0
    %4785 = vmatpush1.msra.mxu0 %v4742
    %4786 = vmatprep.subr.mxu0 0.0
    %4787 = vmatpush1.msra.mxu0 %v4741
    %4788 = vmatprep.subr.mxu0 0.0
    %4789 = vmatpush1.msra.mxu0 %v4740
    %4790 = vmatprep.subr.mxu0 0.0
    %4791 = vmatpush1.msra.mxu0 %v4739
    %4792 = vmatprep.subr.mxu0 0.0
    %4793 = vmatpush2.msra.mxu0 0.0
    %4794 = vmatprep.subr.mxu0 0.0
    %4795 = vmatpush2.msra.mxu0 0.0
    %4796 = vmatprep.subr.mxu0 0.0
    %4797 = vmatpush2.msra.mxu0 0.0
    %4798 = vmatprep.subr.mxu0 0.0
    %4799 = vmatpush2.msra.mxu0 0.0
    %4800 = vmatprep.subr.mxu0 0.0
    %4801 = vmatpush2.msra.mxu0 0.0
    %4802 = vmatprep.subr.mxu0 0.0
    %4803 = vmatpush2.msra.mxu0 0.0
    %4804 = vmatprep.subr.mxu0 0.0
    %4805 = vmatpush2.msra.mxu0 0.0
    %4806 = vmatprep.subr.mxu0 0.0
    %4807 = vmatpush2.msra.mxu0 0.0
    %4808 = vmatprep.subr.mxu0 0.0
    %4809 = vmatpush2.msra.mxu0 0.0
    %4810 = vmatprep.subr.mxu0 0.0
    %4811 = vmatpush2.msra.mxu0 0.0
    %4812 = vmatprep.subr.mxu0 0.0
    %4813 = vmatpush2.msra.mxu0 0.0
    %4814 = vmatprep.subr.mxu0 0.0
    %4815 = vmatpush2.msra.mxu0 0.0
    %4816 = vmatprep.subr.mxu0 0.0
    %4817 = vmatpush2.msra.mxu0 0.0
    %4818 = vmatprep.subr.mxu0 0.0
    %4819 = vmatpush2.msra.mxu0 0.0
    %4820 = vmatprep.subr.mxu0 0.0
    %4821 = vmatpush2.msra.mxu0 0.0
    %4822 = vmatprep.subr.mxu0 0.0
    %4823 = vmatpush2.msra.mxu0 0.0
    %4824 = vmatprep.mubr.f32.mxu0 0.0
    %4825 = vmatmul.mubr.f32.gmra.mxu0 %v4675
    %v4826 = vpop.f32.mrf.mxu0
    %v4827 = vadd.f32 %v4759, %v4826
    %v4828 = vpop.f32.mrf.mxu0
    %4829 = vmatprep.mubr.f32.mxu0 0.0
    %4830 = vmatmul.mubr.f32.gmra.mxu0 %v4676
    %v4831 = vpop.f32.mrf.mxu0
    %v4832 = vadd.f32 %v4759, %v4831
    %v4833 = vpop.f32.mrf.mxu0
    %4834 = vmatprep.mubr.f32.mxu0 0.0
    %4835 = vmatmul.mubr.f32.gmra.mxu0 %v4677
    %v4836 = vpop.f32.mrf.mxu0
    %v4837 = vadd.f32 %v4759, %v4836
    %v4838 = vpop.f32.mrf.mxu0
    %4839 = vmatprep.mubr.f32.mxu0 0.0
    %4840 = vmatmul.mubr.f32.gmra.mxu0 %v4678
    %v4841 = vpop.f32.mrf.mxu0
    %v4842 = vadd.f32 %v4759, %v4841
    %v4843 = vpop.f32.mrf.mxu0
    %4844 = vmatprep.mubr.f32.mxu0 0.0
    %4845 = vmatmul.mubr.f32.gmra.mxu0 %v4679
    %v4846 = vpop.f32.mrf.mxu0
    %v4847 = vadd.f32 %v4759, %v4846
    %v4848 = vpop.f32.mrf.mxu0
    %4849 = vmatprep.mubr.f32.mxu0 0.0
    %4850 = vmatmul.mubr.f32.gmra.mxu0 %v4680
    %v4851 = vpop.f32.mrf.mxu0
    %v4852 = vadd.f32 %v4759, %v4851
    %v4853 = vpop.f32.mrf.mxu0
    %4854 = vmatprep.mubr.f32.mxu0 0.0
    %4855 = vmatmul.mubr.f32.gmra.mxu0 %v4681
    %v4856 = vpop.f32.mrf.mxu0
    %v4857 = vadd.f32 %v4759, %v4856
    %v4858 = vpop.f32.mrf.mxu0
    %4859 = vmatprep.mubr.f32.mxu0 0.0
    %4860 = vmatmul.mubr.f32.gmra.mxu0 %v4682
    %v4861 = vpop.f32.mrf.mxu0
    %v4862 = vadd.f32 %v4759, %v4861
    %v4863 = vpop.f32.mrf.mxu0
    %4864 = vmatprep.mubr.f32.mxu0 0.0
    %4865 = vmatmul.mubr.f32.gmra.mxu0 %v4683
    %v4866 = vpop.f32.mrf.mxu0
    %v4867 = vadd.f32 %v4759, %v4866
    %v4868 = vpop.f32.mrf.mxu0
    %4869 = vmatprep.mubr.f32.mxu0 0.0
    %4870 = vmatmul.mubr.f32.gmra.mxu0 %v4684
    %v4871 = vpop.f32.mrf.mxu0
    %v4872 = vadd.f32 %v4759, %v4871
    %v4873 = vpop.f32.mrf.mxu0
    %4874 = vmatprep.mubr.f32.mxu0 0.0
    %4875 = vmatmul.mubr.f32.gmra.mxu0 %v4685
    %v4876 = vpop.f32.mrf.mxu0
    %v4877 = vadd.f32 %v4759, %v4876
    %v4878 = vpop.f32.mrf.mxu0
    %4879 = vmatprep.mubr.f32.mxu0 0.0
    %4880 = vmatmul.mubr.f32.gmra.mxu0 %v4686
    %v4881 = vpop.f32.mrf.mxu0
    %v4882 = vadd.f32 %v4759, %v4881
    %v4883 = vpop.f32.mrf.mxu0
    %4884 = vmatprep.mubr.f32.mxu0 0.0
    %4885 = vmatmul.mubr.f32.gmra.mxu0 %v4687
    %v4886 = vpop.f32.mrf.mxu0
    %v4887 = vadd.f32 %v4759, %v4886
    %v4888 = vpop.f32.mrf.mxu0
    %4889 = vmatprep.mubr.f32.mxu0 0.0
    %4890 = vmatmul.mubr.f32.gmra.mxu0 %v4688
    %v4891 = vpop.f32.mrf.mxu0
    %v4892 = vadd.f32 %v4759, %v4891
    %v4893 = vpop.f32.mrf.mxu0
    %4894 = vmatprep.mubr.f32.mxu0 0.0
    %4895 = vmatmul.mubr.f32.gmra.mxu0 %v4689
    %v4896 = vpop.f32.mrf.mxu0
    %v4897 = vadd.f32 %v4759, %v4896
    %v4898 = vpop.f32.mrf.mxu0
    %4899 = vmatprep.mubr.f32.mxu0 0.0
    %4900 = vmatmul.mubr.f32.gmra.mxu0 %v4690
    %v4901 = vpop.f32.mrf.mxu0
    %v4902 = vadd.f32 %v4759, %v4901
    %v4903 = vpop.f32.mrf.mxu0
    %4904 = vmatprep.mubr.f32.mxu0 0.0
    %4905 = vmatmul.mubr.f32.gmra.mxu0 %v4691
    %v4906 = vpop.f32.mrf.mxu0
    %v4907 = vadd.f32 %v4759, %v4906
    %v4908 = vpop.f32.mrf.mxu0
    %4909 = vmatprep.mubr.f32.mxu0 0.0
    %4910 = vmatmul.mubr.f32.gmra.mxu0 %v4692
    %v4911 = vpop.f32.mrf.mxu0
    %v4912 = vadd.f32 %v4759, %v4911
    %v4913 = vpop.f32.mrf.mxu0
    %4914 = vmatprep.mubr.f32.mxu0 0.0
    %4915 = vmatmul.mubr.f32.gmra.mxu0 %v4693
    %v4916 = vpop.f32.mrf.mxu0
    %v4917 = vadd.f32 %v4759, %v4916
    %v4918 = vpop.f32.mrf.mxu0
    %4919 = vmatprep.mubr.f32.mxu0 0.0
    %4920 = vmatmul.mubr.f32.gmra.mxu0 %v4694
    %v4921 = vpop.f32.mrf.mxu0
    %v4922 = vadd.f32 %v4759, %v4921
    %v4923 = vpop.f32.mrf.mxu0
    %4924 = vmatprep.mubr.f32.mxu0 0.0
    %4925 = vmatmul.mubr.f32.gmra.mxu0 %v4695
    %v4926 = vpop.f32.mrf.mxu0
    %v4927 = vadd.f32 %v4759, %v4926
    %v4928 = vpop.f32.mrf.mxu0
    %4929 = vmatprep.mubr.f32.mxu0 0.0
    %4930 = vmatmul.mubr.f32.gmra.mxu0 %v4696
    %v4931 = vpop.f32.mrf.mxu0
    %v4932 = vadd.f32 %v4759, %v4931
    %v4933 = vpop.f32.mrf.mxu0
    %4934 = vmatprep.mubr.f32.mxu0 0.0
    %4935 = vmatmul.mubr.f32.gmra.mxu0 %v4697
    %v4936 = vpop.f32.mrf.mxu0
    %v4937 = vadd.f32 %v4759, %v4936
    %v4938 = vpop.f32.mrf.mxu0
    %4939 = vmatprep.mubr.f32.mxu0 0.0
    %4940 = vmatmul.mubr.f32.gmra.mxu0 %v4698
    %v4941 = vpop.f32.mrf.mxu0
    %v4942 = vadd.f32 %v4759, %v4941
    %v4943 = vpop.f32.mrf.mxu0
    %4944 = vmatprep.mubr.f32.mxu0 0.0
    %4945 = vmatmul.mubr.f32.gmra.mxu0 %v4699
    %v4946 = vpop.f32.mrf.mxu0
    %v4947 = vadd.f32 %v4759, %v4946
    %v4948 = vpop.f32.mrf.mxu0
    %4949 = vmatprep.mubr.f32.mxu0 0.0
    %4950 = vmatmul.mubr.f32.gmra.mxu0 %v4700
    %v4951 = vpop.f32.mrf.mxu0
    %v4952 = vadd.f32 %v4759, %v4951
    %v4953 = vpop.f32.mrf.mxu0
    %4954 = vmatprep.mubr.f32.mxu0 0.0
    %4955 = vmatmul.mubr.f32.gmra.mxu0 %v4701
    %v4956 = vpop.f32.mrf.mxu0
    %v4957 = vadd.f32 %v4759, %v4956
    %v4958 = vpop.f32.mrf.mxu0
    %4959 = vmatprep.mubr.f32.mxu0 0.0
    %4960 = vmatmul.mubr.f32.gmra.mxu0 %v4702
    %v4961 = vpop.f32.mrf.mxu0
    %v4962 = vadd.f32 %v4759, %v4961
    %v4963 = vpop.f32.mrf.mxu0
    %4964 = vmatprep.mubr.f32.mxu0 0.0
    %4965 = vmatmul.mubr.f32.gmra.mxu0 %v4703
    %v4966 = vpop.f32.mrf.mxu0
    %v4967 = vadd.f32 %v4759, %v4966
    %v4968 = vpop.f32.mrf.mxu0
    %4969 = vmatprep.mubr.f32.mxu0 0.0
    %4970 = vmatmul.mubr.f32.gmra.mxu0 %v4704
    %v4971 = vpop.f32.mrf.mxu0
    %v4972 = vadd.f32 %v4759, %v4971
    %v4973 = vpop.f32.mrf.mxu0
    %4974 = vmatprep.mubr.f32.mxu0 0.0
    %4975 = vmatmul.mubr.f32.gmra.mxu0 %v4705
    %v4976 = vpop.f32.mrf.mxu0
    %v4977 = vadd.f32 %v4759, %v4976
    %v4978 = vpop.f32.mrf.mxu0
    %4979 = vmatprep.mubr.f32.mxu0 0.0
    %4980 = vmatmul.mubr.f32.gmra.mxu0 %v4706
    %v4981 = vpop.f32.mrf.mxu0
    %v4982 = vadd.f32 %v4759, %v4981
    %v4983 = vpop.f32.mrf.mxu0
    %4984 = vmatprep.mubr.f32.mxu0 0.0
    %4985 = vmatmul.mubr.f32.gmra.mxu0 %v4707
    %v4986 = vpop.f32.mrf.mxu0
    %v4987 = vadd.f32 %v4759, %v4986
    %v4988 = vpop.f32.mrf.mxu0
    %4989 = vmatprep.mubr.f32.mxu0 0.0
    %4990 = vmatmul.mubr.f32.gmra.mxu0 %v4708
    %v4991 = vpop.f32.mrf.mxu0
    %v4992 = vadd.f32 %v4759, %v4991
    %v4993 = vpop.f32.mrf.mxu0
    %4994 = vmatprep.mubr.f32.mxu0 0.0
    %4995 = vmatmul.mubr.f32.gmra.mxu0 %v4709
    %v4996 = vpop.f32.mrf.mxu0
    %v4997 = vadd.f32 %v4759, %v4996
    %v4998 = vpop.f32.mrf.mxu0
    %4999 = vmatprep.mubr.f32.mxu0 0.0
    %5000 = vmatmul.mubr.f32.gmra.mxu0 %v4710
    %v5001 = vpop.f32.mrf.mxu0
    %v5002 = vadd.f32 %v4759, %v5001
    %v5003 = vpop.f32.mrf.mxu0
    %5004 = vmatprep.mubr.f32.mxu0 0.0
    %5005 = vmatmul.mubr.f32.gmra.mxu0 %v4711
    %v5006 = vpop.f32.mrf.mxu0
    %v5007 = vadd.f32 %v4759, %v5006
    %v5008 = vpop.f32.mrf.mxu0
    %5009 = vmatprep.mubr.f32.mxu0 0.0
    %5010 = vmatmul.mubr.f32.gmra.mxu0 %v4712
    %v5011 = vpop.f32.mrf.mxu0
    %v5012 = vadd.f32 %v4759, %v5011
    %v5013 = vpop.f32.mrf.mxu0
    %5014 = vmatprep.mubr.f32.mxu0 0.0
    %5015 = vmatmul.mubr.f32.gmra.mxu0 %v4713
    %v5016 = vpop.f32.mrf.mxu0
    %v5017 = vadd.f32 %v4759, %v5016
    %v5018 = vpop.f32.mrf.mxu0
    %5019 = vmatprep.mubr.f32.mxu0 0.0
    %5020 = vmatmul.mubr.f32.gmra.mxu0 %v4714
    %v5021 = vpop.f32.mrf.mxu0
    %v5022 = vadd.f32 %v4759, %v5021
    %v5023 = vpop.f32.mrf.mxu0
    %5024 = vmatprep.mubr.f32.mxu0 0.0
    %5025 = vmatmul.mubr.f32.gmra.mxu0 %v4715
    %v5026 = vpop.f32.mrf.mxu0
    %v5027 = vadd.f32 %v4759, %v5026
    %v5028 = vpop.f32.mrf.mxu0
    %5029 = vmatprep.mubr.f32.mxu0 0.0
    %5030 = vmatmul.mubr.f32.gmra.mxu0 %v4716
    %v5031 = vpop.f32.mrf.mxu0
    %v5032 = vadd.f32 %v4759, %v5031
    %v5033 = vpop.f32.mrf.mxu0
    %5034 = vmatprep.mubr.f32.mxu0 0.0
    %5035 = vmatmul.mubr.f32.gmra.mxu0 %v4717
    %v5036 = vpop.f32.mrf.mxu0
    %v5037 = vadd.f32 %v4759, %v5036
    %v5038 = vpop.f32.mrf.mxu0
    %5039 = vmatprep.mubr.f32.mxu0 0.0
    %5040 = vmatmul.mubr.f32.gmra.mxu0 %v4718
    %v5041 = vpop.f32.mrf.mxu0
    %v5042 = vadd.f32 %v4759, %v5041
    %v5043 = vpop.f32.mrf.mxu0
    %5044 = vmatprep.mubr.f32.mxu0 0.0
    %5045 = vmatmul.mubr.f32.gmra.mxu0 %v4719
    %v5046 = vpop.f32.mrf.mxu0
    %v5047 = vadd.f32 %v4759, %v5046
    %v5048 = vpop.f32.mrf.mxu0
    %5049 = vmatprep.mubr.f32.mxu0 0.0
    %5050 = vmatmul.mubr.f32.gmra.mxu0 %v4720
    %v5051 = vpop.f32.mrf.mxu0
    %v5052 = vadd.f32 %v4759, %v5051
    %v5053 = vpop.f32.mrf.mxu0
    %5054 = vmatprep.mubr.f32.mxu0 0.0
    %5055 = vmatmul.mubr.f32.gmra.mxu0 %v4721
    %v5056 = vpop.f32.mrf.mxu0
    %v5057 = vadd.f32 %v4759, %v5056
    %v5058 = vpop.f32.mrf.mxu0
    %5059 = vmatprep.mubr.f32.mxu0 0.0
    %5060 = vmatmul.mubr.f32.gmra.mxu0 %v4722
    %v5061 = vpop.f32.mrf.mxu0
    %v5062 = vadd.f32 %v4759, %v5061
    %v5063 = vpop.f32.mrf.mxu0
    %5064 = vmatprep.mubr.f32.mxu0 0.0
    %5065 = vmatmul.mubr.f32.gmra.mxu0 %v4723
    %v5066 = vpop.f32.mrf.mxu0
    %v5067 = vadd.f32 %v4759, %v5066
    %v5068 = vpop.f32.mrf.mxu0
    %5069 = vmatprep.mubr.f32.mxu0 0.0
    %5070 = vmatmul.mubr.f32.gmra.mxu0 %v4724
    %v5071 = vpop.f32.mrf.mxu0
    %v5072 = vadd.f32 %v4759, %v5071
    %v5073 = vpop.f32.mrf.mxu0
    %5074 = vmatprep.mubr.f32.mxu0 0.0
    %5075 = vmatmul.mubr.f32.gmra.mxu0 %v4725
    %v5076 = vpop.f32.mrf.mxu0
    %v5077 = vadd.f32 %v4759, %v5076
    %v5078 = vpop.f32.mrf.mxu0
    %5079 = vmatprep.mubr.f32.mxu0 0.0
    %5080 = vmatmul.mubr.f32.gmra.mxu0 %v4726
    %v5081 = vpop.f32.mrf.mxu0
    %v5082 = vadd.f32 %v4759, %v5081
    %v5083 = vpop.f32.mrf.mxu0
    %5084 = vmatprep.mubr.f32.mxu0 0.0
    %5085 = vmatmul.mubr.f32.gmra.mxu0 %v4727
    %v5086 = vpop.f32.mrf.mxu0
    %v5087 = vadd.f32 %v4759, %v5086
    %v5088 = vpop.f32.mrf.mxu0
    %5089 = vmatprep.mubr.f32.mxu0 0.0
    %5090 = vmatmul.mubr.f32.gmra.mxu0 %v4728
    %v5091 = vpop.f32.mrf.mxu0
    %v5092 = vadd.f32 %v4759, %v5091
    %v5093 = vpop.f32.mrf.mxu0
    %5094 = vmatprep.mubr.f32.mxu0 0.0
    %5095 = vmatmul.mubr.f32.gmra.mxu0 %v4729
    %v5096 = vpop.f32.mrf.mxu0
    %v5097 = vadd.f32 %v4759, %v5096
    %v5098 = vpop.f32.mrf.mxu0
    %5099 = vmatprep.mubr.f32.mxu0 0.0
    %5100 = vmatmul.mubr.f32.gmra.mxu0 %v4730
    %v5101 = vpop.f32.mrf.mxu0
    %v5102 = vadd.f32 %v4759, %v5101
    %v5103 = vpop.f32.mrf.mxu0
    %5104 = vmatprep.mubr.f32.mxu0 0.0
    %5105 = vmatmul.mubr.f32.gmra.mxu0 %v4731
    %v5106 = vpop.f32.mrf.mxu0
    %v5107 = vadd.f32 %v4759, %v5106
    %v5108 = vpop.f32.mrf.mxu0
    %5109 = vmatprep.mubr.f32.mxu0 0.0
    %5110 = vmatmul.mubr.f32.gmra.mxu0 %v4732
    %v5111 = vpop.f32.mrf.mxu0
    %v5112 = vadd.f32 %v4759, %v5111
    %v5113 = vpop.f32.mrf.mxu0
    %5114 = vmatprep.mubr.f32.mxu0 0.0
    %5115 = vmatmul.mubr.f32.gmra.mxu0 %v4733
    %v5116 = vpop.f32.mrf.mxu0
    %v5117 = vadd.f32 %v4759, %v5116
    %v5118 = vpop.f32.mrf.mxu0
    %5119 = vmatprep.mubr.f32.mxu0 0.0
    %5120 = vmatmul.mubr.f32.gmra.mxu0 %v4734
    %v5121 = vpop.f32.mrf.mxu0
    %v5122 = vadd.f32 %v4759, %v5121
    %v5123 = vpop.f32.mrf.mxu0
    %5124 = vmatprep.mubr.f32.mxu0 0.0
    %5125 = vmatmul.mubr.f32.gmra.mxu0 %v4735
    %v5126 = vpop.f32.mrf.mxu0
    %v5127 = vadd.f32 %v4759, %v5126
    %v5128 = vpop.f32.mrf.mxu0
    %5129 = vmatprep.mubr.f32.mxu0 0.0
    %5130 = vmatmul.mubr.f32.gmra.mxu0 %v4736
    %v5131 = vpop.f32.mrf.mxu0
    %v5132 = vadd.f32 %v4759, %v5131
    %v5133 = vpop.f32.mrf.mxu0
    %5134 = vmatprep.mubr.f32.mxu0 0.0
    %5135 = vmatmul.mubr.f32.gmra.mxu0 %v4737
    %v5136 = vpop.f32.mrf.mxu0
    %v5137 = vadd.f32 %v4759, %v5136
    %v5138 = vpop.f32.mrf.mxu0
    %5139 = vmatprep.mubr.f32.mxu0 0.0
    %5140 = vmatmul.mubr.f32.gmra.mxu0 %v4738
    %v5141 = vpop.f32.mrf.mxu0
    %v5142 = vadd.f32 %v4759, %v5141
    %v5143 = vpop.f32.mrf.mxu0
    %5144 = vdwg.mxu0
    %5145 = vst [vmem:[#allocation2] sm:$0xff] %v4827
    %5146 = vst [vmem:[#allocation2 + $0x8] sm:$0xff] %v4832
    %5147 = vst [vmem:[#allocation2 + $0x10] sm:$0xff] %v4837
    %5148 = vst [vmem:[#allocation2 + $0x18] sm:$0xff] %v4842
    %5149 = vst [vmem:[#allocation2 + $0x20] sm:$0xff] %v4847
    %5150 = vst [vmem:[#allocation2 + $0x28] sm:$0xff] %v4852
    %5151 = vst [vmem:[#allocation2 + $0x30] sm:$0xff] %v4857
    %5152 = vst [vmem:[#allocation2 + $0x38] sm:$0xff] %v4862
    %5153 = vst [vmem:[#allocation2 + $0x40] sm:$0xff] %v4867
    %5154 = vst [vmem:[#allocation2 + $0x48] sm:$0xff] %v4872
    %5155 = vst [vmem:[#allocation2 + $0x50] sm:$0xff] %v4877
    %5156 = vst [vmem:[#allocation2 + $0x58] sm:$0xff] %v4882
    %5157 = vst [vmem:[#allocation2 + $0x60] sm:$0xff] %v4887
    %5158 = vst [vmem:[#allocation2 + $0x68] sm:$0xff] %v4892
    %5159 = vst [vmem:[#allocation2 + $0x70] sm:$0xff] %v4897
    %5160 = vst [vmem:[#allocation2 + $0x78] sm:$0xff] %v4902
    %5161 = vst [vmem:[#allocation2 + $0x80] sm:$0xff] %v4907
    %5162 = vst [vmem:[#allocation2 + $0x88] sm:$0xff] %v4912
    %5163 = vst [vmem:[#allocation2 + $0x90] sm:$0xff] %v4917
    %5164 = vst [vmem:[#allocation2 + $0x98] sm:$0xff] %v4922
    %5165 = vst [vmem:[#allocation2 + $0xa0] sm:$0xff] %v4927
    %5166 = vst [vmem:[#allocation2 + $0xa8] sm:$0xff] %v4932
    %5167 = vst [vmem:[#allocation2 + $0xb0] sm:$0xff] %v4937
    %5168 = vst [vmem:[#allocation2 + $0xb8] sm:$0xff] %v4942
    %5169 = vst [vmem:[#allocation2 + $0xc0] sm:$0xff] %v4947
    %5170 = vst [vmem:[#allocation2 + $0xc8] sm:$0xff] %v4952
    %5171 = vst [vmem:[#allocation2 + $0xd0] sm:$0xff] %v4957
    %5172 = vst [vmem:[#allocation2 + $0xd8] sm:$0xff] %v4962
    %5173 = vst [vmem:[#allocation2 + $0xe0] sm:$0xff] %v4967
    %5174 = vst [vmem:[#allocation2 + $0xe8] sm:$0xff] %v4972
    %5175 = vst [vmem:[#allocation2 + $0xf0] sm:$0xff] %v4977
    %5176 = vst [vmem:[#allocation2 + $0xf8] sm:$0xff] %v4982
    %5177 = vst [vmem:[#allocation2 + $0x100] sm:$0xff] %v4987
    %5178 = vst [vmem:[#allocation2 + $0x108] sm:$0xff] %v4992
    %5179 = vst [vmem:[#allocation2 + $0x110] sm:$0xff] %v4997
    %5180 = vst [vmem:[#allocation2 + $0x118] sm:$0xff] %v5002
    %5181 = vst [vmem:[#allocation2 + $0x120] sm:$0xff] %v5007
    %5182 = vst [vmem:[#allocation2 + $0x128] sm:$0xff] %v5012
    %5183 = vst [vmem:[#allocation2 + $0x130] sm:$0xff] %v5017
    %5184 = vst [vmem:[#allocation2 + $0x138] sm:$0xff] %v5022
    %5185 = vst [vmem:[#allocation2 + $0x140] sm:$0xff] %v5027
    %5186 = vst [vmem:[#allocation2 + $0x148] sm:$0xff] %v5032
    %5187 = vst [vmem:[#allocation2 + $0x150] sm:$0xff] %v5037
    %5188 = vst [vmem:[#allocation2 + $0x158] sm:$0xff] %v5042
    %5189 = vst [vmem:[#allocation2 + $0x160] sm:$0xff] %v5047
    %5190 = vst [vmem:[#allocation2 + $0x168] sm:$0xff] %v5052
    %5191 = vst [vmem:[#allocation2 + $0x170] sm:$0xff] %v5057
    %5192 = vst [vmem:[#allocation2 + $0x178] sm:$0xff] %v5062
    %5193 = vst [vmem:[#allocation2 + $0x180] sm:$0xff] %v5067
    %5194 = vst [vmem:[#allocation2 + $0x188] sm:$0xff] %v5072
    %5195 = vst [vmem:[#allocation2 + $0x190] sm:$0xff] %v5077
    %5196 = vst [vmem:[#allocation2 + $0x198] sm:$0xff] %v5082
    %5197 = vst [vmem:[#allocation2 + $0x1a0] sm:$0xff] %v5087
    %5198 = vst [vmem:[#allocation2 + $0x1a8] sm:$0xff] %v5092
    %5199 = vst [vmem:[#allocation2 + $0x1b0] sm:$0xff] %v5097
    %5200 = vst [vmem:[#allocation2 + $0x1b8] sm:$0xff] %v5102
    %5201 = vst [vmem:[#allocation2 + $0x1c0] sm:$0xff] %v5107
    %5202 = vst [vmem:[#allocation2 + $0x1c8] sm:$0xff] %v5112
    %5203 = vst [vmem:[#allocation2 + $0x1d0] sm:$0xff] %v5117
    %5204 = vst [vmem:[#allocation2 + $0x1d8] sm:$0xff] %v5122
    %5205 = vst [vmem:[#allocation2 + $0x1e0] sm:$0xff] %v5127
    %5206 = vst [vmem:[#allocation2 + $0x1e8] sm:$0xff] %v5132
    %5207 = vst [vmem:[#allocation2 + $0x1f0] sm:$0xff] %v5137
    %5208 = vst [vmem:[#allocation2 + $0x1f8] sm:$0xff] %v5142
    // Predicated region
    $region14: #{tpu_custom_call.1} parent=1 // pred_check
      _
    $region15: #{tpu_custom_call.1} parent=1 // pred_check_branch
      %5210 = sbr.rel (0) target = $region17
    $region16: #{tpu_custom_call.1} parent=1 // pred_region
      %s5212 = ssub.s32 8192, 8192
      %5213 = vsyncadd [#allocation3], %s5212
      %s5214 = sshll.u32 [#allocation2], 4
      %s5215 = int_to_ptr.vmem [resolvable:$true] %s5214
      %5220 = dma.vmem_to_hbm [thread:$0]  %s5215, 8192, %s3, [#allocation3], 128, 128, 8
    $region17: #{tpu_custom_call.1} parent=1 // pred_fallthru
      _
    // Predicated region
    $region18: #{tpu_custom_call.1} parent=1 // pred_check
      _
    $region19: #{tpu_custom_call.1} parent=1 // pred_check_branch
      %5222 = sbr.rel (0) target = $region21
    $region20: #{tpu_custom_call.1} parent=1 // pred_region
      %5223 = dma.done [#allocation3], 8192
    $region21: #{tpu_custom_call.1} parent=1 // pred_fallthru
      _
    %5224 = vsyncpa [#allocation3], 1

</llo_original>
